<compile_context>
chip_gen: v7x
topology: tpu7x:2x2x1
jax: 0.10.0
libtpu: 0.0.40
codegen_flags: <defaults>
</compile_context>

<pallas_src>
import functools

import jax
import jax.numpy as jnp
from jax import lax
from jax.experimental import pallas as pl
from jax.experimental.pallas import tpu as pltpu


# ----------------------------------------------------------------------------
# small helpers
# ----------------------------------------------------------------------------
def _round_up(x: int, m: int) -> int:
    return ((x + m - 1) // m) * m


def _pick_time_tile(T: int, cap: int = 8) -> int:
    """Largest divisor of T that is <= cap (keeps T % tile == 0 so no time padding)."""
    for t in range(min(T, cap), 0, -1):
        if T % t == 0:
            return t
    return T


def _pad_gru_weight(w, H, Hp, in_dim, in_pad):
    """(3H, in) PyTorch GRU weight -> gate-aligned padded, transposed (in_pad, 3*Hp)."""
    w = w.reshape(3, H, in_dim)
    w = jnp.pad(w, ((0, 0), (0, Hp - H), (0, in_pad - in_dim)))
    return jnp.transpose(w.reshape(3 * Hp, in_pad), (1, 0))


def _pad_gru_bias(b, H, Hp):
    """(3H,) -> (1, 3*Hp) with per-gate padding."""
    b = b.reshape(3, H)
    b = jnp.pad(b, ((0, 0), (0, Hp - H)))
    return b.reshape(1, 3 * Hp)


# ----------------------------------------------------------------------------
# Pallas kernel: chunked stacked-GRU recurrence + vocab-tiled dense projection
# ----------------------------------------------------------------------------
def _make_kernel(L, tT, Bp, Ep, Hp, Vt, cdt):
    H3 = 3 * Hp
    n_w = 5 + 4 * (L - 1) + 2      # layer0: 5 tensors, layers>=1: 4 each, dense: 2

    def kernel(*refs):
        emb_ref, h0_ref = refs[0], refs[1]
        w_refs = refs[2:2 + n_w]
        out_ref, hT_ref = refs[2 + n_w], refs[3 + n_w]
        h_scr, top_scr, gi0_scr = refs[4 + n_w], refs[5 + n_w], refs[6 + n_w]

        wih_e0, wih_c0, whh0, bih0, bhh0 = w_refs[0:5]
        wd_ref, bd_ref = w_refs[-2], w_refs[-1]

        i = pl.program_id(0)       # time-chunk index
        j = pl.program_id(1)       # vocab-tile index

        # persistent hidden state: init only once, at the very first grid step
        @pl.when(jnp.logical_and(i == 0, j == 0))
        def _init_state():
            h_scr[...] = h0_ref[...]

        # ---------------- GRU recurrence: once per time chunk (j == 0) -------
        @pl.when(j == 0)
        def _recurrence():
            # Hoisted, time-invariant layer-0 input preactivations.
            # context term: identical for every timestep of the whole sequence
            ctx = h0_ref[L - 1].astype(cdt)                       # (Bp, Hp)
            ctx_gi = jnp.dot(ctx, wih_c0[...],
                             preferred_element_type=jnp.float32) + bih0[...]  # (Bp, 3Hp)

            # embedding term: no h dependence -> one batched matmul per chunk
            emb = emb_ref[...]                                    # (tT, Bp, Ep) bf16
            gi_emb = jnp.dot(emb.reshape(tT * Bp, Ep), wih_e0[...],
                             preferred_element_type=jnp.float32)  # (tT*Bp, 3Hp)
            gi0_scr[...] = gi_emb.reshape(tT, Bp, H3) + ctx_gi[None, :, :]

            # hoist weight loads and bias broadcasts out of the timestep loop
            whh0_v = whh0[...]
            bhh0_v = jnp.broadcast_to(bhh0[...], (Bp, H3))
            hi = []
            for l in range(1, L):
                wih_l, whh_l, bih_l, bhh_l = w_refs[5 + 4 * (l - 1): 5 + 4 * l]
                hi.append((wih_l[...], whh_l[...],
                           jnp.broadcast_to(bih_l[...], (Bp, H3)),
                           jnp.broadcast_to(bhh_l[...], (Bp, H3))))

            def gru_cell(gi, gh, h_prev):
                # PyTorch GRU gate order: r, z, n ; gate math kept in f32
                r = jax.nn.sigmoid(gi[:, :Hp] + gh[:, :Hp])
                z = jax.nn.sigmoid(gi[:, Hp:2 * Hp] + gh[:, Hp:2 * Hp])
                n = jnp.tanh(gi[:, 2 * Hp:] + r * gh[:, 2 * Hp:])
                return (1.0 - z) * n + z * h_prev

            def step(t, carry):
                # layer 0: input preactivation already hoisted into gi0_scr
                h_prev = h_scr[0]                                  # (Bp, Hp) f32
                gi = gi0_scr[t]                                    # (Bp, 3Hp) f32
                gh = jnp.dot(h_prev.astype(cdt), whh0_v,
                             preferred_element_type=jnp.float32) + bhh0_v
                h_new = gru_cell(gi, gh, h_prev)
                h_scr[0] = h_new
                x = h_new
                # layers 1..L-1
                for l in range(1, L):
                    wih_v, whh_v, bih_v, bhh_v = hi[l - 1]
                    h_prev = h_scr[l]
                    gi = jnp.dot(x.astype(cdt), wih_v,
                                 preferred_element_type=jnp.float32) + bih_v
                    gh = jnp.dot(h_prev.astype(cdt), whh_v,
                                 preferred_element_type=jnp.float32) + bhh_v
                    h_new = gru_cell(gi, gh, h_prev)
                    h_scr[l] = h_new
                    x = h_new
                top_scr[t] = x                                     # top-layer output
                return carry

            lax.fori_loop(0, tT, step, 0, unroll=True)

        # ------------- dense projection for this vocab slab (every j) --------
        # one batched (tT*Bp, Hp) @ (Hp, Vt) matmul per (chunk, slab)
        tops = top_scr[...].astype(cdt).reshape(tT * Bp, Hp)
        logits = jnp.dot(tops, wd_ref[...], preferred_element_type=jnp.float32)
        out_ref[...] = logits.reshape(tT, Bp, Vt) + bd_ref[...]

        # final decoder state (constant output block -> written back once at the end)
        hT_ref[...] = h_scr[...]

    return kernel


# ----------------------------------------------------------------------------
# Wrapper: Seq2SeqDecoder.forward
# ----------------------------------------------------------------------------
def seq2seq_decoder_forward(X, state, params, *, num_layers, hidden, vocab,
                            v_tile=128, time_tile_cap=8,
                            compute_dtype=jnp.bfloat16):
    """
    X:     (B, T) int32 token ids
    state: (L, B, H) float32 decoder state (init_state == enc_outputs[1])
    params: PyTorch-shaped weights (see make_params)
    returns: (output (B, T, V), state (L, B, H))
    """
    B, T = X.shape
    L, _, H = state.shape
    assert L == num_layers and H == hidden
    E = params["embedding"].shape[1]
    V = vocab
    cdt = compute_dtype

    # padded / aligned sizes
    Bp = _round_up(B, 8)
    Ep = _round_up(E, 128)
    Hp = _round_up(H, 128)
    Vp = _round_up(V, v_tile)
    tT = _pick_time_tile(T, time_tile_cap)
    n_chunks = T // tT
    n_vtiles = Vp // v_tile

    # ---- glue (plain JAX): embedding gather, pad, transpose ------------------
    emb_tab = jnp.pad(params["embedding"], ((0, 0), (0, Ep - E))).astype(cdt)
    Xp = jnp.pad(X, ((0, Bp - B), (0, 0)))                     # padded rows -> token 0
    emb_tm = jnp.transpose(jnp.take(emb_tab, Xp, axis=0), (1, 0, 2))   # (T, Bp, Ep) bf16

    state_p = jnp.pad(state.astype(jnp.float32),
                      ((0, 0), (0, Bp - B), (0, Hp - H)))      # (L, Bp, Hp) f32

    # ---- pad + transpose weights (gate-aligned), cast matmul weights to bf16 --
    w_args = []
    w_ih0 = params["w_ih_0"]                                   # (3H, E + H)
    w_args.append(_pad_gru_weight(w_ih0[:, :E], H, Hp, E, Ep).astype(cdt))   # wih_e0
    w_args.append(_pad_gru_weight(w_ih0[:, E:], H, Hp, H, Hp).astype(cdt))   # wih_c0
    w_args.append(_pad_gru_weight(params["w_hh_0"], H, Hp, H, Hp).astype(cdt))
    w_args.append(_pad_gru_bias(params["b_ih_0"], H, Hp))      # f32
    w_args.append(_pad_gru_bias(params["b_hh_0"], H, Hp))      # f32
    for l in range(1, L):
        w_args.append(_pad_gru_weight(params[f"w_ih_{l}"], H, Hp, H, Hp).astype(cdt))
        w_args.append(_pad_gru_weight(params[f"w_hh_{l}"], H, Hp, H, Hp).astype(cdt))
        w_args.append(_pad_gru_bias(params[f"b_ih_{l}"], H, Hp))
        w_args.append(_pad_gru_bias(params[f"b_hh_{l}"], H, Hp))
    wd = jnp.transpose(jnp.pad(params["w_dense"], ((0, Vp - V), (0, Hp - H))),
                       (1, 0)).astype(cdt)                     # (Hp, Vp) bf16
    bd = jnp.pad(params["b_dense"], (0, Vp - V)).reshape(1, Vp)            # f32
    w_args += [wd, bd]

    # ---- BlockSpecs -----------------------------------------------------------
    const3 = lambda i, j: (0, 0, 0)
    const2 = lambda i, j: (0, 0)
    in_specs = [
        pl.BlockSpec((tT, Bp, Ep), lambda i, j: (i, 0, 0)),    # embedding chunk
        pl.BlockSpec((L, Bp, Hp), const3),                     # initial state
        pl.BlockSpec((Ep, 3 * Hp), const2),                    # wih_e0
        pl.BlockSpec((Hp, 3 * Hp), const2),                    # wih_c0
        pl.BlockSpec((Hp, 3 * Hp), const2),                    # whh_0
        pl.BlockSpec((1, 3 * Hp), const2),                     # bih_0
        pl.BlockSpec((1, 3 * Hp), const2),                     # bhh_0
    ]
    for _ in range(1, L):
        in_specs += [
            pl.BlockSpec((Hp, 3 * Hp), const2),                # wih_l
            pl.BlockSpec((Hp, 3 * Hp), const2),                # whh_l
            pl.BlockSpec((1, 3 * Hp), const2),                 # bih_l
            pl.BlockSpec((1, 3 * Hp), const2),                 # bhh_l
        ]
    in_specs += [
        pl.BlockSpec((Hp, v_tile), lambda i, j: (0, j)),       # dense weight slab
        pl.BlockSpec((1, v_tile), lambda i, j: (0, j)),        # dense bias slab
    ]
    out_specs = (
        pl.BlockSpec((tT, Bp, v_tile), lambda i, j: (i, 0, j)),  # logits (time-major)
        pl.BlockSpec((L, Bp, Hp), const3),                       # final state
    )

    kernel = _make_kernel(L, tT, Bp, Ep, Hp, v_tile, cdt)

    out_tm, hT = pl.pallas_call(
        kernel,
        grid=(n_chunks, n_vtiles),
        out_shape=(
            jax.ShapeDtypeStruct((T, Bp, Vp), jnp.float32),
            jax.ShapeDtypeStruct((L, Bp, Hp), jnp.float32),
        ),
        in_specs=in_specs,
        out_specs=out_specs,
        scratch_shapes=[
            pltpu.VMEM((L, Bp, Hp), jnp.float32),          # persistent hidden state
            pltpu.VMEM((tT, Bp, Hp), jnp.float32),         # top-layer outputs (chunk)
            pltpu.VMEM((tT, Bp, 3 * Hp), jnp.float32),     # hoisted layer-0 gi (chunk)
        ],
        compiler_params=pltpu.CompilerParams(
            dimension_semantics=("arbitrary", "arbitrary"),
            vmem_limit_bytes=32 * 1024 * 1024,
        ),
    )(emb_tm, state_p, *w_args)

    # permute(1, 0, 2) and strip padding
    output = jnp.transpose(out_tm, (1, 0, 2))[:B, :, :V]
    new_state = hT[:, :B, :H]
    return output, new_state


# ----------------------------------------------------------------------------
# Pure-JAX float32 reference (mirrors PyTorch semantics exactly)
# ----------------------------------------------------------------------------
def seq2seq_decoder_reference(X, state, params, *, num_layers, hidden, vocab):
    B, T = X.shape
    H = hidden
    emb = jnp.take(params["embedding"], X, axis=0)           # (B, T, E)
    xs = jnp.transpose(emb, (1, 0, 2))                        # (T, B, E)
    context = jnp.broadcast_to(state[-1], (T, B, H))
    xs = jnp.concatenate([xs, context], axis=2)
    h = [state[l] for l in range(num_layers)]
    outs = []
    for t in range(T):
        x = xs[t]
        for l in range(num_layers):
            gi = x @ params[f"w_ih_{l}"].T + params[f"b_ih_{l}"]
            gh = h[l] @ params[f"w_hh_{l}"].T + params[f"b_hh_{l}"]
            r = jax.nn.sigmoid(gi[:, :H] + gh[:, :H])
            z = jax.nn.sigmoid(gi[:, H:2 * H] + gh[:, H:2 * H])
            n = jnp.tanh(gi[:, 2 * H:] + r * gh[:, 2 * H:])
            h[l] = (1.0 - z) * n + z * h[l]
            x = h[l]
        outs.append(x @ params["w_dense"].T + params["b_dense"])
    out = jnp.stack(outs, axis=0)                             # (T, B, V)
    return jnp.transpose(out, (1, 0, 2)), jnp.stack(h, axis=0)


# ----------------------------------------------------------------------------
# Deterministic parameter construction (PyTorch nn.Module shapes)
# ----------------------------------------------------------------------------
def make_params(key, vocab, embed, hidden, num_layers):
    H = hidden
    keys = iter(jax.random.split(key, 3 + 4 * num_layers))
    params = {}
    params["embedding"] = 0.1 * jax.random.normal(next(keys), (vocab, embed), jnp.float32)
    for l in range(num_layers):
        in_l = embed + hidden if l == 0 else hidden
        params[f"w_ih_{l}"] = 0.1 * jax.random.normal(next(keys), (3 * H, in_l), jnp.float32)
        params[f"w_hh_{l}"] = 0.1 * jax.random.normal(next(keys), (3 * H, H), jnp.float32)
        kb = jax.random.split(next(keys), 2)
        params[f"b_ih_{l}"] = 0.1 * jax.random.normal(kb[0], (3 * H,), jnp.float32)
        params[f"b_hh_{l}"] = 0.1 * jax.random.normal(kb[1], (3 * H,), jnp.float32)
    params["w_dense"] = 0.1 * jax.random.normal(next(keys), (vocab, H), jnp.float32)
    params["b_dense"] = 0.1 * jax.random.normal(next(keys), (vocab,), jnp.float32)
    return params


if __name__ == "__main__":
    # small shapes consistent with the module (2 time chunks, 2 vocab tiles after padding)
    VOCAB, EMBED, HIDDEN, LAYERS = 200, 16, 32, 2
    BATCH, SEQ = 4, 16

    key = jax.random.PRNGKey(0)
    k_par, k_x, k_h = jax.random.split(key, 3)

    params = make_params(k_par, VOCAB, EMBED, HIDDEN, LAYERS)
    X = jax.random.randint(k_x, (BATCH, SEQ), 0, VOCAB, dtype=jnp.int32)
    state = 0.5 * jax.random.normal(k_h, (LAYERS, BATCH, HIDDEN), jnp.float32)

    fwd = functools.partial(seq2seq_decoder_forward,
                            num_layers=LAYERS, hidden=HIDDEN, vocab=VOCAB)
    out, new_state = jax.jit(fwd)(X, state, params)
    jax.block_until_ready((out, new_state))

    # correctness check against the exact f32 PyTorch-semantics reference.
    # (kernel uses bf16 weights/activations on the MXU with f32 accumulation,
    #  so a bf16-quantization tolerance is used.)
    ref_out, ref_state = seq2seq_decoder_reference(
        X, state, params, num_layers=LAYERS, hidden=HIDDEN, vocab=VOCAB)

    assert out.shape == (BATCH, SEQ, VOCAB)
    assert new_state.shape == (LAYERS, BATCH, HIDDEN)
    assert jnp.allclose(out, ref_out, rtol=5e-2, atol=5e-2), \
        f"logits max err {float(jnp.max(jnp.abs(out - ref_out)))}"
    assert jnp.allclose(new_state, ref_state, rtol=5e-2, atol=5e-2), \
        f"state max err {float(jnp.max(jnp.abs(new_state - ref_state)))}"

    print("KERNEL_OK")
</pallas_src>

<mosaic_0001>
module attributes {stable_mosaic.version = 11 : i64} {
  func.func @kernel(%arg0: i32, %arg1: i32, %arg2: memref<8x8x128xbf16, #tpu.memory_space<vmem>>, %arg3: memref<2x8x128xf32, #tpu.memory_space<vmem>>, %arg4: memref<128x384xbf16, #tpu.memory_space<vmem>>, %arg5: memref<128x384xbf16, #tpu.memory_space<vmem>>, %arg6: memref<128x384xbf16, #tpu.memory_space<vmem>>, %arg7: memref<1x384xf32, #tpu.memory_space<vmem>>, %arg8: memref<1x384xf32, #tpu.memory_space<vmem>>, %arg9: memref<128x384xbf16, #tpu.memory_space<vmem>>, %arg10: memref<128x384xbf16, #tpu.memory_space<vmem>>, %arg11: memref<1x384xf32, #tpu.memory_space<vmem>>, %arg12: memref<1x384xf32, #tpu.memory_space<vmem>>, %arg13: memref<128x128xbf16, #tpu.memory_space<vmem>>, %arg14: memref<1x128xf32, #tpu.memory_space<vmem>>, %arg15: memref<8x8x128xf32, #tpu.memory_space<vmem>>, %arg16: memref<2x8x128xf32, #tpu.memory_space<vmem>>, %arg17: memref<2x8x128xf32, #tpu.memory_space<vmem>>, %arg18: memref<8x8x128xf32, #tpu.memory_space<vmem>>, %arg19: memref<8x8x384xf32, #tpu.memory_space<vmem>>) attributes {dimension_semantics = [#tpu.dimension_semantics<arbitrary>, #tpu.dimension_semantics<arbitrary>], iteration_bounds = array<i64: 2, 2>, scalar_prefetch = 0 : i64, scratch_operands = 3 : i64, tpu.core_type = #tpu.core_type<tc>, window_params = [{transform_indices = @transform_0, window_bounds = array<i64: 8, 8, 128>}, {pipeline_mode = #tpu.pipeline_mode<synchronous>, transform_indices = @transform_1, window_bounds = array<i64: 2, 8, 128>}, {pipeline_mode = #tpu.pipeline_mode<synchronous>, transform_indices = @transform_2, window_bounds = array<i64: 128, 384>}, {pipeline_mode = #tpu.pipeline_mode<synchronous>, transform_indices = @transform_3, window_bounds = array<i64: 128, 384>}, {pipeline_mode = #tpu.pipeline_mode<synchronous>, transform_indices = @transform_4, window_bounds = array<i64: 128, 384>}, {pipeline_mode = #tpu.pipeline_mode<synchronous>, transform_indices = @transform_5, window_bounds = array<i64: 1, 384>}, {pipeline_mode = #tpu.pipeline_mode<synchronous>, transform_indices = @transform_6, window_bounds = array<i64: 1, 384>}, {pipeline_mode = #tpu.pipeline_mode<synchronous>, transform_indices = @transform_7, window_bounds = array<i64: 128, 384>}, {pipeline_mode = #tpu.pipeline_mode<synchronous>, transform_indices = @transform_8, window_bounds = array<i64: 128, 384>}, {pipeline_mode = #tpu.pipeline_mode<synchronous>, transform_indices = @transform_9, window_bounds = array<i64: 1, 384>}, {pipeline_mode = #tpu.pipeline_mode<synchronous>, transform_indices = @transform_10, window_bounds = array<i64: 1, 384>}, {transform_indices = @transform_11, window_bounds = array<i64: 128, 128>}, {transform_indices = @transform_12, window_bounds = array<i64: 1, 128>}, {transform_indices = @transform_13, window_bounds = array<i64: 8, 8, 128>}, {pipeline_mode = #tpu.pipeline_mode<synchronous>, transform_indices = @transform_14, window_bounds = array<i64: 2, 8, 128>}]} {
    %c0_i32 = arith.constant 0 : i32
    %0 = arith.cmpi eq, %arg0, %c0_i32 : i32
    %c0_i32_0 = arith.constant 0 : i32
    %1 = arith.cmpi eq, %arg1, %c0_i32_0 : i32
    %2 = arith.andi %0, %1 : i1
    %3 = arith.extui %2 : i1 to i32
    %c0_i32_1 = arith.constant 0 : i32
    %4 = arith.cmpi ne, %3, %c0_i32_1 : i32
    scf.if %4 {
      %c0_19 = arith.constant 0 : index
      %c0_20 = arith.constant 0 : index
      %c0_21 = arith.constant 0 : index
      %21 = vector.load %arg3[%c0_19, %c0_20, %c0_21] : memref<2x8x128xf32, #tpu.memory_space<vmem>>, vector<2x8x128xf32>
      %c0_22 = arith.constant 0 : index
      %c0_23 = arith.constant 0 : index
      %c0_24 = arith.constant 0 : index
      %22 = vector.load %arg17[%c0_22, %c0_23, %c0_24] : memref<2x8x128xf32, #tpu.memory_space<vmem>>, vector<2x8x128xf32>
      tpu.vector_store %arg17[%c0_22, %c0_23, %c0_24], %21 {strides = array<i32>} : memref<2x8x128xf32, #tpu.memory_space<vmem>>, vector<2x8x128xf32>,
    } else {
    }
    %c0_i32_2 = arith.constant 0 : i32
    %5 = arith.cmpi eq, %arg1, %c0_i32_2 : i32
    %6 = arith.extui %5 : i1 to i32
    %c0_i32_3 = arith.constant 0 : i32
    %7 = arith.cmpi ne, %6, %c0_i32_3 : i32
    scf.if %7 {
      %c1 = arith.constant 1 : index
      %c0_19 = arith.constant 0 : index
      %c0_20 = arith.constant 0 : index
      %21 = vector.load %arg3[%c1, %c0_19, %c0_20] : memref<2x8x128xf32, #tpu.memory_space<vmem>>, vector<1x8x128xf32>
      %22 = vector.shape_cast %21 : vector<1x8x128xf32> to vector<8x128xf32>
      %23 = arith.truncf %22 : vector<8x128xf32> to vector<8x128xbf16>
      %c0_21 = arith.constant 0 : index
      %c0_22 = arith.constant 0 : index
      %24 = vector.load %arg5[%c0_21, %c0_22] : memref<128x384xbf16, #tpu.memory_space<vmem>>, vector<128x384xbf16>
      %cst_23 = arith.constant dense<0.000000e+00> : vector<8x384xf32>
      %25 = tpu.matmul %23, %24, %cst_23 {dimension_numbers = #tpu.dot_dimension_numbers<[1], [0], [0], [1], [0, 0, 1, 1], [], []>} : vector<8x128xbf16>, vector<128x384xbf16>, vector<8x384xf32> -> vector<8x384xf32>
      %c0_24 = arith.constant 0 : index
      %c0_25 = arith.constant 0 : index
      %26 = vector.load %arg7[%c0_24, %c0_25] : memref<1x384xf32, #tpu.memory_space<vmem>>, vector<1x384xf32>
      %27 = vector.broadcast %26 : vector<1x384xf32> to vector<8x384xf32>
      %28 = arith.addf %25, %27 : vector<8x384xf32>
      %c0_26 = arith.constant 0 : index
      %c0_27 = arith.constant 0 : index
      %c0_28 = arith.constant 0 : index
      %29 = vector.load %arg2[%c0_26, %c0_27, %c0_28] : memref<8x8x128xbf16, #tpu.memory_space<vmem>>, vector<8x8x128xbf16>
      %30 = vector.shape_cast %29 : vector<8x8x128xbf16> to vector<64x128xbf16>
      %c0_29 = arith.constant 0 : index
      %c0_30 = arith.constant 0 : index
      %31 = vector.load %arg4[%c0_29, %c0_30] : memref<128x384xbf16, #tpu.memory_space<vmem>>, vector<128x384xbf16>
      %cst_31 = arith.constant dense<0.000000e+00> : vector<64x384xf32>
      %32 = tpu.matmul %30, %31, %cst_31 {dimension_numbers = #tpu.dot_dimension_numbers<[1], [0], [0], [1], [0, 0, 1, 1], [], []>} : vector<64x128xbf16>, vector<128x384xbf16>, vector<64x384xf32> -> vector<64x384xf32>
      %33 = vector.shape_cast %32 : vector<64x384xf32> to vector<8x8x384xf32>
      %34 = vector.shape_cast %28 : vector<8x384xf32> to vector<1x8x384xf32>
      %35 = vector.broadcast %34 : vector<1x8x384xf32> to vector<8x8x384xf32>
      %36 = arith.addf %33, %35 : vector<8x8x384xf32>
      %c0_32 = arith.constant 0 : index
      %c0_33 = arith.constant 0 : index
      %c0_34 = arith.constant 0 : index
      %37 = vector.load %arg19[%c0_32, %c0_33, %c0_34] : memref<8x8x384xf32, #tpu.memory_space<vmem>>, vector<8x8x384xf32>
      tpu.vector_store %arg19[%c0_32, %c0_33, %c0_34], %36 {strides = array<i32>} : memref<8x8x384xf32, #tpu.memory_space<vmem>>, vector<8x8x384xf32>,
      %c0_35 = arith.constant 0 : index
      %c0_36 = arith.constant 0 : index
      %38 = vector.load %arg6[%c0_35, %c0_36] : memref<128x384xbf16, #tpu.memory_space<vmem>>, vector<128x384xbf16>
      %c0_37 = arith.constant 0 : index
      %c0_38 = arith.constant 0 : index
      %39 = vector.load %arg8[%c0_37, %c0_38] : memref<1x384xf32, #tpu.memory_space<vmem>>, vector<1x384xf32>
      %40 = vector.shape_cast %39 : vector<1x384xf32> to vector<1x384xf32>
      %41 = vector.broadcast %40 : vector<1x384xf32> to vector<8x384xf32>
      %c0_39 = arith.constant 0 : index
      %c0_40 = arith.constant 0 : index
      %42 = vector.load %arg9[%c0_39, %c0_40] : memref<128x384xbf16, #tpu.memory_space<vmem>>, vector<128x384xbf16>
      %c0_41 = arith.constant 0 : index
      %c0_42 = arith.constant 0 : index
      %43 = vector.load %arg10[%c0_41, %c0_42] : memref<128x384xbf16, #tpu.memory_space<vmem>>, vector<128x384xbf16>
      %c0_43 = arith.constant 0 : index
      %c0_44 = arith.constant 0 : index
      %44 = vector.load %arg11[%c0_43, %c0_44] : memref<1x384xf32, #tpu.memory_space<vmem>>, vector<1x384xf32>
      %45 = vector.shape_cast %44 : vector<1x384xf32> to vector<1x384xf32>
      %46 = vector.broadcast %45 : vector<1x384xf32> to vector<8x384xf32>
      %c0_45 = arith.constant 0 : index
      %c0_46 = arith.constant 0 : index
      %47 = vector.load %arg12[%c0_45, %c0_46] : memref<1x384xf32, #tpu.memory_space<vmem>>, vector<1x384xf32>
      %48 = vector.shape_cast %47 : vector<1x384xf32> to vector<1x384xf32>
      %49 = vector.broadcast %48 : vector<1x384xf32> to vector<8x384xf32>
      %c0_i32_47 = arith.constant 0 : i32
      %c0_48 = arith.constant 0 : index
      %c0_49 = arith.constant 0 : index
      %c0_50 = arith.constant 0 : index
      %50 = vector.load %arg17[%c0_48, %c0_49, %c0_50] : memref<2x8x128xf32, #tpu.memory_space<vmem>>, vector<1x8x128xf32>
      %51 = vector.shape_cast %50 : vector<1x8x128xf32> to vector<8x128xf32>
      %52 = arith.index_cast %c0_i32_47 : i32 to index
      %c0_51 = arith.constant 0 : index
      %c0_52 = arith.constant 0 : index
      %53 = vector.load %arg19[%52, %c0_51, %c0_52] : memref<8x8x384xf32, #tpu.memory_space<vmem>>, vector<1x8x384xf32>
      %54 = vector.shape_cast %53 : vector<1x8x384xf32> to vector<8x384xf32>
      %55 = arith.truncf %51 : vector<8x128xf32> to vector<8x128xbf16>
      %cst_53 = arith.constant dense<0.000000e+00> : vector<8x384xf32>
      %56 = tpu.matmul %55, %38, %cst_53 {dimension_numbers = #tpu.dot_dimension_numbers<[1], [0], [0], [1], [0, 0, 1, 1], [], []>} : vector<8x128xbf16>, vector<128x384xbf16>, vector<8x384xf32> -> vector<8x384xf32>
      %57 = arith.addf %56, %41 : vector<8x384xf32>
      %58 = vector.extract_strided_slice %54 {offsets = [0, 0], sizes = [8, 128], strides = [1, 1]} : vector<8x384xf32> to vector<8x128xf32>
      %59 = vector.extract_strided_slice %57 {offsets = [0, 0], sizes = [8, 128], strides = [1, 1]} : vector<8x384xf32> to vector<8x128xf32>
      %60 = arith.addf %58, %59 : vector<8x128xf32>
      %61 = arith.negf %60 : vector<8x128xf32>
      %62 = math.exp %61 : vector<8x128xf32>
      %cst_54 = arith.constant 1.000000e+00 : f32
      %63 = vector.broadcast %cst_54 : f32 to vector<8x128xf32>
      %64 = arith.addf %63, %62 : vector<8x128xf32>
      %65 = arith.divf %63, %64 : vector<8x128xf32>
      %66 = vector.extract_strided_slice %54 {offsets = [0, 128], sizes = [8, 128], strides = [1, 1]} : vector<8x384xf32> to vector<8x128xf32>
      %67 = vector.extract_strided_slice %57 {offsets = [0, 128], sizes = [8, 128], strides = [1, 1]} : vector<8x384xf32> to vector<8x128xf32>
      %68 = arith.addf %66, %67 : vector<8x128xf32>
      %69 = arith.negf %68 : vector<8x128xf32>
      %70 = math.exp %69 : vector<8x128xf32>
      %cst_55 = arith.constant 1.000000e+00 : f32
      %71 = vector.broadcast %cst_55 : f32 to vector<8x128xf32>
      %72 = arith.addf %71, %70 : vector<8x128xf32>
      %73 = arith.divf %71, %72 : vector<8x128xf32>
      %74 = vector.extract_strided_slice %54 {offsets = [0, 256], sizes = [8, 128], strides = [1, 1]} : vector<8x384xf32> to vector<8x128xf32>
      %75 = vector.extract_strided_slice %57 {offsets = [0, 256], sizes = [8, 128], strides = [1, 1]} : vector<8x384xf32> to vector<8x128xf32>
      %76 = arith.mulf %65, %75 : vector<8x128xf32>
      %77 = arith.addf %74, %76 : vector<8x128xf32>
      %78 = math.tanh %77 : vector<8x128xf32>
      %cst_56 = arith.constant 1.000000e+00 : f32
      %79 = vector.broadcast %cst_56 : f32 to vector<8x128xf32>
      %80 = arith.subf %79, %73 : vector<8x128xf32>
      %81 = arith.mulf %80, %78 : vector<8x128xf32>
      %82 = arith.mulf %73, %51 : vector<8x128xf32>
      %83 = arith.addf %81, %82 : vector<8x128xf32>
      %c0_57 = arith.constant 0 : index
      %c0_58 = arith.constant 0 : index
      %c0_59 = arith.constant 0 : index
      %84 = vector.load %arg17[%c0_57, %c0_58, %c0_59] : memref<2x8x128xf32, #tpu.memory_space<vmem>>, vector<1x8x128xf32>
      %85 = vector.shape_cast %84 : vector<1x8x128xf32> to vector<8x128xf32>
      %86 = vector.shape_cast %83 : vector<8x128xf32> to vector<1x8x128xf32>
      tpu.vector_store %arg17[%c0_57, %c0_58, %c0_59], %86 {strides = array<i32>} : memref<2x8x128xf32, #tpu.memory_space<vmem>>, vector<1x8x128xf32>,
      %c1_60 = arith.constant 1 : index
      %c0_61 = arith.constant 0 : index
      %c0_62 = arith.constant 0 : index
      %87 = vector.load %arg17[%c1_60, %c0_61, %c0_62] : memref<2x8x128xf32, #tpu.memory_space<vmem>>, vector<1x8x128xf32>
      %88 = vector.shape_cast %87 : vector<1x8x128xf32> to vector<8x128xf32>
      %89 = arith.truncf %83 : vector<8x128xf32> to vector<8x128xbf16>
      %cst_63 = arith.constant dense<0.000000e+00> : vector<8x384xf32>
      %90 = tpu.matmul %89, %42, %cst_63 {dimension_numbers = #tpu.dot_dimension_numbers<[1], [0], [0], [1], [0, 0, 1, 1], [], []>} : vector<8x128xbf16>, vector<128x384xbf16>, vector<8x384xf32> -> vector<8x384xf32>
      %91 = arith.addf %90, %46 : vector<8x384xf32>
      %92 = arith.truncf %88 : vector<8x128xf32> to vector<8x128xbf16>
      %cst_64 = arith.constant dense<0.000000e+00> : vector<8x384xf32>
      %93 = tpu.matmul %92, %43, %cst_64 {dimension_numbers = #tpu.dot_dimension_numbers<[1], [0], [0], [1], [0, 0, 1, 1], [], []>} : vector<8x128xbf16>, vector<128x384xbf16>, vector<8x384xf32> -> vector<8x384xf32>
      %94 = arith.addf %93, %49 : vector<8x384xf32>
      %95 = vector.extract_strided_slice %91 {offsets = [0, 0], sizes = [8, 128], strides = [1, 1]} : vector<8x384xf32> to vector<8x128xf32>
      %96 = vector.extract_strided_slice %94 {offsets = [0, 0], sizes = [8, 128], strides = [1, 1]} : vector<8x384xf32> to vector<8x128xf32>
      %97 = arith.addf %95, %96 : vector<8x128xf32>
      %98 = arith.negf %97 : vector<8x128xf32>
      %99 = math.exp %98 : vector<8x128xf32>
      %cst_65 = arith.constant 1.000000e+00 : f32
      %100 = vector.broadcast %cst_65 : f32 to vector<8x128xf32>
      %101 = arith.addf %100, %99 : vector<8x128xf32>
      %102 = arith.divf %100, %101 : vector<8x128xf32>
      %103 = vector.extract_strided_slice %91 {offsets = [0, 128], sizes = [8, 128], strides = [1, 1]} : vector<8x384xf32> to vector<8x128xf32>
      %104 = vector.extract_strided_slice %94 {offsets = [0, 128], sizes = [8, 128], strides = [1, 1]} : vector<8x384xf32> to vector<8x128xf32>
      %105 = arith.addf %103, %104 : vector<8x128xf32>
      %106 = arith.negf %105 : vector<8x128xf32>
      %107 = math.exp %106 : vector<8x128xf32>
      %cst_66 = arith.constant 1.000000e+00 : f32
      %108 = vector.broadcast %cst_66 : f32 to vector<8x128xf32>
      %109 = arith.addf %108, %107 : vector<8x128xf32>
      %110 = arith.divf %108, %109 : vector<8x128xf32>
      %111 = vector.extract_strided_slice %91 {offsets = [0, 256], sizes = [8, 128], strides = [1, 1]} : vector<8x384xf32> to vector<8x128xf32>
      %112 = vector.extract_strided_slice %94 {offsets = [0, 256], sizes = [8, 128], strides = [1, 1]} : vector<8x384xf32> to vector<8x128xf32>
      %113 = arith.mulf %102, %112 : vector<8x128xf32>
      %114 = arith.addf %111, %113 : vector<8x128xf32>
      %115 = math.tanh %114 : vector<8x128xf32>
      %cst_67 = arith.constant 1.000000e+00 : f32
      %116 = vector.broadcast %cst_67 : f32 to vector<8x128xf32>
      %117 = arith.subf %116, %110 : vector<8x128xf32>
      %118 = arith.mulf %117, %115 : vector<8x128xf32>
      %119 = arith.mulf %110, %88 : vector<8x128xf32>
      %120 = arith.addf %118, %119 : vector<8x128xf32>
      %c1_68 = arith.constant 1 : index
      %c0_69 = arith.constant 0 : index
      %c0_70 = arith.constant 0 : index
      %121 = vector.load %arg17[%c1_68, %c0_69, %c0_70] : memref<2x8x128xf32, #tpu.memory_space<vmem>>, vector<1x8x128xf32>
      %122 = vector.shape_cast %121 : vector<1x8x128xf32> to vector<8x128xf32>
      %123 = vector.shape_cast %120 : vector<8x128xf32> to vector<1x8x128xf32>
      tpu.vector_store %arg17[%c1_68, %c0_69, %c0_70], %123 {strides = array<i32>} : memref<2x8x128xf32, #tpu.memory_space<vmem>>, vector<1x8x128xf32>,
      %124 = arith.index_cast %c0_i32_47 : i32 to index
      %c0_71 = arith.constant 0 : index
      %c0_72 = arith.constant 0 : index
      %125 = vector.load %arg18[%124, %c0_71, %c0_72] : memref<8x8x128xf32, #tpu.memory_space<vmem>>, vector<1x8x128xf32>
      %126 = vector.shape_cast %125 : vector<1x8x128xf32> to vector<8x128xf32>
      %127 = vector.shape_cast %120 : vector<8x128xf32> to vector<1x8x128xf32>
      tpu.vector_store %arg18[%124, %c0_71, %c0_72], %127 {strides = array<i32>} : memref<8x8x128xf32, #tpu.memory_space<vmem>>, vector<1x8x128xf32>,
      %c1_i32 = arith.constant 1 : i32
      %c0_73 = arith.constant 0 : index
      %c0_74 = arith.constant 0 : index
      %c0_75 = arith.constant 0 : index
      %128 = vector.load %arg17[%c0_73, %c0_74, %c0_75] : memref<2x8x128xf32, #tpu.memory_space<vmem>>, vector<1x8x128xf32>
      %129 = vector.shape_cast %128 : vector<1x8x128xf32> to vector<8x128xf32>
      %130 = arith.index_cast %c1_i32 : i32 to index
      %c0_76 = arith.constant 0 : index
      %c0_77 = arith.constant 0 : index
      %131 = vector.load %arg19[%130, %c0_76, %c0_77] : memref<8x8x384xf32, #tpu.memory_space<vmem>>, vector<1x8x384xf32>
      %132 = vector.shape_cast %131 : vector<1x8x384xf32> to vector<8x384xf32>
      %133 = arith.truncf %129 : vector<8x128xf32> to vector<8x128xbf16>
      %cst_78 = arith.constant dense<0.000000e+00> : vector<8x384xf32>
      %134 = tpu.matmul %133, %38, %cst_78 {dimension_numbers = #tpu.dot_dimension_numbers<[1], [0], [0], [1], [0, 0, 1, 1], [], []>} : vector<8x128xbf16>, vector<128x384xbf16>, vector<8x384xf32> -> vector<8x384xf32>
      %135 = arith.addf %134, %41 : vector<8x384xf32>
      %136 = vector.extract_strided_slice %132 {offsets = [0, 0], sizes = [8, 128], strides = [1, 1]} : vector<8x384xf32> to vector<8x128xf32>
      %137 = vector.extract_strided_slice %135 {offsets = [0, 0], sizes = [8, 128], strides = [1, 1]} : vector<8x384xf32> to vector<8x128xf32>
      %138 = arith.addf %136, %137 : vector<8x128xf32>
      %139 = arith.negf %138 : vector<8x128xf32>
      %140 = math.exp %139 : vector<8x128xf32>
      %cst_79 = arith.constant 1.000000e+00 : f32
      %141 = vector.broadcast %cst_79 : f32 to vector<8x128xf32>
      %142 = arith.addf %141, %140 : vector<8x128xf32>
      %143 = arith.divf %141, %142 : vector<8x128xf32>
      %144 = vector.extract_strided_slice %132 {offsets = [0, 128], sizes = [8, 128], strides = [1, 1]} : vector<8x384xf32> to vector<8x128xf32>
      %145 = vector.extract_strided_slice %135 {offsets = [0, 128], sizes = [8, 128], strides = [1, 1]} : vector<8x384xf32> to vector<8x128xf32>
      %146 = arith.addf %144, %145 : vector<8x128xf32>
      %147 = arith.negf %146 : vector<8x128xf32>
      %148 = math.exp %147 : vector<8x128xf32>
      %cst_80 = arith.constant 1.000000e+00 : f32
      %149 = vector.broadcast %cst_80 : f32 to vector<8x128xf32>
      %150 = arith.addf %149, %148 : vector<8x128xf32>
      %151 = arith.divf %149, %150 : vector<8x128xf32>
      %152 = vector.extract_strided_slice %132 {offsets = [0, 256], sizes = [8, 128], strides = [1, 1]} : vector<8x384xf32> to vector<8x128xf32>
      %153 = vector.extract_strided_slice %135 {offsets = [0, 256], sizes = [8, 128], strides = [1, 1]} : vector<8x384xf32> to vector<8x128xf32>
      %154 = arith.mulf %143, %153 : vector<8x128xf32>
      %155 = arith.addf %152, %154 : vector<8x128xf32>
      %156 = math.tanh %155 : vector<8x128xf32>
      %cst_81 = arith.constant 1.000000e+00 : f32
      %157 = vector.broadcast %cst_81 : f32 to vector<8x128xf32>
      %158 = arith.subf %157, %151 : vector<8x128xf32>
      %159 = arith.mulf %158, %156 : vector<8x128xf32>
      %160 = arith.mulf %151, %129 : vector<8x128xf32>
      %161 = arith.addf %159, %160 : vector<8x128xf32>
      %c0_82 = arith.constant 0 : index
      %c0_83 = arith.constant 0 : index
      %c0_84 = arith.constant 0 : index
      %162 = vector.load %arg17[%c0_82, %c0_83, %c0_84] : memref<2x8x128xf32, #tpu.memory_space<vmem>>, vector<1x8x128xf32>
      %163 = vector.shape_cast %162 : vector<1x8x128xf32> to vector<8x128xf32>
      %164 = vector.shape_cast %161 : vector<8x128xf32> to vector<1x8x128xf32>
      tpu.vector_store %arg17[%c0_82, %c0_83, %c0_84], %164 {strides = array<i32>} : memref<2x8x128xf32, #tpu.memory_space<vmem>>, vector<1x8x128xf32>,
      %c1_85 = arith.constant 1 : index
      %c0_86 = arith.constant 0 : index
      %c0_87 = arith.constant 0 : index
      %165 = vector.load %arg17[%c1_85, %c0_86, %c0_87] : memref<2x8x128xf32, #tpu.memory_space<vmem>>, vector<1x8x128xf32>
      %166 = vector.shape_cast %165 : vector<1x8x128xf32> to vector<8x128xf32>
      %167 = arith.truncf %161 : vector<8x128xf32> to vector<8x128xbf16>
      %cst_88 = arith.constant dense<0.000000e+00> : vector<8x384xf32>
      %168 = tpu.matmul %167, %42, %cst_88 {dimension_numbers = #tpu.dot_dimension_numbers<[1], [0], [0], [1], [0, 0, 1, 1], [], []>} : vector<8x128xbf16>, vector<128x384xbf16>, vector<8x384xf32> -> vector<8x384xf32>
      %169 = arith.addf %168, %46 : vector<8x384xf32>
      %170 = arith.truncf %166 : vector<8x128xf32> to vector<8x128xbf16>
      %cst_89 = arith.constant dense<0.000000e+00> : vector<8x384xf32>
      %171 = tpu.matmul %170, %43, %cst_89 {dimension_numbers = #tpu.dot_dimension_numbers<[1], [0], [0], [1], [0, 0, 1, 1], [], []>} : vector<8x128xbf16>, vector<128x384xbf16>, vector<8x384xf32> -> vector<8x384xf32>
      %172 = arith.addf %171, %49 : vector<8x384xf32>
      %173 = vector.extract_strided_slice %169 {offsets = [0, 0], sizes = [8, 128], strides = [1, 1]} : vector<8x384xf32> to vector<8x128xf32>
      %174 = vector.extract_strided_slice %172 {offsets = [0, 0], sizes = [8, 128], strides = [1, 1]} : vector<8x384xf32> to vector<8x128xf32>
      %175 = arith.addf %173, %174 : vector<8x128xf32>
      %176 = arith.negf %175 : vector<8x128xf32>
      %177 = math.exp %176 : vector<8x128xf32>
      %cst_90 = arith.constant 1.000000e+00 : f32
      %178 = vector.broadcast %cst_90 : f32 to vector<8x128xf32>
      %179 = arith.addf %178, %177 : vector<8x128xf32>
      %180 = arith.divf %178, %179 : vector<8x128xf32>
      %181 = vector.extract_strided_slice %169 {offsets = [0, 128], sizes = [8, 128], strides = [1, 1]} : vector<8x384xf32> to vector<8x128xf32>
      %182 = vector.extract_strided_slice %172 {offsets = [0, 128], sizes = [8, 128], strides = [1, 1]} : vector<8x384xf32> to vector<8x128xf32>
      %183 = arith.addf %181, %182 : vector<8x128xf32>
      %184 = arith.negf %183 : vector<8x128xf32>
      %185 = math.exp %184 : vector<8x128xf32>
      %cst_91 = arith.constant 1.000000e+00 : f32
      %186 = vector.broadcast %cst_91 : f32 to vector<8x128xf32>
      %187 = arith.addf %186, %185 : vector<8x128xf32>
      %188 = arith.divf %186, %187 : vector<8x128xf32>
      %189 = vector.extract_strided_slice %169 {offsets = [0, 256], sizes = [8, 128], strides = [1, 1]} : vector<8x384xf32> to vector<8x128xf32>
      %190 = vector.extract_strided_slice %172 {offsets = [0, 256], sizes = [8, 128], strides = [1, 1]} : vector<8x384xf32> to vector<8x128xf32>
      %191 = arith.mulf %180, %190 : vector<8x128xf32>
      %192 = arith.addf %189, %191 : vector<8x128xf32>
      %193 = math.tanh %192 : vector<8x128xf32>
      %cst_92 = arith.constant 1.000000e+00 : f32
      %194 = vector.broadcast %cst_92 : f32 to vector<8x128xf32>
      %195 = arith.subf %194, %188 : vector<8x128xf32>
      %196 = arith.mulf %195, %193 : vector<8x128xf32>
      %197 = arith.mulf %188, %166 : vector<8x128xf32>
      %198 = arith.addf %196, %197 : vector<8x128xf32>
      %c1_93 = arith.constant 1 : index
      %c0_94 = arith.constant 0 : index
      %c0_95 = arith.constant 0 : index
      %199 = vector.load %arg17[%c1_93, %c0_94, %c0_95] : memref<2x8x128xf32, #tpu.memory_space<vmem>>, vector<1x8x128xf32>
      %200 = vector.shape_cast %199 : vector<1x8x128xf32> to vector<8x128xf32>
      %201 = vector.shape_cast %198 : vector<8x128xf32> to vector<1x8x128xf32>
      tpu.vector_store %arg17[%c1_93, %c0_94, %c0_95], %201 {strides = array<i32>} : memref<2x8x128xf32, #tpu.memory_space<vmem>>, vector<1x8x128xf32>,
      %202 = arith.index_cast %c1_i32 : i32 to index
      %c0_96 = arith.constant 0 : index
      %c0_97 = arith.constant 0 : index
      %203 = vector.load %arg18[%202, %c0_96, %c0_97] : memref<8x8x128xf32, #tpu.memory_space<vmem>>, vector<1x8x128xf32>
      %204 = vector.shape_cast %203 : vector<1x8x128xf32> to vector<8x128xf32>
      %205 = vector.shape_cast %198 : vector<8x128xf32> to vector<1x8x128xf32>
      tpu.vector_store %arg18[%202, %c0_96, %c0_97], %205 {strides = array<i32>} : memref<8x8x128xf32, #tpu.memory_space<vmem>>, vector<1x8x128xf32>,
      %c2_i32 = arith.constant 2 : i32
      %c0_98 = arith.constant 0 : index
      %c0_99 = arith.constant 0 : index
      %c0_100 = arith.constant 0 : index
      %206 = vector.load %arg17[%c0_98, %c0_99, %c0_100] : memref<2x8x128xf32, #tpu.memory_space<vmem>>, vector<1x8x128xf32>
      %207 = vector.shape_cast %206 : vector<1x8x128xf32> to vector<8x128xf32>
      %208 = arith.index_cast %c2_i32 : i32 to index
      %c0_101 = arith.constant 0 : index
      %c0_102 = arith.constant 0 : index
      %209 = vector.load %arg19[%208, %c0_101, %c0_102] : memref<8x8x384xf32, #tpu.memory_space<vmem>>, vector<1x8x384xf32>
      %210 = vector.shape_cast %209 : vector<1x8x384xf32> to vector<8x384xf32>
      %211 = arith.truncf %207 : vector<8x128xf32> to vector<8x128xbf16>
      %cst_103 = arith.constant dense<0.000000e+00> : vector<8x384xf32>
      %212 = tpu.matmul %211, %38, %cst_103 {dimension_numbers = #tpu.dot_dimension_numbers<[1], [0], [0], [1], [0, 0, 1, 1], [], []>} : vector<8x128xbf16>, vector<128x384xbf16>, vector<8x384xf32> -> vector<8x384xf32>
      %213 = arith.addf %212, %41 : vector<8x384xf32>
      %214 = vector.extract_strided_slice %210 {offsets = [0, 0], sizes = [8, 128], strides = [1, 1]} : vector<8x384xf32> to vector<8x128xf32>
      %215 = vector.extract_strided_slice %213 {offsets = [0, 0], sizes = [8, 128], strides = [1, 1]} : vector<8x384xf32> to vector<8x128xf32>
      %216 = arith.addf %214, %215 : vector<8x128xf32>
      %217 = arith.negf %216 : vector<8x128xf32>
      %218 = math.exp %217 : vector<8x128xf32>
      %cst_104 = arith.constant 1.000000e+00 : f32
      %219 = vector.broadcast %cst_104 : f32 to vector<8x128xf32>
      %220 = arith.addf %219, %218 : vector<8x128xf32>
      %221 = arith.divf %219, %220 : vector<8x128xf32>
      %222 = vector.extract_strided_slice %210 {offsets = [0, 128], sizes = [8, 128], strides = [1, 1]} : vector<8x384xf32> to vector<8x128xf32>
      %223 = vector.extract_strided_slice %213 {offsets = [0, 128], sizes = [8, 128], strides = [1, 1]} : vector<8x384xf32> to vector<8x128xf32>
      %224 = arith.addf %222, %223 : vector<8x128xf32>
      %225 = arith.negf %224 : vector<8x128xf32>
      %226 = math.exp %225 : vector<8x128xf32>
      %cst_105 = arith.constant 1.000000e+00 : f32
      %227 = vector.broadcast %cst_105 : f32 to vector<8x128xf32>
      %228 = arith.addf %227, %226 : vector<8x128xf32>
      %229 = arith.divf %227, %228 : vector<8x128xf32>
      %230 = vector.extract_strided_slice %210 {offsets = [0, 256], sizes = [8, 128], strides = [1, 1]} : vector<8x384xf32> to vector<8x128xf32>
      %231 = vector.extract_strided_slice %213 {offsets = [0, 256], sizes = [8, 128], strides = [1, 1]} : vector<8x384xf32> to vector<8x128xf32>
      %232 = arith.mulf %221, %231 : vector<8x128xf32>
      %233 = arith.addf %230, %232 : vector<8x128xf32>
      %234 = math.tanh %233 : vector<8x128xf32>
      %cst_106 = arith.constant 1.000000e+00 : f32
      %235 = vector.broadcast %cst_106 : f32 to vector<8x128xf32>
      %236 = arith.subf %235, %229 : vector<8x128xf32>
      %237 = arith.mulf %236, %234 : vector<8x128xf32>
      %238 = arith.mulf %229, %207 : vector<8x128xf32>
      %239 = arith.addf %237, %238 : vector<8x128xf32>
      %c0_107 = arith.constant 0 : index
      %c0_108 = arith.constant 0 : index
      %c0_109 = arith.constant 0 : index
      %240 = vector.load %arg17[%c0_107, %c0_108, %c0_109] : memref<2x8x128xf32, #tpu.memory_space<vmem>>, vector<1x8x128xf32>
      %241 = vector.shape_cast %240 : vector<1x8x128xf32> to vector<8x128xf32>
      %242 = vector.shape_cast %239 : vector<8x128xf32> to vector<1x8x128xf32>
      tpu.vector_store %arg17[%c0_107, %c0_108, %c0_109], %242 {strides = array<i32>} : memref<2x8x128xf32, #tpu.memory_space<vmem>>, vector<1x8x128xf32>,
      %c1_110 = arith.constant 1 : index
      %c0_111 = arith.constant 0 : index
      %c0_112 = arith.constant 0 : index
      %243 = vector.load %arg17[%c1_110, %c0_111, %c0_112] : memref<2x8x128xf32, #tpu.memory_space<vmem>>, vector<1x8x128xf32>
      %244 = vector.shape_cast %243 : vector<1x8x128xf32> to vector<8x128xf32>
      %245 = arith.truncf %239 : vector<8x128xf32> to vector<8x128xbf16>
      %cst_113 = arith.constant dense<0.000000e+00> : vector<8x384xf32>
      %246 = tpu.matmul %245, %42, %cst_113 {dimension_numbers = #tpu.dot_dimension_numbers<[1], [0], [0], [1], [0, 0, 1, 1], [], []>} : vector<8x128xbf16>, vector<128x384xbf16>, vector<8x384xf32> -> vector<8x384xf32>
      %247 = arith.addf %246, %46 : vector<8x384xf32>
      %248 = arith.truncf %244 : vector<8x128xf32> to vector<8x128xbf16>
      %cst_114 = arith.constant dense<0.000000e+00> : vector<8x384xf32>
      %249 = tpu.matmul %248, %43, %cst_114 {dimension_numbers = #tpu.dot_dimension_numbers<[1], [0], [0], [1], [0, 0, 1, 1], [], []>} : vector<8x128xbf16>, vector<128x384xbf16>, vector<8x384xf32> -> vector<8x384xf32>
      %250 = arith.addf %249, %49 : vector<8x384xf32>
      %251 = vector.extract_strided_slice %247 {offsets = [0, 0], sizes = [8, 128], strides = [1, 1]} : vector<8x384xf32> to vector<8x128xf32>
      %252 = vector.extract_strided_slice %250 {offsets = [0, 0], sizes = [8, 128], strides = [1, 1]} : vector<8x384xf32> to vector<8x128xf32>
      %253 = arith.addf %251, %252 : vector<8x128xf32>
      %254 = arith.negf %253 : vector<8x128xf32>
      %255 = math.exp %254 : vector<8x128xf32>
      %cst_115 = arith.constant 1.000000e+00 : f32
      %256 = vector.broadcast %cst_115 : f32 to vector<8x128xf32>
      %257 = arith.addf %256, %255 : vector<8x128xf32>
      %258 = arith.divf %256, %257 : vector<8x128xf32>
      %259 = vector.extract_strided_slice %247 {offsets = [0, 128], sizes = [8, 128], strides = [1, 1]} : vector<8x384xf32> to vector<8x128xf32>
      %260 = vector.extract_strided_slice %250 {offsets = [0, 128], sizes = [8, 128], strides = [1, 1]} : vector<8x384xf32> to vector<8x128xf32>
      %261 = arith.addf %259, %260 : vector<8x128xf32>
      %262 = arith.negf %261 : vector<8x128xf32>
      %263 = math.exp %262 : vector<8x128xf32>
      %cst_116 = arith.constant 1.000000e+00 : f32
      %264 = vector.broadcast %cst_116 : f32 to vector<8x128xf32>
      %265 = arith.addf %264, %263 : vector<8x128xf32>
      %266 = arith.divf %264, %265 : vector<8x128xf32>
      %267 = vector.extract_strided_slice %247 {offsets = [0, 256], sizes = [8, 128], strides = [1, 1]} : vector<8x384xf32> to vector<8x128xf32>
      %268 = vector.extract_strided_slice %250 {offsets = [0, 256], sizes = [8, 128], strides = [1, 1]} : vector<8x384xf32> to vector<8x128xf32>
      %269 = arith.mulf %258, %268 : vector<8x128xf32>
      %270 = arith.addf %267, %269 : vector<8x128xf32>
      %271 = math.tanh %270 : vector<8x128xf32>
      %cst_117 = arith.constant 1.000000e+00 : f32
      %272 = vector.broadcast %cst_117 : f32 to vector<8x128xf32>
      %273 = arith.subf %272, %266 : vector<8x128xf32>
      %274 = arith.mulf %273, %271 : vector<8x128xf32>
      %275 = arith.mulf %266, %244 : vector<8x128xf32>
      %276 = arith.addf %274, %275 : vector<8x128xf32>
      %c1_118 = arith.constant 1 : index
      %c0_119 = arith.constant 0 : index
      %c0_120 = arith.constant 0 : index
      %277 = vector.load %arg17[%c1_118, %c0_119, %c0_120] : memref<2x8x128xf32, #tpu.memory_space<vmem>>, vector<1x8x128xf32>
      %278 = vector.shape_cast %277 : vector<1x8x128xf32> to vector<8x128xf32>
      %279 = vector.shape_cast %276 : vector<8x128xf32> to vector<1x8x128xf32>
      tpu.vector_store %arg17[%c1_118, %c0_119, %c0_120], %279 {strides = array<i32>} : memref<2x8x128xf32, #tpu.memory_space<vmem>>, vector<1x8x128xf32>,
      %280 = arith.index_cast %c2_i32 : i32 to index
      %c0_121 = arith.constant 0 : index
      %c0_122 = arith.constant 0 : index
      %281 = vector.load %arg18[%280, %c0_121, %c0_122] : memref<8x8x128xf32, #tpu.memory_space<vmem>>, vector<1x8x128xf32>
      %282 = vector.shape_cast %281 : vector<1x8x128xf32> to vector<8x128xf32>
      %283 = vector.shape_cast %276 : vector<8x128xf32> to vector<1x8x128xf32>
      tpu.vector_store %arg18[%280, %c0_121, %c0_122], %283 {strides = array<i32>} : memref<8x8x128xf32, #tpu.memory_space<vmem>>, vector<1x8x128xf32>,
      %c3_i32 = arith.constant 3 : i32
      %c0_123 = arith.constant 0 : index
      %c0_124 = arith.constant 0 : index
      %c0_125 = arith.constant 0 : index
      %284 = vector.load %arg17[%c0_123, %c0_124, %c0_125] : memref<2x8x128xf32, #tpu.memory_space<vmem>>, vector<1x8x128xf32>
      %285 = vector.shape_cast %284 : vector<1x8x128xf32> to vector<8x128xf32>
      %286 = arith.index_cast %c3_i32 : i32 to index
      %c0_126 = arith.constant 0 : index
      %c0_127 = arith.constant 0 : index
      %287 = vector.load %arg19[%286, %c0_126, %c0_127] : memref<8x8x384xf32, #tpu.memory_space<vmem>>, vector<1x8x384xf32>
      %288 = vector.shape_cast %287 : vector<1x8x384xf32> to vector<8x384xf32>
      %289 = arith.truncf %285 : vector<8x128xf32> to vector<8x128xbf16>
      %cst_128 = arith.constant dense<0.000000e+00> : vector<8x384xf32>
      %290 = tpu.matmul %289, %38, %cst_128 {dimension_numbers = #tpu.dot_dimension_numbers<[1], [0], [0], [1], [0, 0, 1, 1], [], []>} : vector<8x128xbf16>, vector<128x384xbf16>, vector<8x384xf32> -> vector<8x384xf32>
      %291 = arith.addf %290, %41 : vector<8x384xf32>
      %292 = vector.extract_strided_slice %288 {offsets = [0, 0], sizes = [8, 128], strides = [1, 1]} : vector<8x384xf32> to vector<8x128xf32>
      %293 = vector.extract_strided_slice %291 {offsets = [0, 0], sizes = [8, 128], strides = [1, 1]} : vector<8x384xf32> to vector<8x128xf32>
      %294 = arith.addf %292, %293 : vector<8x128xf32>
      %295 = arith.negf %294 : vector<8x128xf32>
      %296 = math.exp %295 : vector<8x128xf32>
      %cst_129 = arith.constant 1.000000e+00 : f32
      %297 = vector.broadcast %cst_129 : f32 to vector<8x128xf32>
      %298 = arith.addf %297, %296 : vector<8x128xf32>
      %299 = arith.divf %297, %298 : vector<8x128xf32>
      %300 = vector.extract_strided_slice %288 {offsets = [0, 128], sizes = [8, 128], strides = [1, 1]} : vector<8x384xf32> to vector<8x128xf32>
      %301 = vector.extract_strided_slice %291 {offsets = [0, 128], sizes = [8, 128], strides = [1, 1]} : vector<8x384xf32> to vector<8x128xf32>
      %302 = arith.addf %300, %301 : vector<8x128xf32>
      %303 = arith.negf %302 : vector<8x128xf32>
      %304 = math.exp %303 : vector<8x128xf32>
      %cst_130 = arith.constant 1.000000e+00 : f32
      %305 = vector.broadcast %cst_130 : f32 to vector<8x128xf32>
      %306 = arith.addf %305, %304 : vector<8x128xf32>
      %307 = arith.divf %305, %306 : vector<8x128xf32>
      %308 = vector.extract_strided_slice %288 {offsets = [0, 256], sizes = [8, 128], strides = [1, 1]} : vector<8x384xf32> to vector<8x128xf32>
      %309 = vector.extract_strided_slice %291 {offsets = [0, 256], sizes = [8, 128], strides = [1, 1]} : vector<8x384xf32> to vector<8x128xf32>
      %310 = arith.mulf %299, %309 : vector<8x128xf32>
      %311 = arith.addf %308, %310 : vector<8x128xf32>
      %312 = math.tanh %311 : vector<8x128xf32>
      %cst_131 = arith.constant 1.000000e+00 : f32
      %313 = vector.broadcast %cst_131 : f32 to vector<8x128xf32>
      %314 = arith.subf %313, %307 : vector<8x128xf32>
      %315 = arith.mulf %314, %312 : vector<8x128xf32>
      %316 = arith.mulf %307, %285 : vector<8x128xf32>
      %317 = arith.addf %315, %316 : vector<8x128xf32>
      %c0_132 = arith.constant 0 : index
      %c0_133 = arith.constant 0 : index
      %c0_134 = arith.constant 0 : index
      %318 = vector.load %arg17[%c0_132, %c0_133, %c0_134] : memref<2x8x128xf32, #tpu.memory_space<vmem>>, vector<1x8x128xf32>
      %319 = vector.shape_cast %318 : vector<1x8x128xf32> to vector<8x128xf32>
      %320 = vector.shape_cast %317 : vector<8x128xf32> to vector<1x8x128xf32>
      tpu.vector_store %arg17[%c0_132, %c0_133, %c0_134], %320 {strides = array<i32>} : memref<2x8x128xf32, #tpu.memory_space<vmem>>, vector<1x8x128xf32>,
      %c1_135 = arith.constant 1 : index
      %c0_136 = arith.constant 0 : index
      %c0_137 = arith.constant 0 : index
      %321 = vector.load %arg17[%c1_135, %c0_136, %c0_137] : memref<2x8x128xf32, #tpu.memory_space<vmem>>, vector<1x8x128xf32>
      %322 = vector.shape_cast %321 : vector<1x8x128xf32> to vector<8x128xf32>
      %323 = arith.truncf %317 : vector<8x128xf32> to vector<8x128xbf16>
      %cst_138 = arith.constant dense<0.000000e+00> : vector<8x384xf32>
      %324 = tpu.matmul %323, %42, %cst_138 {dimension_numbers = #tpu.dot_dimension_numbers<[1], [0], [0], [1], [0, 0, 1, 1], [], []>} : vector<8x128xbf16>, vector<128x384xbf16>, vector<8x384xf32> -> vector<8x384xf32>
      %325 = arith.addf %324, %46 : vector<8x384xf32>
      %326 = arith.truncf %322 : vector<8x128xf32> to vector<8x128xbf16>
      %cst_139 = arith.constant dense<0.000000e+00> : vector<8x384xf32>
      %327 = tpu.matmul %326, %43, %cst_139 {dimension_numbers = #tpu.dot_dimension_numbers<[1], [0], [0], [1], [0, 0, 1, 1], [], []>} : vector<8x128xbf16>, vector<128x384xbf16>, vector<8x384xf32> -> vector<8x384xf32>
      %328 = arith.addf %327, %49 : vector<8x384xf32>
      %329 = vector.extract_strided_slice %325 {offsets = [0, 0], sizes = [8, 128], strides = [1, 1]} : vector<8x384xf32> to vector<8x128xf32>
      %330 = vector.extract_strided_slice %328 {offsets = [0, 0], sizes = [8, 128], strides = [1, 1]} : vector<8x384xf32> to vector<8x128xf32>
      %331 = arith.addf %329, %330 : vector<8x128xf32>
      %332 = arith.negf %331 : vector<8x128xf32>
      %333 = math.exp %332 : vector<8x128xf32>
      %cst_140 = arith.constant 1.000000e+00 : f32
      %334 = vector.broadcast %cst_140 : f32 to vector<8x128xf32>
      %335 = arith.addf %334, %333 : vector<8x128xf32>
      %336 = arith.divf %334, %335 : vector<8x128xf32>
      %337 = vector.extract_strided_slice %325 {offsets = [0, 128], sizes = [8, 128], strides = [1, 1]} : vector<8x384xf32> to vector<8x128xf32>
      %338 = vector.extract_strided_slice %328 {offsets = [0, 128], sizes = [8, 128], strides = [1, 1]} : vector<8x384xf32> to vector<8x128xf32>
      %339 = arith.addf %337, %338 : vector<8x128xf32>
      %340 = arith.negf %339 : vector<8x128xf32>
      %341 = math.exp %340 : vector<8x128xf32>
      %cst_141 = arith.constant 1.000000e+00 : f32
      %342 = vector.broadcast %cst_141 : f32 to vector<8x128xf32>
      %343 = arith.addf %342, %341 : vector<8x128xf32>
      %344 = arith.divf %342, %343 : vector<8x128xf32>
      %345 = vector.extract_strided_slice %325 {offsets = [0, 256], sizes = [8, 128], strides = [1, 1]} : vector<8x384xf32> to vector<8x128xf32>
      %346 = vector.extract_strided_slice %328 {offsets = [0, 256], sizes = [8, 128], strides = [1, 1]} : vector<8x384xf32> to vector<8x128xf32>
      %347 = arith.mulf %336, %346 : vector<8x128xf32>
      %348 = arith.addf %345, %347 : vector<8x128xf32>
      %349 = math.tanh %348 : vector<8x128xf32>
      %cst_142 = arith.constant 1.000000e+00 : f32
      %350 = vector.broadcast %cst_142 : f32 to vector<8x128xf32>
      %351 = arith.subf %350, %344 : vector<8x128xf32>
      %352 = arith.mulf %351, %349 : vector<8x128xf32>
      %353 = arith.mulf %344, %322 : vector<8x128xf32>
      %354 = arith.addf %352, %353 : vector<8x128xf32>
      %c1_143 = arith.constant 1 : index
      %c0_144 = arith.constant 0 : index
      %c0_145 = arith.constant 0 : index
      %355 = vector.load %arg17[%c1_143, %c0_144, %c0_145] : memref<2x8x128xf32, #tpu.memory_space<vmem>>, vector<1x8x128xf32>
      %356 = vector.shape_cast %355 : vector<1x8x128xf32> to vector<8x128xf32>
      %357 = vector.shape_cast %354 : vector<8x128xf32> to vector<1x8x128xf32>
      tpu.vector_store %arg17[%c1_143, %c0_144, %c0_145], %357 {strides = array<i32>} : memref<2x8x128xf32, #tpu.memory_space<vmem>>, vector<1x8x128xf32>,
      %358 = arith.index_cast %c3_i32 : i32 to index
      %c0_146 = arith.constant 0 : index
      %c0_147 = arith.constant 0 : index
      %359 = vector.load %arg18[%358, %c0_146, %c0_147] : memref<8x8x128xf32, #tpu.memory_space<vmem>>, vector<1x8x128xf32>
      %360 = vector.shape_cast %359 : vector<1x8x128xf32> to vector<8x128xf32>
      %361 = vector.shape_cast %354 : vector<8x128xf32> to vector<1x8x128xf32>
      tpu.vector_store %arg18[%358, %c0_146, %c0_147], %361 {strides = array<i32>} : memref<8x8x128xf32, #tpu.memory_space<vmem>>, vector<1x8x128xf32>,
      %c4_i32 = arith.constant 4 : i32
      %c0_148 = arith.constant 0 : index
      %c0_149 = arith.constant 0 : index
      %c0_150 = arith.constant 0 : index
      %362 = vector.load %arg17[%c0_148, %c0_149, %c0_150] : memref<2x8x128xf32, #tpu.memory_space<vmem>>, vector<1x8x128xf32>
      %363 = vector.shape_cast %362 : vector<1x8x128xf32> to vector<8x128xf32>
      %364 = arith.index_cast %c4_i32 : i32 to index
      %c0_151 = arith.constant 0 : index
      %c0_152 = arith.constant 0 : index
      %365 = vector.load %arg19[%364, %c0_151, %c0_152] : memref<8x8x384xf32, #tpu.memory_space<vmem>>, vector<1x8x384xf32>
      %366 = vector.shape_cast %365 : vector<1x8x384xf32> to vector<8x384xf32>
      %367 = arith.truncf %363 : vector<8x128xf32> to vector<8x128xbf16>
      %cst_153 = arith.constant dense<0.000000e+00> : vector<8x384xf32>
      %368 = tpu.matmul %367, %38, %cst_153 {dimension_numbers = #tpu.dot_dimension_numbers<[1], [0], [0], [1], [0, 0, 1, 1], [], []>} : vector<8x128xbf16>, vector<128x384xbf16>, vector<8x384xf32> -> vector<8x384xf32>
      %369 = arith.addf %368, %41 : vector<8x384xf32>
      %370 = vector.extract_strided_slice %366 {offsets = [0, 0], sizes = [8, 128], strides = [1, 1]} : vector<8x384xf32> to vector<8x128xf32>
      %371 = vector.extract_strided_slice %369 {offsets = [0, 0], sizes = [8, 128], strides = [1, 1]} : vector<8x384xf32> to vector<8x128xf32>
      %372 = arith.addf %370, %371 : vector<8x128xf32>
      %373 = arith.negf %372 : vector<8x128xf32>
      %374 = math.exp %373 : vector<8x128xf32>
      %cst_154 = arith.constant 1.000000e+00 : f32
      %375 = vector.broadcast %cst_154 : f32 to vector<8x128xf32>
      %376 = arith.addf %375, %374 : vector<8x128xf32>
      %377 = arith.divf %375, %376 : vector<8x128xf32>
      %378 = vector.extract_strided_slice %366 {offsets = [0, 128], sizes = [8, 128], strides = [1, 1]} : vector<8x384xf32> to vector<8x128xf32>
      %379 = vector.extract_strided_slice %369 {offsets = [0, 128], sizes = [8, 128], strides = [1, 1]} : vector<8x384xf32> to vector<8x128xf32>
      %380 = arith.addf %378, %379 : vector<8x128xf32>
      %381 = arith.negf %380 : vector<8x128xf32>
      %382 = math.exp %381 : vector<8x128xf32>
      %cst_155 = arith.constant 1.000000e+00 : f32
      %383 = vector.broadcast %cst_155 : f32 to vector<8x128xf32>
      %384 = arith.addf %383, %382 : vector<8x128xf32>
      %385 = arith.divf %383, %384 : vector<8x128xf32>
      %386 = vector.extract_strided_slice %366 {offsets = [0, 256], sizes = [8, 128], strides = [1, 1]} : vector<8x384xf32> to vector<8x128xf32>
      %387 = vector.extract_strided_slice %369 {offsets = [0, 256], sizes = [8, 128], strides = [1, 1]} : vector<8x384xf32> to vector<8x128xf32>
      %388 = arith.mulf %377, %387 : vector<8x128xf32>
      %389 = arith.addf %386, %388 : vector<8x128xf32>
      %390 = math.tanh %389 : vector<8x128xf32>
      %cst_156 = arith.constant 1.000000e+00 : f32
      %391 = vector.broadcast %cst_156 : f32 to vector<8x128xf32>
      %392 = arith.subf %391, %385 : vector<8x128xf32>
      %393 = arith.mulf %392, %390 : vector<8x128xf32>
      %394 = arith.mulf %385, %363 : vector<8x128xf32>
      %395 = arith.addf %393, %394 : vector<8x128xf32>
      %c0_157 = arith.constant 0 : index
      %c0_158 = arith.constant 0 : index
      %c0_159 = arith.constant 0 : index
      %396 = vector.load %arg17[%c0_157, %c0_158, %c0_159] : memref<2x8x128xf32, #tpu.memory_space<vmem>>, vector<1x8x128xf32>
      %397 = vector.shape_cast %396 : vector<1x8x128xf32> to vector<8x128xf32>
      %398 = vector.shape_cast %395 : vector<8x128xf32> to vector<1x8x128xf32>
      tpu.vector_store %arg17[%c0_157, %c0_158, %c0_159], %398 {strides = array<i32>} : memref<2x8x128xf32, #tpu.memory_space<vmem>>, vector<1x8x128xf32>,
      %c1_160 = arith.constant 1 : index
      %c0_161 = arith.constant 0 : index
      %c0_162 = arith.constant 0 : index
      %399 = vector.load %arg17[%c1_160, %c0_161, %c0_162] : memref<2x8x128xf32, #tpu.memory_space<vmem>>, vector<1x8x128xf32>
      %400 = vector.shape_cast %399 : vector<1x8x128xf32> to vector<8x128xf32>
      %401 = arith.truncf %395 : vector<8x128xf32> to vector<8x128xbf16>
      %cst_163 = arith.constant dense<0.000000e+00> : vector<8x384xf32>
      %402 = tpu.matmul %401, %42, %cst_163 {dimension_numbers = #tpu.dot_dimension_numbers<[1], [0], [0], [1], [0, 0, 1, 1], [], []>} : vector<8x128xbf16>, vector<128x384xbf16>, vector<8x384xf32> -> vector<8x384xf32>
      %403 = arith.addf %402, %46 : vector<8x384xf32>
      %404 = arith.truncf %400 : vector<8x128xf32> to vector<8x128xbf16>
      %cst_164 = arith.constant dense<0.000000e+00> : vector<8x384xf32>
      %405 = tpu.matmul %404, %43, %cst_164 {dimension_numbers = #tpu.dot_dimension_numbers<[1], [0], [0], [1], [0, 0, 1, 1], [], []>} : vector<8x128xbf16>, vector<128x384xbf16>, vector<8x384xf32> -> vector<8x384xf32>
      %406 = arith.addf %405, %49 : vector<8x384xf32>
      %407 = vector.extract_strided_slice %403 {offsets = [0, 0], sizes = [8, 128], strides = [1, 1]} : vector<8x384xf32> to vector<8x128xf32>
      %408 = vector.extract_strided_slice %406 {offsets = [0, 0], sizes = [8, 128], strides = [1, 1]} : vector<8x384xf32> to vector<8x128xf32>
      %409 = arith.addf %407, %408 : vector<8x128xf32>
      %410 = arith.negf %409 : vector<8x128xf32>
      %411 = math.exp %410 : vector<8x128xf32>
      %cst_165 = arith.constant 1.000000e+00 : f32
      %412 = vector.broadcast %cst_165 : f32 to vector<8x128xf32>
      %413 = arith.addf %412, %411 : vector<8x128xf32>
      %414 = arith.divf %412, %413 : vector<8x128xf32>
      %415 = vector.extract_strided_slice %403 {offsets = [0, 128], sizes = [8, 128], strides = [1, 1]} : vector<8x384xf32> to vector<8x128xf32>
      %416 = vector.extract_strided_slice %406 {offsets = [0, 128], sizes = [8, 128], strides = [1, 1]} : vector<8x384xf32> to vector<8x128xf32>
      %417 = arith.addf %415, %416 : vector<8x128xf32>
      %418 = arith.negf %417 : vector<8x128xf32>
      %419 = math.exp %418 : vector<8x128xf32>
      %cst_166 = arith.constant 1.000000e+00 : f32
      %420 = vector.broadcast %cst_166 : f32 to vector<8x128xf32>
      %421 = arith.addf %420, %419 : vector<8x128xf32>
      %422 = arith.divf %420, %421 : vector<8x128xf32>
      %423 = vector.extract_strided_slice %403 {offsets = [0, 256], sizes = [8, 128], strides = [1, 1]} : vector<8x384xf32> to vector<8x128xf32>
      %424 = vector.extract_strided_slice %406 {offsets = [0, 256], sizes = [8, 128], strides = [1, 1]} : vector<8x384xf32> to vector<8x128xf32>
      %425 = arith.mulf %414, %424 : vector<8x128xf32>
      %426 = arith.addf %423, %425 : vector<8x128xf32>
      %427 = math.tanh %426 : vector<8x128xf32>
      %cst_167 = arith.constant 1.000000e+00 : f32
      %428 = vector.broadcast %cst_167 : f32 to vector<8x128xf32>
      %429 = arith.subf %428, %422 : vector<8x128xf32>
      %430 = arith.mulf %429, %427 : vector<8x128xf32>
      %431 = arith.mulf %422, %400 : vector<8x128xf32>
      %432 = arith.addf %430, %431 : vector<8x128xf32>
      %c1_168 = arith.constant 1 : index
      %c0_169 = arith.constant 0 : index
      %c0_170 = arith.constant 0 : index
      %433 = vector.load %arg17[%c1_168, %c0_169, %c0_170] : memref<2x8x128xf32, #tpu.memory_space<vmem>>, vector<1x8x128xf32>
      %434 = vector.shape_cast %433 : vector<1x8x128xf32> to vector<8x128xf32>
      %435 = vector.shape_cast %432 : vector<8x128xf32> to vector<1x8x128xf32>
      tpu.vector_store %arg17[%c1_168, %c0_169, %c0_170], %435 {strides = array<i32>} : memref<2x8x128xf32, #tpu.memory_space<vmem>>, vector<1x8x128xf32>,
      %436 = arith.index_cast %c4_i32 : i32 to index
      %c0_171 = arith.constant 0 : index
      %c0_172 = arith.constant 0 : index
      %437 = vector.load %arg18[%436, %c0_171, %c0_172] : memref<8x8x128xf32, #tpu.memory_space<vmem>>, vector<1x8x128xf32>
      %438 = vector.shape_cast %437 : vector<1x8x128xf32> to vector<8x128xf32>
      %439 = vector.shape_cast %432 : vector<8x128xf32> to vector<1x8x128xf32>
      tpu.vector_store %arg18[%436, %c0_171, %c0_172], %439 {strides = array<i32>} : memref<8x8x128xf32, #tpu.memory_space<vmem>>, vector<1x8x128xf32>,
      %c5_i32 = arith.constant 5 : i32
      %c0_173 = arith.constant 0 : index
      %c0_174 = arith.constant 0 : index
      %c0_175 = arith.constant 0 : index
      %440 = vector.load %arg17[%c0_173, %c0_174, %c0_175] : memref<2x8x128xf32, #tpu.memory_space<vmem>>, vector<1x8x128xf32>
      %441 = vector.shape_cast %440 : vector<1x8x128xf32> to vector<8x128xf32>
      %442 = arith.index_cast %c5_i32 : i32 to index
      %c0_176 = arith.constant 0 : index
      %c0_177 = arith.constant 0 : index
      %443 = vector.load %arg19[%442, %c0_176, %c0_177] : memref<8x8x384xf32, #tpu.memory_space<vmem>>, vector<1x8x384xf32>
      %444 = vector.shape_cast %443 : vector<1x8x384xf32> to vector<8x384xf32>
      %445 = arith.truncf %441 : vector<8x128xf32> to vector<8x128xbf16>
      %cst_178 = arith.constant dense<0.000000e+00> : vector<8x384xf32>
      %446 = tpu.matmul %445, %38, %cst_178 {dimension_numbers = #tpu.dot_dimension_numbers<[1], [0], [0], [1], [0, 0, 1, 1], [], []>} : vector<8x128xbf16>, vector<128x384xbf16>, vector<8x384xf32> -> vector<8x384xf32>
      %447 = arith.addf %446, %41 : vector<8x384xf32>
      %448 = vector.extract_strided_slice %444 {offsets = [0, 0], sizes = [8, 128], strides = [1, 1]} : vector<8x384xf32> to vector<8x128xf32>
      %449 = vector.extract_strided_slice %447 {offsets = [0, 0], sizes = [8, 128], strides = [1, 1]} : vector<8x384xf32> to vector<8x128xf32>
      %450 = arith.addf %448, %449 : vector<8x128xf32>
      %451 = arith.negf %450 : vector<8x128xf32>
      %452 = math.exp %451 : vector<8x128xf32>
      %cst_179 = arith.constant 1.000000e+00 : f32
      %453 = vector.broadcast %cst_179 : f32 to vector<8x128xf32>
      %454 = arith.addf %453, %452 : vector<8x128xf32>
      %455 = arith.divf %453, %454 : vector<8x128xf32>
      %456 = vector.extract_strided_slice %444 {offsets = [0, 128], sizes = [8, 128], strides = [1, 1]} : vector<8x384xf32> to vector<8x128xf32>
      %457 = vector.extract_strided_slice %447 {offsets = [0, 128], sizes = [8, 128], strides = [1, 1]} : vector<8x384xf32> to vector<8x128xf32>
      %458 = arith.addf %456, %457 : vector<8x128xf32>
      %459 = arith.negf %458 : vector<8x128xf32>
      %460 = math.exp %459 : vector<8x128xf32>
      %cst_180 = arith.constant 1.000000e+00 : f32
      %461 = vector.broadcast %cst_180 : f32 to vector<8x128xf32>
      %462 = arith.addf %461, %460 : vector<8x128xf32>
      %463 = arith.divf %461, %462 : vector<8x128xf32>
      %464 = vector.extract_strided_slice %444 {offsets = [0, 256], sizes = [8, 128], strides = [1, 1]} : vector<8x384xf32> to vector<8x128xf32>
      %465 = vector.extract_strided_slice %447 {offsets = [0, 256], sizes = [8, 128], strides = [1, 1]} : vector<8x384xf32> to vector<8x128xf32>
      %466 = arith.mulf %455, %465 : vector<8x128xf32>
      %467 = arith.addf %464, %466 : vector<8x128xf32>
      %468 = math.tanh %467 : vector<8x128xf32>
      %cst_181 = arith.constant 1.000000e+00 : f32
      %469 = vector.broadcast %cst_181 : f32 to vector<8x128xf32>
      %470 = arith.subf %469, %463 : vector<8x128xf32>
      %471 = arith.mulf %470, %468 : vector<8x128xf32>
      %472 = arith.mulf %463, %441 : vector<8x128xf32>
      %473 = arith.addf %471, %472 : vector<8x128xf32>
      %c0_182 = arith.constant 0 : index
      %c0_183 = arith.constant 0 : index
      %c0_184 = arith.constant 0 : index
      %474 = vector.load %arg17[%c0_182, %c0_183, %c0_184] : memref<2x8x128xf32, #tpu.memory_space<vmem>>, vector<1x8x128xf32>
      %475 = vector.shape_cast %474 : vector<1x8x128xf32> to vector<8x128xf32>
      %476 = vector.shape_cast %473 : vector<8x128xf32> to vector<1x8x128xf32>
      tpu.vector_store %arg17[%c0_182, %c0_183, %c0_184], %476 {strides = array<i32>} : memref<2x8x128xf32, #tpu.memory_space<vmem>>, vector<1x8x128xf32>,
      %c1_185 = arith.constant 1 : index
      %c0_186 = arith.constant 0 : index
      %c0_187 = arith.constant 0 : index
      %477 = vector.load %arg17[%c1_185, %c0_186, %c0_187] : memref<2x8x128xf32, #tpu.memory_space<vmem>>, vector<1x8x128xf32>
      %478 = vector.shape_cast %477 : vector<1x8x128xf32> to vector<8x128xf32>
      %479 = arith.truncf %473 : vector<8x128xf32> to vector<8x128xbf16>
      %cst_188 = arith.constant dense<0.000000e+00> : vector<8x384xf32>
      %480 = tpu.matmul %479, %42, %cst_188 {dimension_numbers = #tpu.dot_dimension_numbers<[1], [0], [0], [1], [0, 0, 1, 1], [], []>} : vector<8x128xbf16>, vector<128x384xbf16>, vector<8x384xf32> -> vector<8x384xf32>
      %481 = arith.addf %480, %46 : vector<8x384xf32>
      %482 = arith.truncf %478 : vector<8x128xf32> to vector<8x128xbf16>
      %cst_189 = arith.constant dense<0.000000e+00> : vector<8x384xf32>
      %483 = tpu.matmul %482, %43, %cst_189 {dimension_numbers = #tpu.dot_dimension_numbers<[1], [0], [0], [1], [0, 0, 1, 1], [], []>} : vector<8x128xbf16>, vector<128x384xbf16>, vector<8x384xf32> -> vector<8x384xf32>
      %484 = arith.addf %483, %49 : vector<8x384xf32>
      %485 = vector.extract_strided_slice %481 {offsets = [0, 0], sizes = [8, 128], strides = [1, 1]} : vector<8x384xf32> to vector<8x128xf32>
      %486 = vector.extract_strided_slice %484 {offsets = [0, 0], sizes = [8, 128], strides = [1, 1]} : vector<8x384xf32> to vector<8x128xf32>
      %487 = arith.addf %485, %486 : vector<8x128xf32>
      %488 = arith.negf %487 : vector<8x128xf32>
      %489 = math.exp %488 : vector<8x128xf32>
      %cst_190 = arith.constant 1.000000e+00 : f32
      %490 = vector.broadcast %cst_190 : f32 to vector<8x128xf32>
      %491 = arith.addf %490, %489 : vector<8x128xf32>
      %492 = arith.divf %490, %491 : vector<8x128xf32>
      %493 = vector.extract_strided_slice %481 {offsets = [0, 128], sizes = [8, 128], strides = [1, 1]} : vector<8x384xf32> to vector<8x128xf32>
      %494 = vector.extract_strided_slice %484 {offsets = [0, 128], sizes = [8, 128], strides = [1, 1]} : vector<8x384xf32> to vector<8x128xf32>
      %495 = arith.addf %493, %494 : vector<8x128xf32>
      %496 = arith.negf %495 : vector<8x128xf32>
      %497 = math.exp %496 : vector<8x128xf32>
      %cst_191 = arith.constant 1.000000e+00 : f32
      %498 = vector.broadcast %cst_191 : f32 to vector<8x128xf32>
      %499 = arith.addf %498, %497 : vector<8x128xf32>
      %500 = arith.divf %498, %499 : vector<8x128xf32>
      %501 = vector.extract_strided_slice %481 {offsets = [0, 256], sizes = [8, 128], strides = [1, 1]} : vector<8x384xf32> to vector<8x128xf32>
      %502 = vector.extract_strided_slice %484 {offsets = [0, 256], sizes = [8, 128], strides = [1, 1]} : vector<8x384xf32> to vector<8x128xf32>
      %503 = arith.mulf %492, %502 : vector<8x128xf32>
      %504 = arith.addf %501, %503 : vector<8x128xf32>
      %505 = math.tanh %504 : vector<8x128xf32>
      %cst_192 = arith.constant 1.000000e+00 : f32
      %506 = vector.broadcast %cst_192 : f32 to vector<8x128xf32>
      %507 = arith.subf %506, %500 : vector<8x128xf32>
      %508 = arith.mulf %507, %505 : vector<8x128xf32>
      %509 = arith.mulf %500, %478 : vector<8x128xf32>
      %510 = arith.addf %508, %509 : vector<8x128xf32>
      %c1_193 = arith.constant 1 : index
      %c0_194 = arith.constant 0 : index
      %c0_195 = arith.constant 0 : index
      %511 = vector.load %arg17[%c1_193, %c0_194, %c0_195] : memref<2x8x128xf32, #tpu.memory_space<vmem>>, vector<1x8x128xf32>
      %512 = vector.shape_cast %511 : vector<1x8x128xf32> to vector<8x128xf32>
      %513 = vector.shape_cast %510 : vector<8x128xf32> to vector<1x8x128xf32>
      tpu.vector_store %arg17[%c1_193, %c0_194, %c0_195], %513 {strides = array<i32>} : memref<2x8x128xf32, #tpu.memory_space<vmem>>, vector<1x8x128xf32>,
      %514 = arith.index_cast %c5_i32 : i32 to index
      %c0_196 = arith.constant 0 : index
      %c0_197 = arith.constant 0 : index
      %515 = vector.load %arg18[%514, %c0_196, %c0_197] : memref<8x8x128xf32, #tpu.memory_space<vmem>>, vector<1x8x128xf32>
      %516 = vector.shape_cast %515 : vector<1x8x128xf32> to vector<8x128xf32>
      %517 = vector.shape_cast %510 : vector<8x128xf32> to vector<1x8x128xf32>
      tpu.vector_store %arg18[%514, %c0_196, %c0_197], %517 {strides = array<i32>} : memref<8x8x128xf32, #tpu.memory_space<vmem>>, vector<1x8x128xf32>,
      %c6_i32 = arith.constant 6 : i32
      %c0_198 = arith.constant 0 : index
      %c0_199 = arith.constant 0 : index
      %c0_200 = arith.constant 0 : index
      %518 = vector.load %arg17[%c0_198, %c0_199, %c0_200] : memref<2x8x128xf32, #tpu.memory_space<vmem>>, vector<1x8x128xf32>
      %519 = vector.shape_cast %518 : vector<1x8x128xf32> to vector<8x128xf32>
      %520 = arith.index_cast %c6_i32 : i32 to index
      %c0_201 = arith.constant 0 : index
      %c0_202 = arith.constant 0 : index
      %521 = vector.load %arg19[%520, %c0_201, %c0_202] : memref<8x8x384xf32, #tpu.memory_space<vmem>>, vector<1x8x384xf32>
      %522 = vector.shape_cast %521 : vector<1x8x384xf32> to vector<8x384xf32>
      %523 = arith.truncf %519 : vector<8x128xf32> to vector<8x128xbf16>
      %cst_203 = arith.constant dense<0.000000e+00> : vector<8x384xf32>
      %524 = tpu.matmul %523, %38, %cst_203 {dimension_numbers = #tpu.dot_dimension_numbers<[1], [0], [0], [1], [0, 0, 1, 1], [], []>} : vector<8x128xbf16>, vector<128x384xbf16>, vector<8x384xf32> -> vector<8x384xf32>
      %525 = arith.addf %524, %41 : vector<8x384xf32>
      %526 = vector.extract_strided_slice %522 {offsets = [0, 0], sizes = [8, 128], strides = [1, 1]} : vector<8x384xf32> to vector<8x128xf32>
      %527 = vector.extract_strided_slice %525 {offsets = [0, 0], sizes = [8, 128], strides = [1, 1]} : vector<8x384xf32> to vector<8x128xf32>
      %528 = arith.addf %526, %527 : vector<8x128xf32>
      %529 = arith.negf %528 : vector<8x128xf32>
      %530 = math.exp %529 : vector<8x128xf32>
      %cst_204 = arith.constant 1.000000e+00 : f32
      %531 = vector.broadcast %cst_204 : f32 to vector<8x128xf32>
      %532 = arith.addf %531, %530 : vector<8x128xf32>
      %533 = arith.divf %531, %532 : vector<8x128xf32>
      %534 = vector.extract_strided_slice %522 {offsets = [0, 128], sizes = [8, 128], strides = [1, 1]} : vector<8x384xf32> to vector<8x128xf32>
      %535 = vector.extract_strided_slice %525 {offsets = [0, 128], sizes = [8, 128], strides = [1, 1]} : vector<8x384xf32> to vector<8x128xf32>
      %536 = arith.addf %534, %535 : vector<8x128xf32>
      %537 = arith.negf %536 : vector<8x128xf32>
      %538 = math.exp %537 : vector<8x128xf32>
      %cst_205 = arith.constant 1.000000e+00 : f32
      %539 = vector.broadcast %cst_205 : f32 to vector<8x128xf32>
      %540 = arith.addf %539, %538 : vector<8x128xf32>
      %541 = arith.divf %539, %540 : vector<8x128xf32>
      %542 = vector.extract_strided_slice %522 {offsets = [0, 256], sizes = [8, 128], strides = [1, 1]} : vector<8x384xf32> to vector<8x128xf32>
      %543 = vector.extract_strided_slice %525 {offsets = [0, 256], sizes = [8, 128], strides = [1, 1]} : vector<8x384xf32> to vector<8x128xf32>
      %544 = arith.mulf %533, %543 : vector<8x128xf32>
      %545 = arith.addf %542, %544 : vector<8x128xf32>
      %546 = math.tanh %545 : vector<8x128xf32>
      %cst_206 = arith.constant 1.000000e+00 : f32
      %547 = vector.broadcast %cst_206 : f32 to vector<8x128xf32>
      %548 = arith.subf %547, %541 : vector<8x128xf32>
      %549 = arith.mulf %548, %546 : vector<8x128xf32>
      %550 = arith.mulf %541, %519 : vector<8x128xf32>
      %551 = arith.addf %549, %550 : vector<8x128xf32>
      %c0_207 = arith.constant 0 : index
      %c0_208 = arith.constant 0 : index
      %c0_209 = arith.constant 0 : index
      %552 = vector.load %arg17[%c0_207, %c0_208, %c0_209] : memref<2x8x128xf32, #tpu.memory_space<vmem>>, vector<1x8x128xf32>
      %553 = vector.shape_cast %552 : vector<1x8x128xf32> to vector<8x128xf32>
      %554 = vector.shape_cast %551 : vector<8x128xf32> to vector<1x8x128xf32>
      tpu.vector_store %arg17[%c0_207, %c0_208, %c0_209], %554 {strides = array<i32>} : memref<2x8x128xf32, #tpu.memory_space<vmem>>, vector<1x8x128xf32>,
      %c1_210 = arith.constant 1 : index
      %c0_211 = arith.constant 0 : index
      %c0_212 = arith.constant 0 : index
      %555 = vector.load %arg17[%c1_210, %c0_211, %c0_212] : memref<2x8x128xf32, #tpu.memory_space<vmem>>, vector<1x8x128xf32>
      %556 = vector.shape_cast %555 : vector<1x8x128xf32> to vector<8x128xf32>
      %557 = arith.truncf %551 : vector<8x128xf32> to vector<8x128xbf16>
      %cst_213 = arith.constant dense<0.000000e+00> : vector<8x384xf32>
      %558 = tpu.matmul %557, %42, %cst_213 {dimension_numbers = #tpu.dot_dimension_numbers<[1], [0], [0], [1], [0, 0, 1, 1], [], []>} : vector<8x128xbf16>, vector<128x384xbf16>, vector<8x384xf32> -> vector<8x384xf32>
      %559 = arith.addf %558, %46 : vector<8x384xf32>
      %560 = arith.truncf %556 : vector<8x128xf32> to vector<8x128xbf16>
      %cst_214 = arith.constant dense<0.000000e+00> : vector<8x384xf32>
      %561 = tpu.matmul %560, %43, %cst_214 {dimension_numbers = #tpu.dot_dimension_numbers<[1], [0], [0], [1], [0, 0, 1, 1], [], []>} : vector<8x128xbf16>, vector<128x384xbf16>, vector<8x384xf32> -> vector<8x384xf32>
      %562 = arith.addf %561, %49 : vector<8x384xf32>
      %563 = vector.extract_strided_slice %559 {offsets = [0, 0], sizes = [8, 128], strides = [1, 1]} : vector<8x384xf32> to vector<8x128xf32>
      %564 = vector.extract_strided_slice %562 {offsets = [0, 0], sizes = [8, 128], strides = [1, 1]} : vector<8x384xf32> to vector<8x128xf32>
      %565 = arith.addf %563, %564 : vector<8x128xf32>
      %566 = arith.negf %565 : vector<8x128xf32>
      %567 = math.exp %566 : vector<8x128xf32>
      %cst_215 = arith.constant 1.000000e+00 : f32
      %568 = vector.broadcast %cst_215 : f32 to vector<8x128xf32>
      %569 = arith.addf %568, %567 : vector<8x128xf32>
      %570 = arith.divf %568, %569 : vector<8x128xf32>
      %571 = vector.extract_strided_slice %559 {offsets = [0, 128], sizes = [8, 128], strides = [1, 1]} : vector<8x384xf32> to vector<8x128xf32>
      %572 = vector.extract_strided_slice %562 {offsets = [0, 128], sizes = [8, 128], strides = [1, 1]} : vector<8x384xf32> to vector<8x128xf32>
      %573 = arith.addf %571, %572 : vector<8x128xf32>
      %574 = arith.negf %573 : vector<8x128xf32>
      %575 = math.exp %574 : vector<8x128xf32>
      %cst_216 = arith.constant 1.000000e+00 : f32
      %576 = vector.broadcast %cst_216 : f32 to vector<8x128xf32>
      %577 = arith.addf %576, %575 : vector<8x128xf32>
      %578 = arith.divf %576, %577 : vector<8x128xf32>
      %579 = vector.extract_strided_slice %559 {offsets = [0, 256], sizes = [8, 128], strides = [1, 1]} : vector<8x384xf32> to vector<8x128xf32>
      %580 = vector.extract_strided_slice %562 {offsets = [0, 256], sizes = [8, 128], strides = [1, 1]} : vector<8x384xf32> to vector<8x128xf32>
      %581 = arith.mulf %570, %580 : vector<8x128xf32>
      %582 = arith.addf %579, %581 : vector<8x128xf32>
      %583 = math.tanh %582 : vector<8x128xf32>
      %cst_217 = arith.constant 1.000000e+00 : f32
      %584 = vector.broadcast %cst_217 : f32 to vector<8x128xf32>
      %585 = arith.subf %584, %578 : vector<8x128xf32>
      %586 = arith.mulf %585, %583 : vector<8x128xf32>
      %587 = arith.mulf %578, %556 : vector<8x128xf32>
      %588 = arith.addf %586, %587 : vector<8x128xf32>
      %c1_218 = arith.constant 1 : index
      %c0_219 = arith.constant 0 : index
      %c0_220 = arith.constant 0 : index
      %589 = vector.load %arg17[%c1_218, %c0_219, %c0_220] : memref<2x8x128xf32, #tpu.memory_space<vmem>>, vector<1x8x128xf32>
      %590 = vector.shape_cast %589 : vector<1x8x128xf32> to vector<8x128xf32>
      %591 = vector.shape_cast %588 : vector<8x128xf32> to vector<1x8x128xf32>
      tpu.vector_store %arg17[%c1_218, %c0_219, %c0_220], %591 {strides = array<i32>} : memref<2x8x128xf32, #tpu.memory_space<vmem>>, vector<1x8x128xf32>,
      %592 = arith.index_cast %c6_i32 : i32 to index
      %c0_221 = arith.constant 0 : index
      %c0_222 = arith.constant 0 : index
      %593 = vector.load %arg18[%592, %c0_221, %c0_222] : memref<8x8x128xf32, #tpu.memory_space<vmem>>, vector<1x8x128xf32>
      %594 = vector.shape_cast %593 : vector<1x8x128xf32> to vector<8x128xf32>
      %595 = vector.shape_cast %588 : vector<8x128xf32> to vector<1x8x128xf32>
      tpu.vector_store %arg18[%592, %c0_221, %c0_222], %595 {strides = array<i32>} : memref<8x8x128xf32, #tpu.memory_space<vmem>>, vector<1x8x128xf32>,
      %c7_i32 = arith.constant 7 : i32
      %c0_223 = arith.constant 0 : index
      %c0_224 = arith.constant 0 : index
      %c0_225 = arith.constant 0 : index
      %596 = vector.load %arg17[%c0_223, %c0_224, %c0_225] : memref<2x8x128xf32, #tpu.memory_space<vmem>>, vector<1x8x128xf32>
      %597 = vector.shape_cast %596 : vector<1x8x128xf32> to vector<8x128xf32>
      %598 = arith.index_cast %c7_i32 : i32 to index
      %c0_226 = arith.constant 0 : index
      %c0_227 = arith.constant 0 : index
      %599 = vector.load %arg19[%598, %c0_226, %c0_227] : memref<8x8x384xf32, #tpu.memory_space<vmem>>, vector<1x8x384xf32>
      %600 = vector.shape_cast %599 : vector<1x8x384xf32> to vector<8x384xf32>
      %601 = arith.truncf %597 : vector<8x128xf32> to vector<8x128xbf16>
      %cst_228 = arith.constant dense<0.000000e+00> : vector<8x384xf32>
      %602 = tpu.matmul %601, %38, %cst_228 {dimension_numbers = #tpu.dot_dimension_numbers<[1], [0], [0], [1], [0, 0, 1, 1], [], []>} : vector<8x128xbf16>, vector<128x384xbf16>, vector<8x384xf32> -> vector<8x384xf32>
      %603 = arith.addf %602, %41 : vector<8x384xf32>
      %604 = vector.extract_strided_slice %600 {offsets = [0, 0], sizes = [8, 128], strides = [1, 1]} : vector<8x384xf32> to vector<8x128xf32>
      %605 = vector.extract_strided_slice %603 {offsets = [0, 0], sizes = [8, 128], strides = [1, 1]} : vector<8x384xf32> to vector<8x128xf32>
      %606 = arith.addf %604, %605 : vector<8x128xf32>
      %607 = arith.negf %606 : vector<8x128xf32>
      %608 = math.exp %607 : vector<8x128xf32>
      %cst_229 = arith.constant 1.000000e+00 : f32
      %609 = vector.broadcast %cst_229 : f32 to vector<8x128xf32>
      %610 = arith.addf %609, %608 : vector<8x128xf32>
      %611 = arith.divf %609, %610 : vector<8x128xf32>
      %612 = vector.extract_strided_slice %600 {offsets = [0, 128], sizes = [8, 128], strides = [1, 1]} : vector<8x384xf32> to vector<8x128xf32>
      %613 = vector.extract_strided_slice %603 {offsets = [0, 128], sizes = [8, 128], strides = [1, 1]} : vector<8x384xf32> to vector<8x128xf32>
      %614 = arith.addf %612, %613 : vector<8x128xf32>
      %615 = arith.negf %614 : vector<8x128xf32>
      %616 = math.exp %615 : vector<8x128xf32>
      %cst_230 = arith.constant 1.000000e+00 : f32
      %617 = vector.broadcast %cst_230 : f32 to vector<8x128xf32>
      %618 = arith.addf %617, %616 : vector<8x128xf32>
      %619 = arith.divf %617, %618 : vector<8x128xf32>
      %620 = vector.extract_strided_slice %600 {offsets = [0, 256], sizes = [8, 128], strides = [1, 1]} : vector<8x384xf32> to vector<8x128xf32>
      %621 = vector.extract_strided_slice %603 {offsets = [0, 256], sizes = [8, 128], strides = [1, 1]} : vector<8x384xf32> to vector<8x128xf32>
      %622 = arith.mulf %611, %621 : vector<8x128xf32>
      %623 = arith.addf %620, %622 : vector<8x128xf32>
      %624 = math.tanh %623 : vector<8x128xf32>
      %cst_231 = arith.constant 1.000000e+00 : f32
      %625 = vector.broadcast %cst_231 : f32 to vector<8x128xf32>
      %626 = arith.subf %625, %619 : vector<8x128xf32>
      %627 = arith.mulf %626, %624 : vector<8x128xf32>
      %628 = arith.mulf %619, %597 : vector<8x128xf32>
      %629 = arith.addf %627, %628 : vector<8x128xf32>
      %c0_232 = arith.constant 0 : index
      %c0_233 = arith.constant 0 : index
      %c0_234 = arith.constant 0 : index
      %630 = vector.load %arg17[%c0_232, %c0_233, %c0_234] : memref<2x8x128xf32, #tpu.memory_space<vmem>>, vector<1x8x128xf32>
      %631 = vector.shape_cast %630 : vector<1x8x128xf32> to vector<8x128xf32>
      %632 = vector.shape_cast %629 : vector<8x128xf32> to vector<1x8x128xf32>
      tpu.vector_store %arg17[%c0_232, %c0_233, %c0_234], %632 {strides = array<i32>} : memref<2x8x128xf32, #tpu.memory_space<vmem>>, vector<1x8x128xf32>,
      %c1_235 = arith.constant 1 : index
      %c0_236 = arith.constant 0 : index
      %c0_237 = arith.constant 0 : index
      %633 = vector.load %arg17[%c1_235, %c0_236, %c0_237] : memref<2x8x128xf32, #tpu.memory_space<vmem>>, vector<1x8x128xf32>
      %634 = vector.shape_cast %633 : vector<1x8x128xf32> to vector<8x128xf32>
      %635 = arith.truncf %629 : vector<8x128xf32> to vector<8x128xbf16>
      %cst_238 = arith.constant dense<0.000000e+00> : vector<8x384xf32>
      %636 = tpu.matmul %635, %42, %cst_238 {dimension_numbers = #tpu.dot_dimension_numbers<[1], [0], [0], [1], [0, 0, 1, 1], [], []>} : vector<8x128xbf16>, vector<128x384xbf16>, vector<8x384xf32> -> vector<8x384xf32>
      %637 = arith.addf %636, %46 : vector<8x384xf32>
      %638 = arith.truncf %634 : vector<8x128xf32> to vector<8x128xbf16>
      %cst_239 = arith.constant dense<0.000000e+00> : vector<8x384xf32>
      %639 = tpu.matmul %638, %43, %cst_239 {dimension_numbers = #tpu.dot_dimension_numbers<[1], [0], [0], [1], [0, 0, 1, 1], [], []>} : vector<8x128xbf16>, vector<128x384xbf16>, vector<8x384xf32> -> vector<8x384xf32>
      %640 = arith.addf %639, %49 : vector<8x384xf32>
      %641 = vector.extract_strided_slice %637 {offsets = [0, 0], sizes = [8, 128], strides = [1, 1]} : vector<8x384xf32> to vector<8x128xf32>
      %642 = vector.extract_strided_slice %640 {offsets = [0, 0], sizes = [8, 128], strides = [1, 1]} : vector<8x384xf32> to vector<8x128xf32>
      %643 = arith.addf %641, %642 : vector<8x128xf32>
      %644 = arith.negf %643 : vector<8x128xf32>
      %645 = math.exp %644 : vector<8x128xf32>
      %cst_240 = arith.constant 1.000000e+00 : f32
      %646 = vector.broadcast %cst_240 : f32 to vector<8x128xf32>
      %647 = arith.addf %646, %645 : vector<8x128xf32>
      %648 = arith.divf %646, %647 : vector<8x128xf32>
      %649 = vector.extract_strided_slice %637 {offsets = [0, 128], sizes = [8, 128], strides = [1, 1]} : vector<8x384xf32> to vector<8x128xf32>
      %650 = vector.extract_strided_slice %640 {offsets = [0, 128], sizes = [8, 128], strides = [1, 1]} : vector<8x384xf32> to vector<8x128xf32>
      %651 = arith.addf %649, %650 : vector<8x128xf32>
      %652 = arith.negf %651 : vector<8x128xf32>
      %653 = math.exp %652 : vector<8x128xf32>
      %cst_241 = arith.constant 1.000000e+00 : f32
      %654 = vector.broadcast %cst_241 : f32 to vector<8x128xf32>
      %655 = arith.addf %654, %653 : vector<8x128xf32>
      %656 = arith.divf %654, %655 : vector<8x128xf32>
      %657 = vector.extract_strided_slice %637 {offsets = [0, 256], sizes = [8, 128], strides = [1, 1]} : vector<8x384xf32> to vector<8x128xf32>
      %658 = vector.extract_strided_slice %640 {offsets = [0, 256], sizes = [8, 128], strides = [1, 1]} : vector<8x384xf32> to vector<8x128xf32>
      %659 = arith.mulf %648, %658 : vector<8x128xf32>
      %660 = arith.addf %657, %659 : vector<8x128xf32>
      %661 = math.tanh %660 : vector<8x128xf32>
      %cst_242 = arith.constant 1.000000e+00 : f32
      %662 = vector.broadcast %cst_242 : f32 to vector<8x128xf32>
      %663 = arith.subf %662, %656 : vector<8x128xf32>
      %664 = arith.mulf %663, %661 : vector<8x128xf32>
      %665 = arith.mulf %656, %634 : vector<8x128xf32>
      %666 = arith.addf %664, %665 : vector<8x128xf32>
      %c1_243 = arith.constant 1 : index
      %c0_244 = arith.constant 0 : index
      %c0_245 = arith.constant 0 : index
      %667 = vector.load %arg17[%c1_243, %c0_244, %c0_245] : memref<2x8x128xf32, #tpu.memory_space<vmem>>, vector<1x8x128xf32>
      %668 = vector.shape_cast %667 : vector<1x8x128xf32> to vector<8x128xf32>
      %669 = vector.shape_cast %666 : vector<8x128xf32> to vector<1x8x128xf32>
      tpu.vector_store %arg17[%c1_243, %c0_244, %c0_245], %669 {strides = array<i32>} : memref<2x8x128xf32, #tpu.memory_space<vmem>>, vector<1x8x128xf32>,
      %670 = arith.index_cast %c7_i32 : i32 to index
      %c0_246 = arith.constant 0 : index
      %c0_247 = arith.constant 0 : index
      %671 = vector.load %arg18[%670, %c0_246, %c0_247] : memref<8x8x128xf32, #tpu.memory_space<vmem>>, vector<1x8x128xf32>
      %672 = vector.shape_cast %671 : vector<1x8x128xf32> to vector<8x128xf32>
      %673 = vector.shape_cast %666 : vector<8x128xf32> to vector<1x8x128xf32>
      tpu.vector_store %arg18[%670, %c0_246, %c0_247], %673 {strides = array<i32>} : memref<8x8x128xf32, #tpu.memory_space<vmem>>, vector<1x8x128xf32>,
      %c8_i32 = arith.constant 8 : i32
    } else {
    }
    %c0 = arith.constant 0 : index
    %c0_4 = arith.constant 0 : index
    %c0_5 = arith.constant 0 : index
    %8 = vector.load %arg18[%c0, %c0_4, %c0_5] : memref<8x8x128xf32, #tpu.memory_space<vmem>>, vector<8x8x128xf32>
    %9 = arith.truncf %8 : vector<8x8x128xf32> to vector<8x8x128xbf16>
    %10 = vector.shape_cast %9 : vector<8x8x128xbf16> to vector<64x128xbf16>
    %c0_6 = arith.constant 0 : index
    %c0_7 = arith.constant 0 : index
    %11 = vector.load %arg13[%c0_6, %c0_7] : memref<128x128xbf16, #tpu.memory_space<vmem>>, vector<128x128xbf16>
    %cst = arith.constant dense<0.000000e+00> : vector<64x128xf32>
    %12 = tpu.matmul %10, %11, %cst {dimension_numbers = #tpu.dot_dimension_numbers<[1], [0], [0], [1], [0, 0, 1, 1], [], []>} : vector<64x128xbf16>, vector<128x128xbf16>, vector<64x128xf32> -> vector<64x128xf32>
    %13 = vector.shape_cast %12 : vector<64x128xf32> to vector<8x8x128xf32>
    %c0_8 = arith.constant 0 : index
    %c0_9 = arith.constant 0 : index
    %14 = vector.load %arg14[%c0_8, %c0_9] : memref<1x128xf32, #tpu.memory_space<vmem>>, vector<1x128xf32>
    %15 = vector.shape_cast %14 : vector<1x128xf32> to vector<1x1x128xf32>
    %16 = vector.broadcast %15 : vector<1x1x128xf32> to vector<8x8x128xf32>
    %17 = arith.addf %13, %16 : vector<8x8x128xf32>
    %c0_10 = arith.constant 0 : index
    %c0_11 = arith.constant 0 : index
    %c0_12 = arith.constant 0 : index
    %18 = vector.load %arg15[%c0_10, %c0_11, %c0_12] : memref<8x8x128xf32, #tpu.memory_space<vmem>>, vector<8x8x128xf32>
    tpu.vector_store %arg15[%c0_10, %c0_11, %c0_12], %17 {strides = array<i32>} : memref<8x8x128xf32, #tpu.memory_space<vmem>>, vector<8x8x128xf32>,
    %c0_13 = arith.constant 0 : index
    %c0_14 = arith.constant 0 : index
    %c0_15 = arith.constant 0 : index
    %19 = vector.load %arg17[%c0_13, %c0_14, %c0_15] : memref<2x8x128xf32, #tpu.memory_space<vmem>>, vector<2x8x128xf32>
    %c0_16 = arith.constant 0 : index
    %c0_17 = arith.constant 0 : index
    %c0_18 = arith.constant 0 : index
    %20 = vector.load %arg16[%c0_16, %c0_17, %c0_18] : memref<2x8x128xf32, #tpu.memory_space<vmem>>, vector<2x8x128xf32>
    tpu.vector_store %arg16[%c0_16, %c0_17, %c0_18], %19 {strides = array<i32>} : memref<2x8x128xf32, #tpu.memory_space<vmem>>, vector<2x8x128xf32>,
    return
  }
  func.func @transform_0(%arg0: i32, %arg1: i32) -> (i32, i32, i32) {
    %c0_i32 = arith.constant 0 : i32
    %c0_i32_0 = arith.constant 0 : i32
    %c0_i32_1 = arith.constant 0 : i32
    return %arg0, %c0_i32, %c0_i32_0 : i32, i32, i32
  }
  func.func @transform_1(%arg0: i32, %arg1: i32) -> (i32, i32, i32) {
    %c0_i32 = arith.constant 0 : i32
    %c0_i32_0 = arith.constant 0 : i32
    %c0_i32_1 = arith.constant 0 : i32
    %c0_i32_2 = arith.constant 0 : i32
    return %c0_i32, %c0_i32_0, %c0_i32_1 : i32, i32, i32
  }
  func.func @transform_2(%arg0: i32, %arg1: i32) -> (i32, i32) {
    %c0_i32 = arith.constant 0 : i32
    %c0_i32_0 = arith.constant 0 : i32
    %c0_i32_1 = arith.constant 0 : i32
    return %c0_i32, %c0_i32_0 : i32, i32
  }
  func.func @transform_3(%arg0: i32, %arg1: i32) -> (i32, i32) {
    %c0_i32 = arith.constant 0 : i32
    %c0_i32_0 = arith.constant 0 : i32
    %c0_i32_1 = arith.constant 0 : i32
    return %c0_i32, %c0_i32_0 : i32, i32
  }
  func.func @transform_4(%arg0: i32, %arg1: i32) -> (i32, i32) {
    %c0_i32 = arith.constant 0 : i32
    %c0_i32_0 = arith.constant 0 : i32
    %c0_i32_1 = arith.constant 0 : i32
    return %c0_i32, %c0_i32_0 : i32, i32
  }
  func.func @transform_5(%arg0: i32, %arg1: i32) -> (i32, i32) {
    %c0_i32 = arith.constant 0 : i32
    %c0_i32_0 = arith.constant 0 : i32
    %c0_i32_1 = arith.constant 0 : i32
    return %c0_i32, %c0_i32_0 : i32, i32
  }
  func.func @transform_6(%arg0: i32, %arg1: i32) -> (i32, i32) {
    %c0_i32 = arith.constant 0 : i32
    %c0_i32_0 = arith.constant 0 : i32
    %c0_i32_1 = arith.constant 0 : i32
    return %c0_i32, %c0_i32_0 : i32, i32
  }
  func.func @transform_7(%arg0: i32, %arg1: i32) -> (i32, i32) {
    %c0_i32 = arith.constant 0 : i32
    %c0_i32_0 = arith.constant 0 : i32
    %c0_i32_1 = arith.constant 0 : i32
    return %c0_i32, %c0_i32_0 : i32, i32
  }
  func.func @transform_8(%arg0: i32, %arg1: i32) -> (i32, i32) {
    %c0_i32 = arith.constant 0 : i32
    %c0_i32_0 = arith.constant 0 : i32
    %c0_i32_1 = arith.constant 0 : i32
    return %c0_i32, %c0_i32_0 : i32, i32
  }
  func.func @transform_9(%arg0: i32, %arg1: i32) -> (i32, i32) {
    %c0_i32 = arith.constant 0 : i32
    %c0_i32_0 = arith.constant 0 : i32
    %c0_i32_1 = arith.constant 0 : i32
    return %c0_i32, %c0_i32_0 : i32, i32
  }
  func.func @transform_10(%arg0: i32, %arg1: i32) -> (i32, i32) {
    %c0_i32 = arith.constant 0 : i32
    %c0_i32_0 = arith.constant 0 : i32
    %c0_i32_1 = arith.constant 0 : i32
    return %c0_i32, %c0_i32_0 : i32, i32
  }
  func.func @transform_11(%arg0: i32, %arg1: i32) -> (i32, i32) {
    %c0_i32 = arith.constant 0 : i32
    %c0_i32_0 = arith.constant 0 : i32
    return %c0_i32, %arg1 : i32, i32
  }
  func.func @transform_12(%arg0: i32, %arg1: i32) -> (i32, i32) {
    %c0_i32 = arith.constant 0 : i32
    %c0_i32_0 = arith.constant 0 : i32
    return %c0_i32, %arg1 : i32, i32
  }
  func.func @transform_13(%arg0: i32, %arg1: i32) -> (i32, i32, i32) {
    %c0_i32 = arith.constant 0 : i32
    %c0_i32_0 = arith.constant 0 : i32
    return %arg0, %c0_i32, %arg1 : i32, i32, i32
  }
  func.func @transform_14(%arg0: i32, %arg1: i32) -> (i32, i32, i32) {
    %c0_i32 = arith.constant 0 : i32
    %c0_i32_0 = arith.constant 0 : i32
    %c0_i32_1 = arith.constant 0 : i32
    %c0_i32_2 = arith.constant 0 : i32
    return %c0_i32, %c0_i32_0, %c0_i32_1 : i32, i32, i32
  }
}

</mosaic_0001>

<llo_original>
// kernel: seq2seq_decoder_forward.1
$region0: #{seq2seq_decoder_forward.1}
  #allocation0 [shape = 'u32[]', space=smem, size = 0x4, offset = 0x4, fixed_abs, tag = 'smem constant byte address 0x4 - core index']
  #allocation1 [shape = 'u32[144,128]{1,0:T(1,128)}', space=vmem, size = 0x12000, scoped, tag = 'internal scratch']
  #allocation2 [shape = 'f32[2,8,128]{2,1,0:T(8,128)}', space=vmem, size = 0x2000, scoped, tag = 'scratch operand']
  #allocation3 [shape = 'f32[8,8,128]{2,1,0:T(8,128)}', space=vmem, size = 0x8000, scoped, tag = 'scratch operand']
  #allocation4 [shape = 'f32[8,8,384]{2,1,0:T(8,128)}', space=vmem, size = 0x18000, scoped, tag = 'scratch operand']
  %s0 = inlined_call_operand.vmem [shape: bf16[16,8,128], index: 0, kind: input, shape index: {}]
  %s1 = inlined_call_operand.vmem [shape: f32[2,8,128], index: 1, kind: input, shape index: {}]
  %s2 = inlined_call_operand.vmem [shape: bf16[128,384], index: 2, kind: input, shape index: {}]
  %s3 = inlined_call_operand.vmem [shape: bf16[128,384], index: 3, kind: input, shape index: {}]
  %s4 = inlined_call_operand.vmem [shape: bf16[128,384], index: 4, kind: input, shape index: {}]
  %s5 = inlined_call_operand.vmem [shape: f32[1,384], index: 5, kind: input, shape index: {}]
  %s6 = inlined_call_operand.vmem [shape: f32[1,384], index: 6, kind: input, shape index: {}]
  %s7 = inlined_call_operand.vmem [shape: bf16[128,384], index: 7, kind: input, shape index: {}]
  %s8 = inlined_call_operand.vmem [shape: bf16[128,384], index: 8, kind: input, shape index: {}]
  %s9 = inlined_call_operand.vmem [shape: f32[1,384], index: 9, kind: input, shape index: {}]
  %s10 = inlined_call_operand.vmem [shape: f32[1,384], index: 10, kind: input, shape index: {}]
  %s11 = inlined_call_operand.vmem [shape: bf16[128,256], index: 11, kind: input, shape index: {}]
  %s12 = inlined_call_operand.vmem [shape: f32[1,256], index: 12, kind: input, shape index: {}]
  %s13 = inlined_call_operand.vmem [shape: f32[16,8,256], index: 13, kind: output, shape index: {0}]
  %s14 = inlined_call_operand.vmem [shape: f32[2,8,128], index: 14, kind: output, shape index: {1}]
  %15 = xla_tuple %s13, %s14
  %s16 = sld [smem:[#allocation0]]
  $region176: #{seq2seq_decoder_forward.1} parent=0
    _
  %s18 = ssub.s32 1, %s16
  %s19 = scalar_select 0, %s18, %s16
  $region1: #{seq2seq_decoder_forward.1} parent=0
    #allocation5 [shape = 'u8[65536]{0}', space=vmem, size = 0x10000, scoped, tag = 'input window, operand 11']
    #allocation6 [shape = 'u8[65536]{0}', space=vmem, size = 0x10000, scoped, tag = 'output window, operand 0']
    loop: start=0, step=1, limit=6
    $region2: #{seq2seq_decoder_forward.1} parent=1 // loop_pre_header
      _
    $region3: #{seq2seq_decoder_forward.1} parent=1 // loop_header
      %s21 = sphi 0, %s25
      %p22 = scmp.ge.s32.totalorder %s21, 6
      %s28 = sphi 0, %s40
      %s29 = sphi 0, %s36
      %s30 = sphi 0, %s28
      %s31 = sphi 0, %s29
      %s32 = sphi 0, %s30
      %s33 = sphi 0, %s31
      %s43 = sphi 0, %s45
      %s46 = sphi 0, %s43
      %s47 = sphi 0, %s46
      %s63 = sphi 0, %s47
      %s67 = sphi 0, %s67
      %s69 = sphi 0, %s67
      %s70 = sphi 0, %s69
      %s84 = sphi 0, %s70
      %s88 = sphi 0, %s88
      %s90 = sphi 0, %s88
      %s91 = sphi 0, %s90
      %s105 = sphi 0, %s91
      %s109 = sphi 0, %s109
      %s111 = sphi 0, %s109
      %s112 = sphi 0, %s111
      %s126 = sphi 0, %s112
      %s130 = sphi 0, %s130
      %s132 = sphi 0, %s130
      %s133 = sphi 0, %s132
      %s147 = sphi 0, %s133
      %s151 = sphi 0, %s151
      %s153 = sphi 0, %s151
      %s154 = sphi 0, %s153
      %s168 = sphi 0, %s154
      %s172 = sphi 0, %s172
      %s174 = sphi 0, %s172
      %s175 = sphi 0, %s174
      %s189 = sphi 0, %s175
      %s193 = sphi 0, %s193
      %s195 = sphi 0, %s193
      %s196 = sphi 0, %s195
      %s210 = sphi 0, %s196
      %s214 = sphi 0, %s214
      %s216 = sphi 0, %s214
      %s217 = sphi 0, %s216
      %s231 = sphi 0, %s217
      %s235 = sphi 0, %s235
      %s237 = sphi 0, %s235
      %s238 = sphi 0, %s237
      %s252 = sphi 0, %s238
      %s256 = sphi 0, %s256
      %s258 = sphi 0, %s256
      %s259 = sphi 0, %s258
      %s273 = sphi 0, %s259
      %s279 = sphi 0, %s281
      %s282 = sphi 0, %s279
      %s283 = sphi 0, %s282
      %s299 = sphi 0, %s283
      %s305 = sphi 0, %s307
      %s308 = sphi 0, %s305
      %s309 = sphi 0, %s308
      %s325 = sphi 0, %s309
      %s333 = sphi 0, %s335
      %s336 = sphi 0, %s333
      %s337 = sphi 0, %s336
      %s353 = sphi 0, %s337
      %s357 = sphi 0, %s357
      %s359 = sphi 0, %s357
      %s360 = sphi 0, %s359
      %s374 = sphi 0, %s360
    $region4: #{seq2seq_decoder_forward.1} parent=1 // loop_header_branch
      %24 = sbr.rel (%p22) target = $region8
    $region5: #{seq2seq_decoder_forward.1} parent=1 // loop_body
      %s26 = ssub.s32 %s21, 1
      %s27 = ssub.s32 %s21, 2
      %s34 = sadd.s32 1, %s29
      %p35 = scmp.ge.s32.totalorder %s34, 2
      %s36 = scalar_select %p35, 0, %s34
      %s37 = sadd.s32 1, %s28
      %s38 = scalar_select %p35, %s37, %s28
      %p39 = scmp.ge.s32.totalorder %s38, 2
      %s40 = scalar_select %p39, 0, %s38
      %s41 = ssub.s32 %s28, %s40
      %p42 = scmp.eq.s32.totalorder %s41, 0
      %s44 = sadd.s32 %s43, 1
      %s45 = scalar_select %p42, %s43, %s44
      %p48 = pneg %p42
      %p49 = scmp.eq.s32.totalorder %s21, 3
      %p50 = por %p48, %p49
      %p51 = scmp.ne.s32.totalorder %s43, %s46
      %p52 = scmp.eq.s32.totalorder %s21, 0
      %p53 = por %p51, %p52
      %p54 = scmp.ne.s32.totalorder %s43, %s46
      %p55 = scmp.eq.s32.totalorder %s26, 3
      %p56 = por %p54, %p55
      %p57 = scmp.ne.s32.totalorder %s46, %s47
      %p58 = scmp.eq.s32.totalorder %s26, 0
      %p59 = por %p57, %p58
      %p60 = scmp.ne.s32.totalorder %s46, %s47
      %p61 = scmp.eq.s32.totalorder %s27, 3
      %p62 = por %p60, %p61
      %p64 = scmp.ne.s32.totalorder %s47, %s63
      %p65 = scmp.eq.s32.totalorder %s27, 0
      %p66 = por %p64, %p65
      %s68 = sadd.s32 %s67, 1
      %p71 = scmp.eq.s32.totalorder %s21, 3
      %p72 = scmp.ne.s32.totalorder %s67, %s69
      %p73 = scmp.eq.s32.totalorder %s21, 0
      %p74 = por %p72, %p73
      %p75 = scmp.ne.s32.totalorder %s67, %s69
      %p76 = scmp.eq.s32.totalorder %s26, 3
      %p77 = por %p75, %p76
      %p78 = scmp.ne.s32.totalorder %s69, %s70
      %p79 = scmp.eq.s32.totalorder %s26, 0
      %p80 = por %p78, %p79
      %p81 = scmp.ne.s32.totalorder %s69, %s70
      %p82 = scmp.eq.s32.totalorder %s27, 3
      %p83 = por %p81, %p82
      %p85 = scmp.ne.s32.totalorder %s70, %s84
      %p86 = scmp.eq.s32.totalorder %s27, 0
      %p87 = por %p85, %p86
      %s89 = sadd.s32 %s88, 1
      %p92 = scmp.eq.s32.totalorder %s21, 3
      %p93 = scmp.ne.s32.totalorder %s88, %s90
      %p94 = scmp.eq.s32.totalorder %s21, 0
      %p95 = por %p93, %p94
      %p96 = scmp.ne.s32.totalorder %s88, %s90
      %p97 = scmp.eq.s32.totalorder %s26, 3
      %p98 = por %p96, %p97
      %p99 = scmp.ne.s32.totalorder %s90, %s91
      %p100 = scmp.eq.s32.totalorder %s26, 0
      %p101 = por %p99, %p100
      %p102 = scmp.ne.s32.totalorder %s90, %s91
      %p103 = scmp.eq.s32.totalorder %s27, 3
      %p104 = por %p102, %p103
      %p106 = scmp.ne.s32.totalorder %s91, %s105
      %p107 = scmp.eq.s32.totalorder %s27, 0
      %p108 = por %p106, %p107
      %s110 = sadd.s32 %s109, 1
      %p113 = scmp.eq.s32.totalorder %s21, 3
      %p114 = scmp.ne.s32.totalorder %s109, %s111
      %p115 = scmp.eq.s32.totalorder %s21, 0
      %p116 = por %p114, %p115
      %p117 = scmp.ne.s32.totalorder %s109, %s111
      %p118 = scmp.eq.s32.totalorder %s26, 3
      %p119 = por %p117, %p118
      %p120 = scmp.ne.s32.totalorder %s111, %s112
      %p121 = scmp.eq.s32.totalorder %s26, 0
      %p122 = por %p120, %p121
      %p123 = scmp.ne.s32.totalorder %s111, %s112
      %p124 = scmp.eq.s32.totalorder %s27, 3
      %p125 = por %p123, %p124
      %p127 = scmp.ne.s32.totalorder %s112, %s126
      %p128 = scmp.eq.s32.totalorder %s27, 0
      %p129 = por %p127, %p128
      %s131 = sadd.s32 %s130, 1
      %p134 = scmp.eq.s32.totalorder %s21, 3
      %p135 = scmp.ne.s32.totalorder %s130, %s132
      %p136 = scmp.eq.s32.totalorder %s21, 0
      %p137 = por %p135, %p136
      %p138 = scmp.ne.s32.totalorder %s130, %s132
      %p139 = scmp.eq.s32.totalorder %s26, 3
      %p140 = por %p138, %p139
      %p141 = scmp.ne.s32.totalorder %s132, %s133
      %p142 = scmp.eq.s32.totalorder %s26, 0
      %p143 = por %p141, %p142
      %p144 = scmp.ne.s32.totalorder %s132, %s133
      %p145 = scmp.eq.s32.totalorder %s27, 3
      %p146 = por %p144, %p145
      %p148 = scmp.ne.s32.totalorder %s133, %s147
      %p149 = scmp.eq.s32.totalorder %s27, 0
      %p150 = por %p148, %p149
      %s152 = sadd.s32 %s151, 1
      %p155 = scmp.eq.s32.totalorder %s21, 3
      %p156 = scmp.ne.s32.totalorder %s151, %s153
      %p157 = scmp.eq.s32.totalorder %s21, 0
      %p158 = por %p156, %p157
      %p159 = scmp.ne.s32.totalorder %s151, %s153
      %p160 = scmp.eq.s32.totalorder %s26, 3
      %p161 = por %p159, %p160
      %p162 = scmp.ne.s32.totalorder %s153, %s154
      %p163 = scmp.eq.s32.totalorder %s26, 0
      %p164 = por %p162, %p163
      %p165 = scmp.ne.s32.totalorder %s153, %s154
      %p166 = scmp.eq.s32.totalorder %s27, 3
      %p167 = por %p165, %p166
      %p169 = scmp.ne.s32.totalorder %s154, %s168
      %p170 = scmp.eq.s32.totalorder %s27, 0
      %p171 = por %p169, %p170
      %s173 = sadd.s32 %s172, 1
      %p176 = scmp.eq.s32.totalorder %s21, 3
      %p177 = scmp.ne.s32.totalorder %s172, %s174
      %p178 = scmp.eq.s32.totalorder %s21, 0
      %p179 = por %p177, %p178
      %p180 = scmp.ne.s32.totalorder %s172, %s174
      %p181 = scmp.eq.s32.totalorder %s26, 3
      %p182 = por %p180, %p181
      %p183 = scmp.ne.s32.totalorder %s174, %s175
      %p184 = scmp.eq.s32.totalorder %s26, 0
      %p185 = por %p183, %p184
      %p186 = scmp.ne.s32.totalorder %s174, %s175
      %p187 = scmp.eq.s32.totalorder %s27, 3
      %p188 = por %p186, %p187
      %p190 = scmp.ne.s32.totalorder %s175, %s189
      %p191 = scmp.eq.s32.totalorder %s27, 0
      %p192 = por %p190, %p191
      %s194 = sadd.s32 %s193, 1
      %p197 = scmp.eq.s32.totalorder %s21, 3
      %p198 = scmp.ne.s32.totalorder %s193, %s195
      %p199 = scmp.eq.s32.totalorder %s21, 0
      %p200 = por %p198, %p199
      %p201 = scmp.ne.s32.totalorder %s193, %s195
      %p202 = scmp.eq.s32.totalorder %s26, 3
      %p203 = por %p201, %p202
      %p204 = scmp.ne.s32.totalorder %s195, %s196
      %p205 = scmp.eq.s32.totalorder %s26, 0
      %p206 = por %p204, %p205
      %p207 = scmp.ne.s32.totalorder %s195, %s196
      %p208 = scmp.eq.s32.totalorder %s27, 3
      %p209 = por %p207, %p208
      %p211 = scmp.ne.s32.totalorder %s196, %s210
      %p212 = scmp.eq.s32.totalorder %s27, 0
      %p213 = por %p211, %p212
      %s215 = sadd.s32 %s214, 1
      %p218 = scmp.eq.s32.totalorder %s21, 3
      %p219 = scmp.ne.s32.totalorder %s214, %s216
      %p220 = scmp.eq.s32.totalorder %s21, 0
      %p221 = por %p219, %p220
      %p222 = scmp.ne.s32.totalorder %s214, %s216
      %p223 = scmp.eq.s32.totalorder %s26, 3
      %p224 = por %p222, %p223
      %p225 = scmp.ne.s32.totalorder %s216, %s217
      %p226 = scmp.eq.s32.totalorder %s26, 0
      %p227 = por %p225, %p226
      %p228 = scmp.ne.s32.totalorder %s216, %s217
      %p229 = scmp.eq.s32.totalorder %s27, 3
      %p230 = por %p228, %p229
      %p232 = scmp.ne.s32.totalorder %s217, %s231
      %p233 = scmp.eq.s32.totalorder %s27, 0
      %p234 = por %p232, %p233
      %s236 = sadd.s32 %s235, 1
      %p239 = scmp.eq.s32.totalorder %s21, 3
      %p240 = scmp.ne.s32.totalorder %s235, %s237
      %p241 = scmp.eq.s32.totalorder %s21, 0
      %p242 = por %p240, %p241
      %p243 = scmp.ne.s32.totalorder %s235, %s237
      %p244 = scmp.eq.s32.totalorder %s26, 3
      %p245 = por %p243, %p244
      %p246 = scmp.ne.s32.totalorder %s237, %s238
      %p247 = scmp.eq.s32.totalorder %s26, 0
      %p248 = por %p246, %p247
      %p249 = scmp.ne.s32.totalorder %s237, %s238
      %p250 = scmp.eq.s32.totalorder %s27, 3
      %p251 = por %p249, %p250
      %p253 = scmp.ne.s32.totalorder %s238, %s252
      %p254 = scmp.eq.s32.totalorder %s27, 0
      %p255 = por %p253, %p254
      %s257 = sadd.s32 %s256, 1
      %p260 = scmp.eq.s32.totalorder %s21, 3
      %p261 = scmp.ne.s32.totalorder %s256, %s258
      %p262 = scmp.eq.s32.totalorder %s21, 0
      %p263 = por %p261, %p262
      %p264 = scmp.ne.s32.totalorder %s256, %s258
      %p265 = scmp.eq.s32.totalorder %s26, 3
      %p266 = por %p264, %p265
      %p267 = scmp.ne.s32.totalorder %s258, %s259
      %p268 = scmp.eq.s32.totalorder %s26, 0
      %p269 = por %p267, %p268
      %p270 = scmp.ne.s32.totalorder %s258, %s259
      %p271 = scmp.eq.s32.totalorder %s27, 3
      %p272 = por %p270, %p271
      %p274 = scmp.ne.s32.totalorder %s259, %s273
      %p275 = scmp.eq.s32.totalorder %s27, 0
      %p276 = por %p274, %p275
      %s277 = ssub.s32 %s29, %s36
      %p278 = scmp.eq.s32.totalorder %s277, 0
      %s280 = sadd.s32 %s279, 1
      %s281 = scalar_select %p278, %s279, %s280
      %p284 = pneg %p278
      %p285 = scmp.eq.s32.totalorder %s21, 3
      %p286 = por %p284, %p285
      %p287 = scmp.ne.s32.totalorder %s279, %s282
      %p288 = scmp.eq.s32.totalorder %s21, 0
      %p289 = por %p287, %p288
      %p290 = scmp.ne.s32.totalorder %s279, %s282
      %p291 = scmp.eq.s32.totalorder %s26, 3
      %p292 = por %p290, %p291
      %p293 = scmp.ne.s32.totalorder %s282, %s283
      %p294 = scmp.eq.s32.totalorder %s26, 0
      %p295 = por %p293, %p294
      %p296 = scmp.ne.s32.totalorder %s282, %s283
      %p297 = scmp.eq.s32.totalorder %s27, 3
      %p298 = por %p296, %p297
      %p300 = scmp.ne.s32.totalorder %s283, %s299
      %p301 = scmp.eq.s32.totalorder %s27, 0
      %p302 = por %p300, %p301
      %s303 = ssub.s32 %s29, %s36
      %p304 = scmp.eq.s32.totalorder %s303, 0
      %s306 = sadd.s32 %s305, 1
      %s307 = scalar_select %p304, %s305, %s306
      %p310 = pneg %p304
      %p311 = scmp.eq.s32.totalorder %s21, 3
      %p312 = por %p310, %p311
      %p313 = scmp.ne.s32.totalorder %s305, %s308
      %p314 = scmp.eq.s32.totalorder %s21, 0
      %p315 = por %p313, %p314
      %p316 = scmp.ne.s32.totalorder %s305, %s308
      %p317 = scmp.eq.s32.totalorder %s26, 3
      %p318 = por %p316, %p317
      %p319 = scmp.ne.s32.totalorder %s308, %s309
      %p320 = scmp.eq.s32.totalorder %s26, 0
      %p321 = por %p319, %p320
      %p322 = scmp.ne.s32.totalorder %s308, %s309
      %p323 = scmp.eq.s32.totalorder %s27, 3
      %p324 = por %p322, %p323
      %p326 = scmp.ne.s32.totalorder %s309, %s325
      %p327 = scmp.eq.s32.totalorder %s27, 0
      %p328 = por %p326, %p327
      %s329 = ssub.s32 %s28, %s40
      %s330 = ssub.s32 %s29, %s36
      %s331 = sor.u32 %s329, %s330
      %p332 = scmp.eq.s32.totalorder %s331, 0
      %s334 = sadd.s32 %s333, 1
      %s335 = scalar_select %p332, %s333, %s334
      %p338 = pneg %p332
      %p339 = scmp.eq.s32.totalorder %s21, 3
      %p340 = por %p338, %p339
      %p341 = scmp.ne.s32.totalorder %s333, %s336
      %p342 = scmp.eq.s32.totalorder %s21, 0
      %p343 = por %p341, %p342
      %p344 = scmp.ne.s32.totalorder %s333, %s336
      %p345 = scmp.eq.s32.totalorder %s26, 3
      %p346 = por %p344, %p345
      %p347 = scmp.ne.s32.totalorder %s336, %s337
      %p348 = scmp.eq.s32.totalorder %s26, 0
      %p349 = por %p347, %p348
      %p350 = scmp.ne.s32.totalorder %s336, %s337
      %p351 = scmp.eq.s32.totalorder %s27, 3
      %p352 = por %p350, %p351
      %p354 = scmp.ne.s32.totalorder %s337, %s353
      %p355 = scmp.eq.s32.totalorder %s27, 0
      %p356 = por %p354, %p355
      %s358 = sadd.s32 %s357, 1
      %p361 = scmp.eq.s32.totalorder %s21, 3
      %p362 = scmp.ne.s32.totalorder %s357, %s359
      %p363 = scmp.eq.s32.totalorder %s21, 0
      %p364 = por %p362, %p363
      %p365 = scmp.ne.s32.totalorder %s357, %s359
      %p366 = scmp.eq.s32.totalorder %s26, 3
      %p367 = por %p365, %p366
      %p368 = scmp.ne.s32.totalorder %s359, %s360
      %p369 = scmp.eq.s32.totalorder %s26, 0
      %p370 = por %p368, %p369
      %p371 = scmp.ne.s32.totalorder %s359, %s360
      %p372 = scmp.eq.s32.totalorder %s27, 3
      %p373 = por %p371, %p372
      %p375 = scmp.ne.s32.totalorder %s360, %s374
      %p376 = scmp.eq.s32.totalorder %s27, 0
      %p377 = por %p375, %p376
      %p378 = scmp.le.s32.totalorder 1, %s21
      %p379 = scmp.lt.s32.totalorder %s21, 5
      %p380 = pnand %p378, %p379
      %p381 = pneg %p380
      // Predicated region
      $region9: #{seq2seq_decoder_forward.1} parent=5 // pred_check
        _
      $region10: #{seq2seq_decoder_forward.1} parent=5 // pred_check_branch
        %383 = sbr.rel (%p380) target = $region12
      $region11: #{seq2seq_decoder_forward.1} parent=5 // pred_region
        %s384 = ssub.s32 %s21, 1
        // Predicated region
        $region13: #{seq2seq_decoder_forward.1} parent=11 // pred_check
          %p385 = pneg %p80
        $region14: #{seq2seq_decoder_forward.1} parent=11 // pred_check_branch
          %387 = sbr.rel (%p385) target = $region16
        $region15: #{seq2seq_decoder_forward.1} parent=11 // pred_region
          _
        $region16: #{seq2seq_decoder_forward.1} parent=11 // pred_fallthru
          _
        // Predicated region
        $region17: #{seq2seq_decoder_forward.1} parent=11 // pred_check
          %p388 = pneg %p101
        $region18: #{seq2seq_decoder_forward.1} parent=11 // pred_check_branch
          %390 = sbr.rel (%p388) target = $region20
        $region19: #{seq2seq_decoder_forward.1} parent=11 // pred_region
          _
        $region20: #{seq2seq_decoder_forward.1} parent=11 // pred_fallthru
          _
        // Predicated region
        $region21: #{seq2seq_decoder_forward.1} parent=11 // pred_check
          %p391 = pneg %p122
        $region22: #{seq2seq_decoder_forward.1} parent=11 // pred_check_branch
          %393 = sbr.rel (%p391) target = $region24
        $region23: #{seq2seq_decoder_forward.1} parent=11 // pred_region
          _
        $region24: #{seq2seq_decoder_forward.1} parent=11 // pred_fallthru
          _
        // Predicated region
        $region25: #{seq2seq_decoder_forward.1} parent=11 // pred_check
          %p394 = pneg %p143
        $region26: #{seq2seq_decoder_forward.1} parent=11 // pred_check_branch
          %396 = sbr.rel (%p394) target = $region28
        $region27: #{seq2seq_decoder_forward.1} parent=11 // pred_region
          _
        $region28: #{seq2seq_decoder_forward.1} parent=11 // pred_fallthru
          _
        // Predicated region
        $region29: #{seq2seq_decoder_forward.1} parent=11 // pred_check
          %p397 = pneg %p164
        $region30: #{seq2seq_decoder_forward.1} parent=11 // pred_check_branch
          %399 = sbr.rel (%p397) target = $region32
        $region31: #{seq2seq_decoder_forward.1} parent=11 // pred_region
          _
        $region32: #{seq2seq_decoder_forward.1} parent=11 // pred_fallthru
          _
        // Predicated region
        $region33: #{seq2seq_decoder_forward.1} parent=11 // pred_check
          %p400 = pneg %p185
        $region34: #{seq2seq_decoder_forward.1} parent=11 // pred_check_branch
          %402 = sbr.rel (%p400) target = $region36
        $region35: #{seq2seq_decoder_forward.1} parent=11 // pred_region
          _
        $region36: #{seq2seq_decoder_forward.1} parent=11 // pred_fallthru
          _
        // Predicated region
        $region37: #{seq2seq_decoder_forward.1} parent=11 // pred_check
          %p403 = pneg %p206
        $region38: #{seq2seq_decoder_forward.1} parent=11 // pred_check_branch
          %405 = sbr.rel (%p403) target = $region40
        $region39: #{seq2seq_decoder_forward.1} parent=11 // pred_region
          _
        $region40: #{seq2seq_decoder_forward.1} parent=11 // pred_fallthru
          _
        // Predicated region
        $region41: #{seq2seq_decoder_forward.1} parent=11 // pred_check
          %p406 = pneg %p227
        $region42: #{seq2seq_decoder_forward.1} parent=11 // pred_check_branch
          %408 = sbr.rel (%p406) target = $region44
        $region43: #{seq2seq_decoder_forward.1} parent=11 // pred_region
          _
        $region44: #{seq2seq_decoder_forward.1} parent=11 // pred_fallthru
          _
        // Predicated region
        $region45: #{seq2seq_decoder_forward.1} parent=11 // pred_check
          %p409 = pneg %p248
        $region46: #{seq2seq_decoder_forward.1} parent=11 // pred_check_branch
          %411 = sbr.rel (%p409) target = $region48
        $region47: #{seq2seq_decoder_forward.1} parent=11 // pred_region
          _
        $region48: #{seq2seq_decoder_forward.1} parent=11 // pred_fallthru
          _
        // Predicated region
        $region49: #{seq2seq_decoder_forward.1} parent=11 // pred_check
          %p412 = pneg %p269
        $region50: #{seq2seq_decoder_forward.1} parent=11 // pred_check_branch
          %414 = sbr.rel (%p412) target = $region52
        $region51: #{seq2seq_decoder_forward.1} parent=11 // pred_region
          _
        $region52: #{seq2seq_decoder_forward.1} parent=11 // pred_fallthru
          _
      $region12: #{seq2seq_decoder_forward.1} parent=5 // pred_fallthru
        _
      %p415 = scmp.lt.s32.totalorder %s21, 4
      // Predicated region
      $region53: #{seq2seq_decoder_forward.1} parent=5 // pred_check
        %p416 = pneg %p415
      $region54: #{seq2seq_decoder_forward.1} parent=5 // pred_check_branch
        %418 = sbr.rel (%p416) target = $region56
      $region55: #{seq2seq_decoder_forward.1} parent=5 // pred_region
        // Predicated region
        $region57: #{seq2seq_decoder_forward.1} parent=55 // pred_check
          %p419 = pneg %p53
        $region58: #{seq2seq_decoder_forward.1} parent=55 // pred_check_branch
          %421 = sbr.rel (%p419) target = $region60
        $region59: #{seq2seq_decoder_forward.1} parent=55 // pred_region
          %s422 = smul.u32 8, %s28
          %p423 = scmp.lt.s32.totalorder %s422, 15
          %s424 = scalar_select %p423, %s422, 15
          %s425 = smul.addr %s424, 4
          %s426 = scalar_lea.vmem %s0, %s425
          %s427 = smul.u32 8, %s28
        $region60: #{seq2seq_decoder_forward.1} parent=55 // pred_fallthru
          _
        // Predicated region
        $region61: #{seq2seq_decoder_forward.1} parent=55 // pred_check
          %p428 = pneg %p289
        $region62: #{seq2seq_decoder_forward.1} parent=55 // pred_check_branch
          %430 = sbr.rel (%p428) target = $region64
        $region63: #{seq2seq_decoder_forward.1} parent=55 // pred_region
          %s431 = sand.u32 %s279, 1
          %s432 = sand.u32 %s279, 1
          %s433 = smul.addr %s432, 64
          %s434 = scalar_lea.vmem [#allocation5], %s433
          %s435 = smul.addr %s29, 4
          %s436 = scalar_lea.vmem %s11, %s435
          // Predicated region
          $region65: #{seq2seq_decoder_forward.1} parent=63 // pred_check
            _
          $region66: #{seq2seq_decoder_forward.1} parent=63 // pred_check_branch
            %438 = sbr.rel (0) target = $region68
          $region67: #{seq2seq_decoder_forward.1} parent=63 // pred_region
            // Predicated region
            $region69: #{seq2seq_decoder_forward.1} parent=67 // pred_check
              _
            $region70: #{seq2seq_decoder_forward.1} parent=67 // pred_check_branch
              %440 = sbr.rel target = $region72
            $region71: #{seq2seq_decoder_forward.1} parent=67 // pred_region
              // Predicated region
              $region84: #{seq2seq_decoder_forward.1} parent=71 // pred_check
                _
              $region85: #{seq2seq_decoder_forward.1} parent=71 // pred_check_branch
                %485 = sbr.rel (0) target = $region87
              $region86: #{seq2seq_decoder_forward.1} parent=71 // pred_region
                loop: start=0, step=1, limit=1
                $region88: #{seq2seq_decoder_forward.1} parent=86 // loop_pre_header
                  _
                $region89: #{seq2seq_decoder_forward.1} parent=86 // loop_header
                  %s487 = sphi 0, %s491
                  %p488 = scmp.ge.s32.totalorder %s487, 1
                  %s492 = sphi %s436, %s436
                  %s493 = sphi %s434, %s434
                $region90: #{seq2seq_decoder_forward.1} parent=86 // loop_header_branch
                  %490 = sbr.rel (%p488) target = $region94
                $region91: #{seq2seq_decoder_forward.1} parent=86 // loop_body
                  _
                $region92: #{seq2seq_decoder_forward.1} parent=86 // loop_footer
                  %s491 = sadd.s32 1, %s487
                $region93: #{seq2seq_decoder_forward.1} parent=86 // loop_footer_branch
                  %486 = sbr.rel target = $region89
                $region94: #{seq2seq_decoder_forward.1} parent=86 // loop_exit
                  _
                loop: start=0, step=1, limit=1
                $region95: #{seq2seq_decoder_forward.1} parent=86 // loop_pre_header
                  _
                $region96: #{seq2seq_decoder_forward.1} parent=86 // loop_header
                  %s496 = sphi 0, %s500
                  %p497 = scmp.ge.s32.totalorder %s496, 1
                  %s501 = sphi %s436, %s436
                  %s502 = sphi %s434, %s434
                $region97: #{seq2seq_decoder_forward.1} parent=86 // loop_header_branch
                  %499 = sbr.rel (%p497) target = $region101
                $region98: #{seq2seq_decoder_forward.1} parent=86 // loop_body
                  %v503 = vld [vmem:[%s501] sm:$0xf]
                  %504 = vst [vmem:[%s502] sm:$0xf] %v503
                  %v505 = vld [vmem:[%s501 + $0x8] sm:$0xf]
                  %506 = vst [vmem:[%s502 + $0x4] sm:$0xf] %v505
                  %v507 = vld [vmem:[%s501 + $0x10] sm:$0xf]
                  %508 = vst [vmem:[%s502 + $0x8] sm:$0xf] %v507
                  %v509 = vld [vmem:[%s501 + $0x18] sm:$0xf]
                  %510 = vst [vmem:[%s502 + $0xc] sm:$0xf] %v509
                  %v511 = vld [vmem:[%s501 + $0x20] sm:$0xf]
                  %512 = vst [vmem:[%s502 + $0x10] sm:$0xf] %v511
                  %v513 = vld [vmem:[%s501 + $0x28] sm:$0xf]
                  %514 = vst [vmem:[%s502 + $0x14] sm:$0xf] %v513
                  %v515 = vld [vmem:[%s501 + $0x30] sm:$0xf]
                  %516 = vst [vmem:[%s502 + $0x18] sm:$0xf] %v515
                  %v517 = vld [vmem:[%s501 + $0x38] sm:$0xf]
                  %518 = vst [vmem:[%s502 + $0x1c] sm:$0xf] %v517
                  %v519 = vld [vmem:[%s501 + $0x40] sm:$0xf]
                  %520 = vst [vmem:[%s502 + $0x20] sm:$0xf] %v519
                  %v521 = vld [vmem:[%s501 + $0x48] sm:$0xf]
                  %522 = vst [vmem:[%s502 + $0x24] sm:$0xf] %v521
                  %v523 = vld [vmem:[%s501 + $0x50] sm:$0xf]
                  %524 = vst [vmem:[%s502 + $0x28] sm:$0xf] %v523
                  %v525 = vld [vmem:[%s501 + $0x58] sm:$0xf]
                  %526 = vst [vmem:[%s502 + $0x2c] sm:$0xf] %v525
                  %v527 = vld [vmem:[%s501 + $0x60] sm:$0xf]
                  %528 = vst [vmem:[%s502 + $0x30] sm:$0xf] %v527
                  %v529 = vld [vmem:[%s501 + $0x68] sm:$0xf]
                  %530 = vst [vmem:[%s502 + $0x34] sm:$0xf] %v529
                  %v531 = vld [vmem:[%s501 + $0x70] sm:$0xf]
                  %532 = vst [vmem:[%s502 + $0x38] sm:$0xf] %v531
                  %v533 = vld [vmem:[%s501 + $0x78] sm:$0xf]
                  %534 = vst [vmem:[%s502 + $0x3c] sm:$0xf] %v533
                $region99: #{seq2seq_decoder_forward.1} parent=86 // loop_footer
                  %s500 = sadd.s32 1, %s496
                $region100: #{seq2seq_decoder_forward.1} parent=86 // loop_footer_branch
                  %495 = sbr.rel target = $region96
                $region101: #{seq2seq_decoder_forward.1} parent=86 // loop_exit
                  _
              $region87: #{seq2seq_decoder_forward.1} parent=71 // pred_fallthru
                _
            $region72: #{seq2seq_decoder_forward.1} parent=67 // pred_fallthru
              _
            // Predicated region
            $region73: #{seq2seq_decoder_forward.1} parent=67 // pred_check
              _
            $region74: #{seq2seq_decoder_forward.1} parent=67 // pred_check_branch
              %442 = sbr.rel (0) target = $region76
            $region75: #{seq2seq_decoder_forward.1} parent=67 // pred_region
              loop: start=0, step=1, limit=1
              $region77: #{seq2seq_decoder_forward.1} parent=75 // loop_pre_header
                _
              $region78: #{seq2seq_decoder_forward.1} parent=75 // loop_header
                %s445 = sphi 0, %s449
                %p446 = scmp.ge.s32.totalorder %s445, 1
                %s450 = sphi %s436, %s436
                %s451 = sphi %s434, %s434
              $region79: #{seq2seq_decoder_forward.1} parent=75 // loop_header_branch
                %448 = sbr.rel (%p446) target = $region83
              $region80: #{seq2seq_decoder_forward.1} parent=75 // loop_body
                %v452 = vld [vmem:[%s450] sm:$0xf]
                %453 = vst [vmem:[%s451] sm:$0xf] %v452
                %v454 = vld [vmem:[%s450 + $0x8] sm:$0xf]
                %455 = vst [vmem:[%s451 + $0x4] sm:$0xf] %v454
                %v456 = vld [vmem:[%s450 + $0x10] sm:$0xf]
                %457 = vst [vmem:[%s451 + $0x8] sm:$0xf] %v456
                %v458 = vld [vmem:[%s450 + $0x18] sm:$0xf]
                %459 = vst [vmem:[%s451 + $0xc] sm:$0xf] %v458
                %v460 = vld [vmem:[%s450 + $0x20] sm:$0xf]
                %461 = vst [vmem:[%s451 + $0x10] sm:$0xf] %v460
                %v462 = vld [vmem:[%s450 + $0x28] sm:$0xf]
                %463 = vst [vmem:[%s451 + $0x14] sm:$0xf] %v462
                %v464 = vld [vmem:[%s450 + $0x30] sm:$0xf]
                %465 = vst [vmem:[%s451 + $0x18] sm:$0xf] %v464
                %v466 = vld [vmem:[%s450 + $0x38] sm:$0xf]
                %467 = vst [vmem:[%s451 + $0x1c] sm:$0xf] %v466
                %v468 = vld [vmem:[%s450 + $0x40] sm:$0xf]
                %469 = vst [vmem:[%s451 + $0x20] sm:$0xf] %v468
                %v470 = vld [vmem:[%s450 + $0x48] sm:$0xf]
                %471 = vst [vmem:[%s451 + $0x24] sm:$0xf] %v470
                %v472 = vld [vmem:[%s450 + $0x50] sm:$0xf]
                %473 = vst [vmem:[%s451 + $0x28] sm:$0xf] %v472
                %v474 = vld [vmem:[%s450 + $0x58] sm:$0xf]
                %475 = vst [vmem:[%s451 + $0x2c] sm:$0xf] %v474
                %v476 = vld [vmem:[%s450 + $0x60] sm:$0xf]
                %477 = vst [vmem:[%s451 + $0x30] sm:$0xf] %v476
                %v478 = vld [vmem:[%s450 + $0x68] sm:$0xf]
                %479 = vst [vmem:[%s451 + $0x34] sm:$0xf] %v478
                %v480 = vld [vmem:[%s450 + $0x70] sm:$0xf]
                %481 = vst [vmem:[%s451 + $0x38] sm:$0xf] %v480
                %v482 = vld [vmem:[%s450 + $0x78] sm:$0xf]
                %483 = vst [vmem:[%s451 + $0x3c] sm:$0xf] %v482
              $region81: #{seq2seq_decoder_forward.1} parent=75 // loop_footer
                %s449 = sadd.s32 1, %s445
              $region82: #{seq2seq_decoder_forward.1} parent=75 // loop_footer_branch
                %444 = sbr.rel target = $region78
              $region83: #{seq2seq_decoder_forward.1} parent=75 // loop_exit
                _
            $region76: #{seq2seq_decoder_forward.1} parent=67 // pred_fallthru
              _
          $region68: #{seq2seq_decoder_forward.1} parent=63 // pred_fallthru
            _
          %535 = vnop
        $region64: #{seq2seq_decoder_forward.1} parent=55 // pred_fallthru
          _
        // Predicated region
        $region102: #{seq2seq_decoder_forward.1} parent=55 // pred_check
          %p536 = pneg %p315
        $region103: #{seq2seq_decoder_forward.1} parent=55 // pred_check_branch
          %538 = sbr.rel (%p536) target = $region105
        $region104: #{seq2seq_decoder_forward.1} parent=55 // pred_region
          %p539 = scmp.lt.s32.totalorder %s29, 1
          %s540 = scalar_select %p539, %s29, 1
          %s541 = scalar_lea.vmem %s12, %s540
        $region105: #{seq2seq_decoder_forward.1} parent=55 // pred_fallthru
          _
      $region56: #{seq2seq_decoder_forward.1} parent=5 // pred_fallthru
        _
      %p542 = scmp.le.s32.totalorder 1, %s21
      %p543 = scmp.lt.s32.totalorder %s21, 5
      %p544 = pnand %p542, %p543
      %p545 = pneg %p544
      // Predicated region
      $region106: #{seq2seq_decoder_forward.1} parent=5 // pred_check
        _
      $region107: #{seq2seq_decoder_forward.1} parent=5 // pred_check_branch
        %547 = sbr.rel (%p544) target = $region109
      $region108: #{seq2seq_decoder_forward.1} parent=5 // pred_region
        %s548 = ssub.s32 %s21, 1
        %s549 = sand.u32 %s282, 1
        %s550 = sand.u32 %s282, 1
        %s551 = smul.addr %s550, 64
        %s552 = scalar_lea.vmem [#allocation5], %s551
        // Predicated region
        $region110: #{seq2seq_decoder_forward.1} parent=108 // pred_check
          %p553 = pneg %p295
        $region111: #{seq2seq_decoder_forward.1} parent=108 // pred_check_branch
          %555 = sbr.rel (%p553) target = $region113
        $region112: #{seq2seq_decoder_forward.1} parent=108 // pred_region
          _
        $region113: #{seq2seq_decoder_forward.1} parent=108 // pred_fallthru
          _
        %s556 = smul.u32 8, %s30
        %p557 = scmp.lt.s32.totalorder %s556, 15
        %s558 = scalar_select %p557, %s556, 15
        %s559 = smul.addr %s558, 4
        %s560 = scalar_lea.vmem %s0, %s559
        %p561 = pneg %p59
        %p562 = pneg %p56
        %p563 = pneg %p80
        %p564 = pneg %p77
        %p565 = pneg %p101
        %p566 = pneg %p98
        %p567 = pneg %p122
        %p568 = pneg %p119
        %p569 = pneg %p143
        %p570 = pneg %p140
        %p571 = pneg %p164
        %p572 = pneg %p161
        %p573 = pneg %p185
        %p574 = pneg %p182
        %p575 = pneg %p206
        %p576 = pneg %p203
        %p577 = pneg %p227
        %p578 = pneg %p224
        %p579 = pneg %p248
        %p580 = pneg %p245
        %p581 = pneg %p269
        %p582 = pneg %p266
        %s583 = sand.u32 %s282, 1
        %s584 = sand.u32 %s282, 1
        %s585 = smul.addr %s584, 64
        %s586 = scalar_lea.vmem [#allocation5], %s585
        %p587 = pneg %p295
        %p588 = pneg %p292
        %p589 = scmp.lt.s32.totalorder %s31, 1
        %s590 = scalar_select %p589, %s31, 1
        %s591 = scalar_lea.vmem %s12, %s590
        %p592 = pneg %p321
        %p593 = pneg %p318
        %p594 = pneg %p349
        %p595 = pneg %p346
        %s596 = sand.u32 %s336, 1
        %s597 = sand.u32 %s336, 1
        %s598 = smul.addr %s597, 64
        %s599 = scalar_lea.vmem [#allocation6], %s598
        %p600 = pneg %p370
        %p601 = pneg %p367
        %s602 = smul.u32 8, %s30
        %p603 = scmp.lt.s32.totalorder %s602, 15
        %s604 = scalar_select %p603, %s602, 15
        %s605 = smul.addr %s604, 4
        %s606 = scalar_lea.vmem %s0, %s605
        %s607 = smul.u32 8, %s30
        %p608 = scmp.lt.s32.totalorder %s31, 1
        %s609 = scalar_select %p608, %s31, 1
        %s610 = scalar_lea.vmem %s12, %s609
        %s611 = smul.u32 8, %s30
        %p613 = scmp.eq.s32.totalorder %s30, 0
        %p614 = scmp.eq.s32.totalorder %s31, 0
        %p615 = pnand %p613, %p614
        %p616 = pneg %p615
        // Predicated region
        $region114: #{seq2seq_decoder_forward.1} parent=108 // pred_check
          _
        $region115: #{seq2seq_decoder_forward.1} parent=108 // pred_check_branch
          %618 = sbr.rel (%p615) target = $region117
        $region116: #{seq2seq_decoder_forward.1} parent=108 // pred_region
          %v619 = vld [vmem:[%s1] sm:$0xff]
          %v620 = vld [vmem:[%s1 + $0x8] sm:$0xff]
          %621 = vst [vmem:[#allocation2] sm:$0xff] %v619
          %622 = vst [vmem:[#allocation2 + $0x8] sm:$0xff] %v620
        $region117: #{seq2seq_decoder_forward.1} parent=108 // pred_fallthru
          _
        // Predicated region
        $region118: #{seq2seq_decoder_forward.1} parent=108 // pred_check
          %p623 = pneg %p614
        $region119: #{seq2seq_decoder_forward.1} parent=108 // pred_check_branch
          %625 = sbr.rel (%p623) target = $region121
        $region120: #{seq2seq_decoder_forward.1} parent=108 // pred_region
          %s626 = scalar_lea.vmem %s1, 8
          %v627 = vld [vmem:[%s626] sm:$0xff]
          %v628 = vpack.c.bf16 %v627, %v627
          %v629 = vld [vmem:[%s3] sm:$0xff]
          %v630 = vld [vmem:[%s3 + $0x8] sm:$0xf]
          %v631 = vld [vmem:[%s3 + $0xc] sm:$0xff]
          %v632 = vld [vmem:[%s3 + $0x14] sm:$0xf]
          %v633 = vld [vmem:[%s3 + $0x18] sm:$0xff]
          %v634 = vld [vmem:[%s3 + $0x20] sm:$0xf]
          %v635 = vld [vmem:[%s3 + $0x24] sm:$0xff]
          %v636 = vld [vmem:[%s3 + $0x2c] sm:$0xf]
          %v637 = vld [vmem:[%s3 + $0x30] sm:$0xff]
          %v638 = vld [vmem:[%s3 + $0x38] sm:$0xf]
          %v639 = vld [vmem:[%s3 + $0x3c] sm:$0xff]
          %v640 = vld [vmem:[%s3 + $0x44] sm:$0xf]
          %v641 = vld [vmem:[%s3 + $0x48] sm:$0xff]
          %v642 = vld [vmem:[%s3 + $0x50] sm:$0xf]
          %v643 = vld [vmem:[%s3 + $0x54] sm:$0xff]
          %v644 = vld [vmem:[%s3 + $0x5c] sm:$0xf]
          %v645 = vld [vmem:[%s3 + $0x60] sm:$0xff]
          %v646 = vld [vmem:[%s3 + $0x68] sm:$0xf]
          %v647 = vld [vmem:[%s3 + $0x6c] sm:$0xff]
          %v648 = vld [vmem:[%s3 + $0x74] sm:$0xf]
          %v649 = vld [vmem:[%s3 + $0x78] sm:$0xff]
          %v650 = vld [vmem:[%s3 + $0x80] sm:$0xf]
          %v651 = vld [vmem:[%s3 + $0x84] sm:$0xff]
          %v652 = vld [vmem:[%s3 + $0x8c] sm:$0xf]
          %v653 = vld [vmem:[%s3 + $0x90] sm:$0xff]
          %v654 = vld [vmem:[%s3 + $0x98] sm:$0xf]
          %v655 = vld [vmem:[%s3 + $0x9c] sm:$0xff]
          %v656 = vld [vmem:[%s3 + $0xa4] sm:$0xf]
          %v657 = vld [vmem:[%s3 + $0xa8] sm:$0xff]
          %v658 = vld [vmem:[%s3 + $0xb0] sm:$0xf]
          %v659 = vld [vmem:[%s3 + $0xb4] sm:$0xff]
          %v660 = vld [vmem:[%s3 + $0xbc] sm:$0xf]
          %v661 = vld [vmem:[%s5] sm:$0x7]
          %v663 = vlaneseq
          %v664 = vshrl.u32 %v663, 7
          %v665 = vsub.s32 0, %v664
          %v666 = vrot.slane %v661, %v665
          %v667 = vlaneseq
          %v668 = vshrl.u32 %v667, 7
          %v669 = vsub.s32 1, %v668
          %v670 = vrot.slane %v661, %v669
          %v671 = vlaneseq
          %v672 = vshrl.u32 %v671, 7
          %v673 = vsub.s32 2, %v672
          %v674 = vrot.slane %v661, %v673
          %v710 = vunpack.c.l.b16 %v629
          %v711 = vunpack.c.h.b16 %v629
          %v712 = vunpack.c.l.b16 %v630
          %v713 = vunpack.c.l.b16 %v631
          %v714 = vunpack.c.h.b16 %v631
          %v715 = vunpack.c.l.b16 %v632
          %v716 = vunpack.c.l.b16 %v633
          %v717 = vunpack.c.h.b16 %v633
          %v718 = vunpack.c.l.b16 %v634
          %v719 = vunpack.c.l.b16 %v635
          %v720 = vunpack.c.h.b16 %v635
          %v721 = vunpack.c.l.b16 %v636
          %v722 = vunpack.c.l.b16 %v637
          %v723 = vunpack.c.h.b16 %v637
          %v724 = vunpack.c.l.b16 %v638
          %v725 = vunpack.c.l.b16 %v639
          %v726 = vunpack.c.h.b16 %v639
          %v727 = vunpack.c.l.b16 %v640
          %v728 = vunpack.c.l.b16 %v641
          %v729 = vunpack.c.h.b16 %v641
          %v730 = vunpack.c.l.b16 %v642
          %v731 = vunpack.c.l.b16 %v643
          %v732 = vunpack.c.h.b16 %v643
          %v733 = vunpack.c.l.b16 %v644
          %v734 = vunpack.c.l.b16 %v645
          %v735 = vunpack.c.h.b16 %v645
          %v736 = vunpack.c.l.b16 %v646
          %v737 = vunpack.c.l.b16 %v647
          %v738 = vunpack.c.h.b16 %v647
          %v739 = vunpack.c.l.b16 %v648
          %v740 = vunpack.c.l.b16 %v649
          %v741 = vunpack.c.h.b16 %v649
          %v742 = vunpack.c.l.b16 %v650
          %v743 = vunpack.c.l.b16 %v651
          %v744 = vunpack.c.h.b16 %v651
          %v745 = vunpack.c.l.b16 %v652
          %v746 = vunpack.c.l.b16 %v653
          %v747 = vunpack.c.h.b16 %v653
          %v748 = vunpack.c.l.b16 %v654
          %v749 = vunpack.c.l.b16 %v655
          %v750 = vunpack.c.h.b16 %v655
          %v751 = vunpack.c.l.b16 %v656
          %v752 = vunpack.c.l.b16 %v657
          %v753 = vunpack.c.h.b16 %v657
          %v754 = vunpack.c.l.b16 %v658
          %v755 = vunpack.c.l.b16 %v659
          %v756 = vunpack.c.h.b16 %v659
          %v757 = vunpack.c.l.b16 %v660
          %v758 = vpack.c.b16 %v713, %v710
          %v759 = vpack.c.b16 %v714, %v711
          %v760 = vpack.c.b16 %v715, %v712
          %v761 = vpack.c.b16 %v719, %v716
          %v762 = vpack.c.b16 %v720, %v717
          %v763 = vpack.c.b16 %v721, %v718
          %v764 = vpack.c.b16 %v725, %v722
          %v765 = vpack.c.b16 %v726, %v723
          %v766 = vpack.c.b16 %v727, %v724
          %v767 = vpack.c.b16 %v731, %v728
          %v768 = vpack.c.b16 %v732, %v729
          %v769 = vpack.c.b16 %v733, %v730
          %v770 = vpack.c.b16 %v737, %v734
          %v771 = vpack.c.b16 %v738, %v735
          %v772 = vpack.c.b16 %v739, %v736
          %v773 = vpack.c.b16 %v743, %v740
          %v774 = vpack.c.b16 %v744, %v741
          %v775 = vpack.c.b16 %v745, %v742
          %v776 = vpack.c.b16 %v749, %v746
          %v777 = vpack.c.b16 %v750, %v747
          %v778 = vpack.c.b16 %v751, %v748
          %v779 = vpack.c.b16 %v755, %v752
          %v780 = vpack.c.b16 %v756, %v753
          %v781 = vpack.c.b16 %v757, %v754
          %806 = vmatprep.subr.bf16.mxu0 %v759
          %807 = vmatpush1.bf16.msra.mxu0 %v758
          %808 = vmatprep.subr.bf16.mxu0 %v762
          %809 = vmatpush1.bf16.msra.mxu0 %v761
          %810 = vmatprep.subr.bf16.mxu0 %v765
          %811 = vmatpush1.bf16.msra.mxu0 %v764
          %812 = vmatprep.subr.bf16.mxu0 %v768
          %813 = vmatpush1.bf16.msra.mxu0 %v767
          %814 = vmatprep.subr.bf16.mxu0 %v771
          %815 = vmatpush1.bf16.msra.mxu0 %v770
          %816 = vmatprep.subr.bf16.mxu0 %v774
          %817 = vmatpush1.bf16.msra.mxu0 %v773
          %818 = vmatprep.subr.bf16.mxu0 %v777
          %819 = vmatpush1.bf16.msra.mxu0 %v776
          %820 = vmatprep.subr.bf16.mxu0 %v780
          %821 = vmatpush1.bf16.msra.mxu0 %v779
          %822 = vmatprep.subr.bf16.mxu0 0
          %823 = vmatpush1.bf16.msra.mxu0 0
          %824 = vmatprep.subr.bf16.mxu0 0
          %825 = vmatpush1.bf16.msra.mxu0 0
          %826 = vmatprep.subr.bf16.mxu0 0
          %827 = vmatpush1.bf16.msra.mxu0 0
          %828 = vmatprep.subr.bf16.mxu0 0
          %829 = vmatpush1.bf16.msra.mxu0 0
          %830 = vmatprep.subr.bf16.mxu0 0
          %831 = vmatpush1.bf16.msra.mxu0 0
          %832 = vmatprep.subr.bf16.mxu0 0
          %833 = vmatpush1.bf16.msra.mxu0 0
          %834 = vmatprep.subr.bf16.mxu0 0
          %835 = vmatpush1.bf16.msra.mxu0 0
          %836 = vmatprep.subr.bf16.mxu0 0
          %837 = vmatpush1.bf16.msra.mxu0 0
          %838 = vmatprep.mubr.bf16.mxu0 0
          %839 = vmatmul.mubr.bf16.gmra.mrb[0].mxu0 %v628
          %v840 = vpop.f32.mrb[0].mxu0
          %v841 = vadd.f32 %v666, %v840
          %v842 = vpop.f32.mrb[0].mxu0
          %v843 = vadd.f32 %v670, %v842
          %v844 = vpop.f32.mrb[0].mxu0
          %v845 = vpop.f32.mrb[0].mxu0
          %846 = vdwg.mxu0
          %847 = vmatprep.subr.bf16.mxu0 0
          %848 = vmatpush1.bf16.msra.mxu0 %v760
          %849 = vmatprep.subr.bf16.mxu0 0
          %850 = vmatpush1.bf16.msra.mxu0 %v763
          %851 = vmatprep.subr.bf16.mxu0 0
          %852 = vmatpush1.bf16.msra.mxu0 %v766
          %853 = vmatprep.subr.bf16.mxu0 0
          %854 = vmatpush1.bf16.msra.mxu0 %v769
          %855 = vmatprep.subr.bf16.mxu0 0
          %856 = vmatpush1.bf16.msra.mxu0 %v772
          %857 = vmatprep.subr.bf16.mxu0 0
          %858 = vmatpush1.bf16.msra.mxu0 %v775
          %859 = vmatprep.subr.bf16.mxu0 0
          %860 = vmatpush1.bf16.msra.mxu0 %v778
          %861 = vmatprep.subr.bf16.mxu0 0
          %862 = vmatpush1.bf16.msra.mxu0 %v781
          %863 = vmatprep.subr.bf16.mxu0 0
          %864 = vmatpush1.bf16.msra.mxu0 0
          %865 = vmatprep.subr.bf16.mxu0 0
          %866 = vmatpush1.bf16.msra.mxu0 0
          %867 = vmatprep.subr.bf16.mxu0 0
          %868 = vmatpush1.bf16.msra.mxu0 0
          %869 = vmatprep.subr.bf16.mxu0 0
          %870 = vmatpush1.bf16.msra.mxu0 0
          %871 = vmatprep.subr.bf16.mxu0 0
          %872 = vmatpush1.bf16.msra.mxu0 0
          %873 = vmatprep.subr.bf16.mxu0 0
          %874 = vmatpush1.bf16.msra.mxu0 0
          %875 = vmatprep.subr.bf16.mxu0 0
          %876 = vmatpush1.bf16.msra.mxu0 0
          %877 = vmatprep.subr.bf16.mxu0 0
          %878 = vmatpush1.bf16.msra.mxu0 0
          %879 = vmatprep.mubr.bf16.mxu0 0
          %880 = vmatmul.mubr.bf16.gmra.mrb[0].mxu0 %v628
          %v881 = vpop.f32.mrb[0].mxu0
          %v882 = vadd.f32 %v674, %v881
          %v883 = vpop.f32.mrb[0].mxu0
          %v884 = vpop.f32.mrb[0].mxu0
          %v885 = vpop.f32.mrb[0].mxu0
          %886 = vdwg.mxu0
          %v887 = vld [vmem:[%s606] sm:$0xf]
          %v888 = vld [vmem:[%s606 + $0x4] sm:$0xf]
          %v889 = vld [vmem:[%s606 + $0x8] sm:$0xf]
          %v890 = vld [vmem:[%s606 + $0xc] sm:$0xf]
          %v891 = vld [vmem:[%s606 + $0x10] sm:$0xf]
          %v892 = vld [vmem:[%s606 + $0x14] sm:$0xf]
          %v893 = vld [vmem:[%s606 + $0x18] sm:$0xf]
          %v894 = vld [vmem:[%s606 + $0x1c] sm:$0xf]
          %v895 = vld [vmem:[%s2] sm:$0xff]
          %v896 = vld [vmem:[%s2 + $0x8] sm:$0xf]
          %v897 = vld [vmem:[%s2 + $0xc] sm:$0xff]
          %v898 = vld [vmem:[%s2 + $0x14] sm:$0xf]
          %v899 = vld [vmem:[%s2 + $0x18] sm:$0xff]
          %v900 = vld [vmem:[%s2 + $0x20] sm:$0xf]
          %v901 = vld [vmem:[%s2 + $0x24] sm:$0xff]
          %v902 = vld [vmem:[%s2 + $0x2c] sm:$0xf]
          %v903 = vld [vmem:[%s2 + $0x30] sm:$0xff]
          %v904 = vld [vmem:[%s2 + $0x38] sm:$0xf]
          %v905 = vld [vmem:[%s2 + $0x3c] sm:$0xff]
          %v906 = vld [vmem:[%s2 + $0x44] sm:$0xf]
          %v907 = vld [vmem:[%s2 + $0x48] sm:$0xff]
          %v908 = vld [vmem:[%s2 + $0x50] sm:$0xf]
          %v909 = vld [vmem:[%s2 + $0x54] sm:$0xff]
          %v910 = vld [vmem:[%s2 + $0x5c] sm:$0xf]
          %v911 = vld [vmem:[%s2 + $0x60] sm:$0xff]
          %v912 = vld [vmem:[%s2 + $0x68] sm:$0xf]
          %v913 = vld [vmem:[%s2 + $0x6c] sm:$0xff]
          %v914 = vld [vmem:[%s2 + $0x74] sm:$0xf]
          %v915 = vld [vmem:[%s2 + $0x78] sm:$0xff]
          %v916 = vld [vmem:[%s2 + $0x80] sm:$0xf]
          %v917 = vld [vmem:[%s2 + $0x84] sm:$0xff]
          %v918 = vld [vmem:[%s2 + $0x8c] sm:$0xf]
          %v919 = vld [vmem:[%s2 + $0x90] sm:$0xff]
          %v920 = vld [vmem:[%s2 + $0x98] sm:$0xf]
          %v921 = vld [vmem:[%s2 + $0x9c] sm:$0xff]
          %v922 = vld [vmem:[%s2 + $0xa4] sm:$0xf]
          %v923 = vld [vmem:[%s2 + $0xa8] sm:$0xff]
          %v924 = vld [vmem:[%s2 + $0xb0] sm:$0xf]
          %v925 = vld [vmem:[%s2 + $0xb4] sm:$0xff]
          %v926 = vld [vmem:[%s2 + $0xbc] sm:$0xf]
          %v935 = vunpack.c.l.b16 %v887
          %v936 = vunpack.c.l.b16 %v888
          %v937 = vunpack.c.l.b16 %v889
          %v938 = vunpack.c.l.b16 %v890
          %v939 = vunpack.c.l.b16 %v891
          %v940 = vunpack.c.l.b16 %v892
          %v941 = vunpack.c.l.b16 %v893
          %v942 = vunpack.c.l.b16 %v894
          %v943 = vpack.c.b16 %v936, %v935
          %v944 = vpack.c.b16 %v938, %v937
          %v945 = vpack.c.b16 %v940, %v939
          %v946 = vpack.c.b16 %v942, %v941
          %v983 = vunpack.c.l.b16 %v895
          %v984 = vunpack.c.h.b16 %v895
          %v985 = vunpack.c.l.b16 %v896
          %v986 = vunpack.c.l.b16 %v897
          %v987 = vunpack.c.h.b16 %v897
          %v988 = vunpack.c.l.b16 %v898
          %v989 = vunpack.c.l.b16 %v899
          %v990 = vunpack.c.h.b16 %v899
          %v991 = vunpack.c.l.b16 %v900
          %v992 = vunpack.c.l.b16 %v901
          %v993 = vunpack.c.h.b16 %v901
          %v994 = vunpack.c.l.b16 %v902
          %v995 = vunpack.c.l.b16 %v903
          %v996 = vunpack.c.h.b16 %v903
          %v997 = vunpack.c.l.b16 %v904
          %v998 = vunpack.c.l.b16 %v905
          %v999 = vunpack.c.h.b16 %v905
          %v1000 = vunpack.c.l.b16 %v906
          %v1001 = vunpack.c.l.b16 %v907
          %v1002 = vunpack.c.h.b16 %v907
          %v1003 = vunpack.c.l.b16 %v908
          %v1004 = vunpack.c.l.b16 %v909
          %v1005 = vunpack.c.h.b16 %v909
          %v1006 = vunpack.c.l.b16 %v910
          %v1007 = vunpack.c.l.b16 %v911
          %v1008 = vunpack.c.h.b16 %v911
          %v1009 = vunpack.c.l.b16 %v912
          %v1010 = vunpack.c.l.b16 %v913
          %v1011 = vunpack.c.h.b16 %v913
          %v1012 = vunpack.c.l.b16 %v914
          %v1013 = vunpack.c.l.b16 %v915
          %v1014 = vunpack.c.h.b16 %v915
          %v1015 = vunpack.c.l.b16 %v916
          %v1016 = vunpack.c.l.b16 %v917
          %v1017 = vunpack.c.h.b16 %v917
          %v1018 = vunpack.c.l.b16 %v918
          %v1019 = vunpack.c.l.b16 %v919
          %v1020 = vunpack.c.h.b16 %v919
          %v1021 = vunpack.c.l.b16 %v920
          %v1022 = vunpack.c.l.b16 %v921
          %v1023 = vunpack.c.h.b16 %v921
          %v1024 = vunpack.c.l.b16 %v922
          %v1025 = vunpack.c.l.b16 %v923
          %v1026 = vunpack.c.h.b16 %v923
          %v1027 = vunpack.c.l.b16 %v924
          %v1028 = vunpack.c.l.b16 %v925
          %v1029 = vunpack.c.h.b16 %v925
          %v1030 = vunpack.c.l.b16 %v926
          %v1031 = vpack.c.b16 %v986, %v983
          %v1032 = vpack.c.b16 %v987, %v984
          %v1033 = vpack.c.b16 %v988, %v985
          %v1034 = vpack.c.b16 %v992, %v989
          %v1035 = vpack.c.b16 %v993, %v990
          %v1036 = vpack.c.b16 %v994, %v991
          %v1037 = vpack.c.b16 %v998, %v995
          %v1038 = vpack.c.b16 %v999, %v996
          %v1039 = vpack.c.b16 %v1000, %v997
          %v1040 = vpack.c.b16 %v1004, %v1001
          %v1041 = vpack.c.b16 %v1005, %v1002
          %v1042 = vpack.c.b16 %v1006, %v1003
          %v1043 = vpack.c.b16 %v1010, %v1007
          %v1044 = vpack.c.b16 %v1011, %v1008
          %v1045 = vpack.c.b16 %v1012, %v1009
          %v1046 = vpack.c.b16 %v1016, %v1013
          %v1047 = vpack.c.b16 %v1017, %v1014
          %v1048 = vpack.c.b16 %v1018, %v1015
          %v1049 = vpack.c.b16 %v1022, %v1019
          %v1050 = vpack.c.b16 %v1023, %v1020
          %v1051 = vpack.c.b16 %v1024, %v1021
          %v1052 = vpack.c.b16 %v1028, %v1025
          %v1053 = vpack.c.b16 %v1029, %v1026
          %v1054 = vpack.c.b16 %v1030, %v1027
          %1079 = vmatprep.subr.bf16.mxu0 %v1032
          %1080 = vmatpush1.bf16.msra.mxu0 %v1031
          %1081 = vmatprep.subr.bf16.mxu0 %v1035
          %1082 = vmatpush1.bf16.msra.mxu0 %v1034
          %1083 = vmatprep.subr.bf16.mxu0 %v1038
          %1084 = vmatpush1.bf16.msra.mxu0 %v1037
          %1085 = vmatprep.subr.bf16.mxu0 %v1041
          %1086 = vmatpush1.bf16.msra.mxu0 %v1040
          %1087 = vmatprep.subr.bf16.mxu0 %v1044
          %1088 = vmatpush1.bf16.msra.mxu0 %v1043
          %1089 = vmatprep.subr.bf16.mxu0 %v1047
          %1090 = vmatpush1.bf16.msra.mxu0 %v1046
          %1091 = vmatprep.subr.bf16.mxu0 %v1050
          %1092 = vmatpush1.bf16.msra.mxu0 %v1049
          %1093 = vmatprep.subr.bf16.mxu0 %v1053
          %1094 = vmatpush1.bf16.msra.mxu0 %v1052
          %1095 = vmatprep.subr.bf16.mxu0 0
          %1096 = vmatpush1.bf16.msra.mxu0 0
          %1097 = vmatprep.subr.bf16.mxu0 0
          %1098 = vmatpush1.bf16.msra.mxu0 0
          %1099 = vmatprep.subr.bf16.mxu0 0
          %1100 = vmatpush1.bf16.msra.mxu0 0
          %1101 = vmatprep.subr.bf16.mxu0 0
          %1102 = vmatpush1.bf16.msra.mxu0 0
          %1103 = vmatprep.subr.bf16.mxu0 0
          %1104 = vmatpush1.bf16.msra.mxu0 0
          %1105 = vmatprep.subr.bf16.mxu0 0
          %1106 = vmatpush1.bf16.msra.mxu0 0
          %1107 = vmatprep.subr.bf16.mxu0 0
          %1108 = vmatpush1.bf16.msra.mxu0 0
          %1109 = vmatprep.subr.bf16.mxu0 0
          %1110 = vmatpush1.bf16.msra.mxu0 0
          %1111 = vmatprep.mubr.bf16.mxu0 0
          %1112 = vmatmul.mubr.bf16.gmra.mrb[0].mxu0 %v943
          %v1113 = vpop.f32.mrb[0].mxu0
          %v1114 = vadd.f32 0.0, %v1113
          %v1115 = vpop.f32.mrb[0].mxu0
          %v1116 = vadd.f32 0.0, %v1115
          %v1117 = vpop.f32.mrb[0].mxu0
          %v1118 = vadd.f32 0.0, %v1117
          %v1119 = vpop.f32.mrb[0].mxu0
          %v1120 = vadd.f32 0.0, %v1119
          %1121 = vmatprep.mubr.bf16.mxu0 0
          %1122 = vmatmul.mubr.bf16.gmra.mrb[0].mxu0 %v944
          %v1123 = vpop.f32.mrb[0].mxu0
          %v1124 = vadd.f32 0.0, %v1123
          %v1125 = vpop.f32.mrb[0].mxu0
          %v1126 = vadd.f32 0.0, %v1125
          %v1127 = vpop.f32.mrb[0].mxu0
          %v1128 = vadd.f32 0.0, %v1127
          %v1129 = vpop.f32.mrb[0].mxu0
          %v1130 = vadd.f32 0.0, %v1129
          %1131 = vmatprep.mubr.bf16.mxu0 0
          %1132 = vmatmul.mubr.bf16.gmra.mrb[0].mxu0 %v945
          %v1133 = vpop.f32.mrb[0].mxu0
          %v1134 = vadd.f32 0.0, %v1133
          %v1135 = vpop.f32.mrb[0].mxu0
          %v1136 = vadd.f32 0.0, %v1135
          %v1137 = vpop.f32.mrb[0].mxu0
          %v1138 = vadd.f32 0.0, %v1137
          %v1139 = vpop.f32.mrb[0].mxu0
          %v1140 = vadd.f32 0.0, %v1139
          %1141 = vmatprep.mubr.bf16.mxu0 0
          %1142 = vmatmul.mubr.bf16.gmra.mrb[0].mxu0 %v946
          %v1143 = vpop.f32.mrb[0].mxu0
          %v1144 = vadd.f32 0.0, %v1143
          %v1145 = vpop.f32.mrb[0].mxu0
          %v1146 = vadd.f32 0.0, %v1145
          %v1147 = vpop.f32.mrb[0].mxu0
          %v1148 = vadd.f32 0.0, %v1147
          %v1149 = vpop.f32.mrb[0].mxu0
          %v1150 = vadd.f32 0.0, %v1149
          %1151 = vdwg.mxu0
          %1152 = vmatprep.subr.bf16.mxu0 0
          %1153 = vmatpush1.bf16.msra.mxu0 %v1033
          %1154 = vmatprep.subr.bf16.mxu0 0
          %1155 = vmatpush1.bf16.msra.mxu0 %v1036
          %1156 = vmatprep.subr.bf16.mxu0 0
          %1157 = vmatpush1.bf16.msra.mxu0 %v1039
          %1158 = vmatprep.subr.bf16.mxu0 0
          %1159 = vmatpush1.bf16.msra.mxu0 %v1042
          %1160 = vmatprep.subr.bf16.mxu0 0
          %1161 = vmatpush1.bf16.msra.mxu0 %v1045
          %1162 = vmatprep.subr.bf16.mxu0 0
          %1163 = vmatpush1.bf16.msra.mxu0 %v1048
          %1164 = vmatprep.subr.bf16.mxu0 0
          %1165 = vmatpush1.bf16.msra.mxu0 %v1051
          %1166 = vmatprep.subr.bf16.mxu0 0
          %1167 = vmatpush1.bf16.msra.mxu0 %v1054
          %1168 = vmatprep.subr.bf16.mxu0 0
          %1169 = vmatpush1.bf16.msra.mxu0 0
          %1170 = vmatprep.subr.bf16.mxu0 0
          %1171 = vmatpush1.bf16.msra.mxu0 0
          %1172 = vmatprep.subr.bf16.mxu0 0
          %1173 = vmatpush1.bf16.msra.mxu0 0
          %1174 = vmatprep.subr.bf16.mxu0 0
          %1175 = vmatpush1.bf16.msra.mxu0 0
          %1176 = vmatprep.subr.bf16.mxu0 0
          %1177 = vmatpush1.bf16.msra.mxu0 0
          %1178 = vmatprep.subr.bf16.mxu0 0
          %1179 = vmatpush1.bf16.msra.mxu0 0
          %1180 = vmatprep.subr.bf16.mxu0 0
          %1181 = vmatpush1.bf16.msra.mxu0 0
          %1182 = vmatprep.subr.bf16.mxu0 0
          %1183 = vmatpush1.bf16.msra.mxu0 0
          %1184 = vmatprep.mubr.bf16.mxu0 0
          %1185 = vmatmul.mubr.bf16.gmra.mrb[0].mxu0 %v943
          %v1186 = vpop.f32.mrb[0].mxu0
          %v1187 = vadd.f32 0.0, %v1186
          %v1188 = vpop.f32.mrb[0].mxu0
          %v1189 = vpop.f32.mrb[0].mxu0
          %v1190 = vadd.f32 0.0, %v1189
          %v1191 = vpop.f32.mrb[0].mxu0
          %1192 = vmatprep.mubr.bf16.mxu0 0
          %1193 = vmatmul.mubr.bf16.gmra.mrb[0].mxu0 %v944
          %v1194 = vpop.f32.mrb[0].mxu0
          %v1195 = vadd.f32 0.0, %v1194
          %v1196 = vpop.f32.mrb[0].mxu0
          %v1197 = vpop.f32.mrb[0].mxu0
          %v1198 = vadd.f32 0.0, %v1197
          %v1199 = vpop.f32.mrb[0].mxu0
          %1200 = vmatprep.mubr.bf16.mxu0 0
          %1201 = vmatmul.mubr.bf16.gmra.mrb[0].mxu0 %v945
          %v1202 = vpop.f32.mrb[0].mxu0
          %v1203 = vadd.f32 0.0, %v1202
          %v1204 = vpop.f32.mrb[0].mxu0
          %v1205 = vpop.f32.mrb[0].mxu0
          %v1206 = vadd.f32 0.0, %v1205
          %v1207 = vpop.f32.mrb[0].mxu0
          %1208 = vmatprep.mubr.bf16.mxu0 0
          %1209 = vmatmul.mubr.bf16.gmra.mrb[0].mxu0 %v946
          %v1210 = vpop.f32.mrb[0].mxu0
          %v1211 = vadd.f32 0.0, %v1210
          %v1212 = vpop.f32.mrb[0].mxu0
          %v1213 = vpop.f32.mrb[0].mxu0
          %v1214 = vadd.f32 0.0, %v1213
          %v1215 = vpop.f32.mrb[0].mxu0
          %1216 = vdwg.mxu0
          %v1217 = vadd.f32 %v1114, %v841
          %v1218 = vadd.f32 %v1116, %v843
          %v1219 = vadd.f32 %v1187, %v882
          %v1220 = vadd.f32 %v1118, %v841
          %v1221 = vadd.f32 %v1120, %v843
          %v1222 = vadd.f32 %v1190, %v882
          %v1223 = vadd.f32 %v1124, %v841
          %v1224 = vadd.f32 %v1126, %v843
          %v1225 = vadd.f32 %v1195, %v882
          %v1226 = vadd.f32 %v1128, %v841
          %v1227 = vadd.f32 %v1130, %v843
          %v1228 = vadd.f32 %v1198, %v882
          %v1229 = vadd.f32 %v1134, %v841
          %v1230 = vadd.f32 %v1136, %v843
          %v1231 = vadd.f32 %v1203, %v882
          %v1232 = vadd.f32 %v1138, %v841
          %v1233 = vadd.f32 %v1140, %v843
          %v1234 = vadd.f32 %v1206, %v882
          %v1235 = vadd.f32 %v1144, %v841
          %v1236 = vadd.f32 %v1146, %v843
          %v1237 = vadd.f32 %v1211, %v882
          %v1238 = vadd.f32 %v1148, %v841
          %v1239 = vadd.f32 %v1150, %v843
          %v1240 = vadd.f32 %v1214, %v882
          %1241 = vst [vmem:[#allocation4] sm:$0xff] %v1217
          %1242 = vst [vmem:[#allocation4 + $0x8] sm:$0xff] %v1218
          %1243 = vst [vmem:[#allocation4 + $0x10] sm:$0xff] %v1219
          %1244 = vst [vmem:[#allocation4 + $0x18] sm:$0xff] %v1220
          %1245 = vst [vmem:[#allocation4 + $0x20] sm:$0xff] %v1221
          %1246 = vst [vmem:[#allocation4 + $0x28] sm:$0xff] %v1222
          %1247 = vst [vmem:[#allocation4 + $0x30] sm:$0xff] %v1223
          %1248 = vst [vmem:[#allocation4 + $0x38] sm:$0xff] %v1224
          %1249 = vst [vmem:[#allocation4 + $0x40] sm:$0xff] %v1225
          %1250 = vst [vmem:[#allocation4 + $0x48] sm:$0xff] %v1226
          %1251 = vst [vmem:[#allocation4 + $0x50] sm:$0xff] %v1227
          %1252 = vst [vmem:[#allocation4 + $0x58] sm:$0xff] %v1228
          %1253 = vst [vmem:[#allocation4 + $0x60] sm:$0xff] %v1229
          %1254 = vst [vmem:[#allocation4 + $0x68] sm:$0xff] %v1230
          %1255 = vst [vmem:[#allocation4 + $0x70] sm:$0xff] %v1231
          %1256 = vst [vmem:[#allocation4 + $0x78] sm:$0xff] %v1232
          %1257 = vst [vmem:[#allocation4 + $0x80] sm:$0xff] %v1233
          %1258 = vst [vmem:[#allocation4 + $0x88] sm:$0xff] %v1234
          %1259 = vst [vmem:[#allocation4 + $0x90] sm:$0xff] %v1235
          %1260 = vst [vmem:[#allocation4 + $0x98] sm:$0xff] %v1236
          %1261 = vst [vmem:[#allocation4 + $0xa0] sm:$0xff] %v1237
          %1262 = vst [vmem:[#allocation4 + $0xa8] sm:$0xff] %v1238
          %1263 = vst [vmem:[#allocation4 + $0xb0] sm:$0xff] %v1239
          %1264 = vst [vmem:[#allocation4 + $0xb8] sm:$0xff] %v1240
          %v1265 = vld [vmem:[%s4] sm:$0xff]
          %v1266 = vld [vmem:[%s4 + $0x8] sm:$0xf]
          %v1267 = vld [vmem:[%s4 + $0xc] sm:$0xff]
          %v1268 = vld [vmem:[%s4 + $0x14] sm:$0xf]
          %v1269 = vld [vmem:[%s4 + $0x18] sm:$0xff]
          %v1270 = vld [vmem:[%s4 + $0x20] sm:$0xf]
          %v1271 = vld [vmem:[%s4 + $0x24] sm:$0xff]
          %v1272 = vld [vmem:[%s4 + $0x2c] sm:$0xf]
          %v1273 = vld [vmem:[%s4 + $0x30] sm:$0xff]
          %v1274 = vld [vmem:[%s4 + $0x38] sm:$0xf]
          %v1275 = vld [vmem:[%s4 + $0x3c] sm:$0xff]
          %v1276 = vld [vmem:[%s4 + $0x44] sm:$0xf]
          %v1277 = vld [vmem:[%s4 + $0x48] sm:$0xff]
          %v1278 = vld [vmem:[%s4 + $0x50] sm:$0xf]
          %v1279 = vld [vmem:[%s4 + $0x54] sm:$0xff]
          %v1280 = vld [vmem:[%s4 + $0x5c] sm:$0xf]
          %v1281 = vld [vmem:[%s4 + $0x60] sm:$0xff]
          %v1282 = vld [vmem:[%s4 + $0x68] sm:$0xf]
          %v1283 = vld [vmem:[%s4 + $0x6c] sm:$0xff]
          %v1284 = vld [vmem:[%s4 + $0x74] sm:$0xf]
          %v1285 = vld [vmem:[%s4 + $0x78] sm:$0xff]
          %v1286 = vld [vmem:[%s4 + $0x80] sm:$0xf]
          %v1287 = vld [vmem:[%s4 + $0x84] sm:$0xff]
          %v1288 = vld [vmem:[%s4 + $0x8c] sm:$0xf]
          %v1289 = vld [vmem:[%s4 + $0x90] sm:$0xff]
          %v1290 = vld [vmem:[%s4 + $0x98] sm:$0xf]
          %v1291 = vld [vmem:[%s4 + $0x9c] sm:$0xff]
          %v1292 = vld [vmem:[%s4 + $0xa4] sm:$0xf]
          %v1293 = vld [vmem:[%s4 + $0xa8] sm:$0xff]
          %v1294 = vld [vmem:[%s4 + $0xb0] sm:$0xf]
          %v1295 = vld [vmem:[%s4 + $0xb4] sm:$0xff]
          %v1296 = vld [vmem:[%s4 + $0xbc] sm:$0xf]
          %v1297 = vld [vmem:[%s6] sm:$0x7]
          %v1299 = vlaneseq
          %v1300 = vshrl.u32 %v1299, 7
          %v1301 = vsub.s32 0, %v1300
          %v1302 = vrot.slane %v1297, %v1301
          %v1303 = vlaneseq
          %v1304 = vshrl.u32 %v1303, 7
          %v1305 = vsub.s32 1, %v1304
          %v1306 = vrot.slane %v1297, %v1305
          %v1307 = vlaneseq
          %v1308 = vshrl.u32 %v1307, 7
          %v1309 = vsub.s32 2, %v1308
          %v1310 = vrot.slane %v1297, %v1309
          %v1314 = vld [vmem:[%s7] sm:$0xff]
          %v1315 = vld [vmem:[%s7 + $0x8] sm:$0xf]
          %v1316 = vld [vmem:[%s7 + $0xc] sm:$0xff]
          %v1317 = vld [vmem:[%s7 + $0x14] sm:$0xf]
          %v1318 = vld [vmem:[%s7 + $0x18] sm:$0xff]
          %v1319 = vld [vmem:[%s7 + $0x20] sm:$0xf]
          %v1320 = vld [vmem:[%s7 + $0x24] sm:$0xff]
          %v1321 = vld [vmem:[%s7 + $0x2c] sm:$0xf]
          %v1322 = vld [vmem:[%s7 + $0x30] sm:$0xff]
          %v1323 = vld [vmem:[%s7 + $0x38] sm:$0xf]
          %v1324 = vld [vmem:[%s7 + $0x3c] sm:$0xff]
          %v1325 = vld [vmem:[%s7 + $0x44] sm:$0xf]
          %v1326 = vld [vmem:[%s7 + $0x48] sm:$0xff]
          %v1327 = vld [vmem:[%s7 + $0x50] sm:$0xf]
          %v1328 = vld [vmem:[%s7 + $0x54] sm:$0xff]
          %v1329 = vld [vmem:[%s7 + $0x5c] sm:$0xf]
          %v1330 = vld [vmem:[%s7 + $0x60] sm:$0xff]
          %v1331 = vld [vmem:[%s7 + $0x68] sm:$0xf]
          %v1332 = vld [vmem:[%s7 + $0x6c] sm:$0xff]
          %v1333 = vld [vmem:[%s7 + $0x74] sm:$0xf]
          %v1334 = vld [vmem:[%s7 + $0x78] sm:$0xff]
          %v1335 = vld [vmem:[%s7 + $0x80] sm:$0xf]
          %v1336 = vld [vmem:[%s7 + $0x84] sm:$0xff]
          %v1337 = vld [vmem:[%s7 + $0x8c] sm:$0xf]
          %v1338 = vld [vmem:[%s7 + $0x90] sm:$0xff]
          %v1339 = vld [vmem:[%s7 + $0x98] sm:$0xf]
          %v1340 = vld [vmem:[%s7 + $0x9c] sm:$0xff]
          %v1341 = vld [vmem:[%s7 + $0xa4] sm:$0xf]
          %v1342 = vld [vmem:[%s7 + $0xa8] sm:$0xff]
          %v1343 = vld [vmem:[%s7 + $0xb0] sm:$0xf]
          %v1344 = vld [vmem:[%s7 + $0xb4] sm:$0xff]
          %v1345 = vld [vmem:[%s7 + $0xbc] sm:$0xf]
          %v1346 = vld [vmem:[%s8] sm:$0xff]
          %v1347 = vld [vmem:[%s8 + $0x8] sm:$0xf]
          %v1348 = vld [vmem:[%s8 + $0xc] sm:$0xff]
          %v1349 = vld [vmem:[%s8 + $0x14] sm:$0xf]
          %v1350 = vld [vmem:[%s8 + $0x18] sm:$0xff]
          %v1351 = vld [vmem:[%s8 + $0x20] sm:$0xf]
          %v1352 = vld [vmem:[%s8 + $0x24] sm:$0xff]
          %v1353 = vld [vmem:[%s8 + $0x2c] sm:$0xf]
          %v1354 = vld [vmem:[%s8 + $0x30] sm:$0xff]
          %v1355 = vld [vmem:[%s8 + $0x38] sm:$0xf]
          %v1356 = vld [vmem:[%s8 + $0x3c] sm:$0xff]
          %v1357 = vld [vmem:[%s8 + $0x44] sm:$0xf]
          %v1358 = vld [vmem:[%s8 + $0x48] sm:$0xff]
          %v1359 = vld [vmem:[%s8 + $0x50] sm:$0xf]
          %v1360 = vld [vmem:[%s8 + $0x54] sm:$0xff]
          %v1361 = vld [vmem:[%s8 + $0x5c] sm:$0xf]
          %v1362 = vld [vmem:[%s8 + $0x60] sm:$0xff]
          %v1363 = vld [vmem:[%s8 + $0x68] sm:$0xf]
          %v1364 = vld [vmem:[%s8 + $0x6c] sm:$0xff]
          %v1365 = vld [vmem:[%s8 + $0x74] sm:$0xf]
          %v1366 = vld [vmem:[%s8 + $0x78] sm:$0xff]
          %v1367 = vld [vmem:[%s8 + $0x80] sm:$0xf]
          %v1368 = vld [vmem:[%s8 + $0x84] sm:$0xff]
          %v1369 = vld [vmem:[%s8 + $0x8c] sm:$0xf]
          %v1370 = vld [vmem:[%s8 + $0x90] sm:$0xff]
          %v1371 = vld [vmem:[%s8 + $0x98] sm:$0xf]
          %v1372 = vld [vmem:[%s8 + $0x9c] sm:$0xff]
          %v1373 = vld [vmem:[%s8 + $0xa4] sm:$0xf]
          %v1374 = vld [vmem:[%s8 + $0xa8] sm:$0xff]
          %v1375 = vld [vmem:[%s8 + $0xb0] sm:$0xf]
          %v1376 = vld [vmem:[%s8 + $0xb4] sm:$0xff]
          %v1377 = vld [vmem:[%s8 + $0xbc] sm:$0xf]
          %v1378 = vld [vmem:[%s9] sm:$0x7]
          %v1380 = vlaneseq
          %v1381 = vshrl.u32 %v1380, 7
          %v1382 = vsub.s32 0, %v1381
          %v1383 = vrot.slane %v1378, %v1382
          %v1384 = vlaneseq
          %v1385 = vshrl.u32 %v1384, 7
          %v1386 = vsub.s32 1, %v1385
          %v1387 = vrot.slane %v1378, %v1386
          %v1388 = vlaneseq
          %v1389 = vshrl.u32 %v1388, 7
          %v1390 = vsub.s32 2, %v1389
          %v1391 = vrot.slane %v1378, %v1390
          %v1395 = vld [vmem:[%s10] sm:$0x7]
          %v1397 = vlaneseq
          %v1398 = vshrl.u32 %v1397, 7
          %v1399 = vsub.s32 0, %v1398
          %v1400 = vrot.slane %v1395, %v1399
          %v1401 = vlaneseq
          %v1402 = vshrl.u32 %v1401, 7
          %v1403 = vsub.s32 1, %v1402
          %v1404 = vrot.slane %v1395, %v1403
          %v1405 = vlaneseq
          %v1406 = vshrl.u32 %v1405, 7
          %v1407 = vsub.s32 2, %v1406
          %v1408 = vrot.slane %v1395, %v1407
          %v1412 = vld [vmem:[#allocation2] sm:$0xff]
          %v1413 = vld [vmem:[#allocation4] sm:$0xff]
          %v1414 = vld [vmem:[#allocation4 + $0x8] sm:$0xff]
          %v1415 = vld [vmem:[#allocation4 + $0x10] sm:$0xff]
          %v1416 = vpack.c.bf16 %v1412, %v1412
          %v1449 = vunpack.c.l.b16 %v1265
          %v1450 = vunpack.c.h.b16 %v1265
          %v1451 = vunpack.c.l.b16 %v1266
          %v1452 = vunpack.c.l.b16 %v1267
          %v1453 = vunpack.c.h.b16 %v1267
          %v1454 = vunpack.c.l.b16 %v1268
          %v1455 = vunpack.c.l.b16 %v1269
          %v1456 = vunpack.c.h.b16 %v1269
          %v1457 = vunpack.c.l.b16 %v1270
          %v1458 = vunpack.c.l.b16 %v1271
          %v1459 = vunpack.c.h.b16 %v1271
          %v1460 = vunpack.c.l.b16 %v1272
          %v1461 = vunpack.c.l.b16 %v1273
          %v1462 = vunpack.c.h.b16 %v1273
          %v1463 = vunpack.c.l.b16 %v1274
          %v1464 = vunpack.c.l.b16 %v1275
          %v1465 = vunpack.c.h.b16 %v1275
          %v1466 = vunpack.c.l.b16 %v1276
          %v1467 = vunpack.c.l.b16 %v1277
          %v1468 = vunpack.c.h.b16 %v1277
          %v1469 = vunpack.c.l.b16 %v1278
          %v1470 = vunpack.c.l.b16 %v1279
          %v1471 = vunpack.c.h.b16 %v1279
          %v1472 = vunpack.c.l.b16 %v1280
          %v1473 = vunpack.c.l.b16 %v1281
          %v1474 = vunpack.c.h.b16 %v1281
          %v1475 = vunpack.c.l.b16 %v1282
          %v1476 = vunpack.c.l.b16 %v1283
          %v1477 = vunpack.c.h.b16 %v1283
          %v1478 = vunpack.c.l.b16 %v1284
          %v1479 = vunpack.c.l.b16 %v1285
          %v1480 = vunpack.c.h.b16 %v1285
          %v1481 = vunpack.c.l.b16 %v1286
          %v1482 = vunpack.c.l.b16 %v1287
          %v1483 = vunpack.c.h.b16 %v1287
          %v1484 = vunpack.c.l.b16 %v1288
          %v1485 = vunpack.c.l.b16 %v1289
          %v1486 = vunpack.c.h.b16 %v1289
          %v1487 = vunpack.c.l.b16 %v1290
          %v1488 = vunpack.c.l.b16 %v1291
          %v1489 = vunpack.c.h.b16 %v1291
          %v1490 = vunpack.c.l.b16 %v1292
          %v1491 = vunpack.c.l.b16 %v1293
          %v1492 = vunpack.c.h.b16 %v1293
          %v1493 = vunpack.c.l.b16 %v1294
          %v1494 = vunpack.c.l.b16 %v1295
          %v1495 = vunpack.c.h.b16 %v1295
          %v1496 = vunpack.c.l.b16 %v1296
          %v1497 = vpack.c.b16 %v1452, %v1449
          %v1498 = vpack.c.b16 %v1453, %v1450
          %v1499 = vpack.c.b16 %v1454, %v1451
          %v1500 = vpack.c.b16 %v1458, %v1455
          %v1501 = vpack.c.b16 %v1459, %v1456
          %v1502 = vpack.c.b16 %v1460, %v1457
          %v1503 = vpack.c.b16 %v1464, %v1461
          %v1504 = vpack.c.b16 %v1465, %v1462
          %v1505 = vpack.c.b16 %v1466, %v1463
          %v1506 = vpack.c.b16 %v1470, %v1467
          %v1507 = vpack.c.b16 %v1471, %v1468
          %v1508 = vpack.c.b16 %v1472, %v1469
          %v1509 = vpack.c.b16 %v1476, %v1473
          %v1510 = vpack.c.b16 %v1477, %v1474
          %v1511 = vpack.c.b16 %v1478, %v1475
          %v1512 = vpack.c.b16 %v1482, %v1479
          %v1513 = vpack.c.b16 %v1483, %v1480
          %v1514 = vpack.c.b16 %v1484, %v1481
          %v1515 = vpack.c.b16 %v1488, %v1485
          %v1516 = vpack.c.b16 %v1489, %v1486
          %v1517 = vpack.c.b16 %v1490, %v1487
          %v1518 = vpack.c.b16 %v1494, %v1491
          %v1519 = vpack.c.b16 %v1495, %v1492
          %v1520 = vpack.c.b16 %v1496, %v1493
          %1545 = vmatprep.subr.bf16.mxu0 %v1498
          %1546 = vmatpush1.bf16.msra.mxu0 %v1497
          %1547 = vmatprep.subr.bf16.mxu0 %v1501
          %1548 = vmatpush1.bf16.msra.mxu0 %v1500
          %1549 = vmatprep.subr.bf16.mxu0 %v1504
          %1550 = vmatpush1.bf16.msra.mxu0 %v1503
          %1551 = vmatprep.subr.bf16.mxu0 %v1507
          %1552 = vmatpush1.bf16.msra.mxu0 %v1506
          %1553 = vmatprep.subr.bf16.mxu0 %v1510
          %1554 = vmatpush1.bf16.msra.mxu0 %v1509
          %1555 = vmatprep.subr.bf16.mxu0 %v1513
          %1556 = vmatpush1.bf16.msra.mxu0 %v1512
          %1557 = vmatprep.subr.bf16.mxu0 %v1516
          %1558 = vmatpush1.bf16.msra.mxu0 %v1515
          %1559 = vmatprep.subr.bf16.mxu0 %v1519
          %1560 = vmatpush1.bf16.msra.mxu0 %v1518
          %1561 = vmatprep.subr.bf16.mxu0 0
          %1562 = vmatpush1.bf16.msra.mxu0 0
          %1563 = vmatprep.subr.bf16.mxu0 0
          %1564 = vmatpush1.bf16.msra.mxu0 0
          %1565 = vmatprep.subr.bf16.mxu0 0
          %1566 = vmatpush1.bf16.msra.mxu0 0
          %1567 = vmatprep.subr.bf16.mxu0 0
          %1568 = vmatpush1.bf16.msra.mxu0 0
          %1569 = vmatprep.subr.bf16.mxu0 0
          %1570 = vmatpush1.bf16.msra.mxu0 0
          %1571 = vmatprep.subr.bf16.mxu0 0
          %1572 = vmatpush1.bf16.msra.mxu0 0
          %1573 = vmatprep.subr.bf16.mxu0 0
          %1574 = vmatpush1.bf16.msra.mxu0 0
          %1575 = vmatprep.subr.bf16.mxu0 0
          %1576 = vmatpush1.bf16.msra.mxu0 0
          %1577 = vmatprep.mubr.bf16.mxu0 0
          %1578 = vmatmul.mubr.bf16.gmra.mrb[0].mxu0 %v1416
          %v1579 = vpop.f32.mrb[0].mxu0
          %v1580 = vadd.f32 %v1302, %v1579
          %v1581 = vpop.f32.mrb[0].mxu0
          %v1582 = vadd.f32 %v1306, %v1581
          %v1583 = vpop.f32.mrb[0].mxu0
          %v1584 = vpop.f32.mrb[0].mxu0
          %1585 = vdwg.mxu0
          %1586 = vmatprep.subr.bf16.mxu0 0
          %1587 = vmatpush1.bf16.msra.mxu0 %v1499
          %1588 = vmatprep.subr.bf16.mxu0 0
          %1589 = vmatpush1.bf16.msra.mxu0 %v1502
          %1590 = vmatprep.subr.bf16.mxu0 0
          %1591 = vmatpush1.bf16.msra.mxu0 %v1505
          %1592 = vmatprep.subr.bf16.mxu0 0
          %1593 = vmatpush1.bf16.msra.mxu0 %v1508
          %1594 = vmatprep.subr.bf16.mxu0 0
          %1595 = vmatpush1.bf16.msra.mxu0 %v1511
          %1596 = vmatprep.subr.bf16.mxu0 0
          %1597 = vmatpush1.bf16.msra.mxu0 %v1514
          %1598 = vmatprep.subr.bf16.mxu0 0
          %1599 = vmatpush1.bf16.msra.mxu0 %v1517
          %1600 = vmatprep.subr.bf16.mxu0 0
          %1601 = vmatpush1.bf16.msra.mxu0 %v1520
          %1602 = vmatprep.subr.bf16.mxu0 0
          %1603 = vmatpush1.bf16.msra.mxu0 0
          %1604 = vmatprep.subr.bf16.mxu0 0
          %1605 = vmatpush1.bf16.msra.mxu0 0
          %1606 = vmatprep.subr.bf16.mxu0 0
          %1607 = vmatpush1.bf16.msra.mxu0 0
          %1608 = vmatprep.subr.bf16.mxu0 0
          %1609 = vmatpush1.bf16.msra.mxu0 0
          %1610 = vmatprep.subr.bf16.mxu0 0
          %1611 = vmatpush1.bf16.msra.mxu0 0
          %1612 = vmatprep.subr.bf16.mxu0 0
          %1613 = vmatpush1.bf16.msra.mxu0 0
          %1614 = vmatprep.subr.bf16.mxu0 0
          %1615 = vmatpush1.bf16.msra.mxu0 0
          %1616 = vmatprep.subr.bf16.mxu0 0
          %1617 = vmatpush1.bf16.msra.mxu0 0
          %1618 = vmatprep.mubr.bf16.mxu0 0
          %1619 = vmatmul.mubr.bf16.gmra.mrb[0].mxu0 %v1416
          %v1620 = vpop.f32.mrb[0].mxu0
          %v1621 = vadd.f32 %v1310, %v1620
          %v1622 = vpop.f32.mrb[0].mxu0
          %v1623 = vpop.f32.mrb[0].mxu0
          %v1624 = vpop.f32.mrb[0].mxu0
          %1625 = vdwg.mxu0
          %v1626 = vadd.f32 %v1413, %v1580
          %v1627 = vxor.u32 %v1626, 2147483648
          %v1628 = vmul.f32 %v1627, 1.442695
          %v1629 = vpow.pop %v1628
          %v1630 = vadd.f32 %v1629, 1.0
          %v1631 = vrcp.pop %v1630
          %v1632 = vmul.f32 1.0, %v1631
          %v1633 = vadd.f32 %v1414, %v1582
          %v1634 = vxor.u32 %v1633, 2147483648
          %v1635 = vmul.f32 %v1634, 1.442695
          %v1636 = vpow.pop %v1635
          %v1637 = vadd.f32 %v1636, 1.0
          %v1638 = vrcp.pop %v1637
          %v1639 = vmul.f32 1.0, %v1638
          %v1640 = vmul.f32 %v1632, %v1621
          %v1641 = vadd.f32 %v1415, %v1640
          %v1642 = vtanh.pop %v1641
          %v1643 = vsub.f32 1.0, %v1639
          %v1644 = vmul.f32 %v1643, %v1642
          %v1645 = vmul.f32 %v1639, %v1412
          %v1646 = vadd.f32 %v1644, %v1645
          %1647 = vst [vmem:[#allocation2] sm:$0xff] %v1646
          %s1648 = scalar_lea.vmem [#allocation2], 8
          %v1649 = vld [vmem:[%s1648] sm:$0xff]
          %v1650 = vpack.c.bf16 %v1646, %v1646
          %v1683 = vunpack.c.l.b16 %v1314
          %v1684 = vunpack.c.h.b16 %v1314
          %v1685 = vunpack.c.l.b16 %v1315
          %v1686 = vunpack.c.l.b16 %v1316
          %v1687 = vunpack.c.h.b16 %v1316
          %v1688 = vunpack.c.l.b16 %v1317
          %v1689 = vunpack.c.l.b16 %v1318
          %v1690 = vunpack.c.h.b16 %v1318
          %v1691 = vunpack.c.l.b16 %v1319
          %v1692 = vunpack.c.l.b16 %v1320
          %v1693 = vunpack.c.h.b16 %v1320
          %v1694 = vunpack.c.l.b16 %v1321
          %v1695 = vunpack.c.l.b16 %v1322
          %v1696 = vunpack.c.h.b16 %v1322
          %v1697 = vunpack.c.l.b16 %v1323
          %v1698 = vunpack.c.l.b16 %v1324
          %v1699 = vunpack.c.h.b16 %v1324
          %v1700 = vunpack.c.l.b16 %v1325
          %v1701 = vunpack.c.l.b16 %v1326
          %v1702 = vunpack.c.h.b16 %v1326
          %v1703 = vunpack.c.l.b16 %v1327
          %v1704 = vunpack.c.l.b16 %v1328
          %v1705 = vunpack.c.h.b16 %v1328
          %v1706 = vunpack.c.l.b16 %v1329
          %v1707 = vunpack.c.l.b16 %v1330
          %v1708 = vunpack.c.h.b16 %v1330
          %v1709 = vunpack.c.l.b16 %v1331
          %v1710 = vunpack.c.l.b16 %v1332
          %v1711 = vunpack.c.h.b16 %v1332
          %v1712 = vunpack.c.l.b16 %v1333
          %v1713 = vunpack.c.l.b16 %v1334
          %v1714 = vunpack.c.h.b16 %v1334
          %v1715 = vunpack.c.l.b16 %v1335
          %v1716 = vunpack.c.l.b16 %v1336
          %v1717 = vunpack.c.h.b16 %v1336
          %v1718 = vunpack.c.l.b16 %v1337
          %v1719 = vunpack.c.l.b16 %v1338
          %v1720 = vunpack.c.h.b16 %v1338
          %v1721 = vunpack.c.l.b16 %v1339
          %v1722 = vunpack.c.l.b16 %v1340
          %v1723 = vunpack.c.h.b16 %v1340
          %v1724 = vunpack.c.l.b16 %v1341
          %v1725 = vunpack.c.l.b16 %v1342
          %v1726 = vunpack.c.h.b16 %v1342
          %v1727 = vunpack.c.l.b16 %v1343
          %v1728 = vunpack.c.l.b16 %v1344
          %v1729 = vunpack.c.h.b16 %v1344
          %v1730 = vunpack.c.l.b16 %v1345
          %v1731 = vpack.c.b16 %v1686, %v1683
          %v1732 = vpack.c.b16 %v1687, %v1684
          %v1733 = vpack.c.b16 %v1688, %v1685
          %v1734 = vpack.c.b16 %v1692, %v1689
          %v1735 = vpack.c.b16 %v1693, %v1690
          %v1736 = vpack.c.b16 %v1694, %v1691
          %v1737 = vpack.c.b16 %v1698, %v1695
          %v1738 = vpack.c.b16 %v1699, %v1696
          %v1739 = vpack.c.b16 %v1700, %v1697
          %v1740 = vpack.c.b16 %v1704, %v1701
          %v1741 = vpack.c.b16 %v1705, %v1702
          %v1742 = vpack.c.b16 %v1706, %v1703
          %v1743 = vpack.c.b16 %v1710, %v1707
          %v1744 = vpack.c.b16 %v1711, %v1708
          %v1745 = vpack.c.b16 %v1712, %v1709
          %v1746 = vpack.c.b16 %v1716, %v1713
          %v1747 = vpack.c.b16 %v1717, %v1714
          %v1748 = vpack.c.b16 %v1718, %v1715
          %v1749 = vpack.c.b16 %v1722, %v1719
          %v1750 = vpack.c.b16 %v1723, %v1720
          %v1751 = vpack.c.b16 %v1724, %v1721
          %v1752 = vpack.c.b16 %v1728, %v1725
          %v1753 = vpack.c.b16 %v1729, %v1726
          %v1754 = vpack.c.b16 %v1730, %v1727
          %1779 = vmatprep.subr.bf16.mxu0 %v1732
          %1780 = vmatpush1.bf16.msra.mxu0 %v1731
          %1781 = vmatprep.subr.bf16.mxu0 %v1735
          %1782 = vmatpush1.bf16.msra.mxu0 %v1734
          %1783 = vmatprep.subr.bf16.mxu0 %v1738
          %1784 = vmatpush1.bf16.msra.mxu0 %v1737
          %1785 = vmatprep.subr.bf16.mxu0 %v1741
          %1786 = vmatpush1.bf16.msra.mxu0 %v1740
          %1787 = vmatprep.subr.bf16.mxu0 %v1744
          %1788 = vmatpush1.bf16.msra.mxu0 %v1743
          %1789 = vmatprep.subr.bf16.mxu0 %v1747
          %1790 = vmatpush1.bf16.msra.mxu0 %v1746
          %1791 = vmatprep.subr.bf16.mxu0 %v1750
          %1792 = vmatpush1.bf16.msra.mxu0 %v1749
          %1793 = vmatprep.subr.bf16.mxu0 %v1753
          %1794 = vmatpush1.bf16.msra.mxu0 %v1752
          %1795 = vmatprep.subr.bf16.mxu0 0
          %1796 = vmatpush1.bf16.msra.mxu0 0
          %1797 = vmatprep.subr.bf16.mxu0 0
          %1798 = vmatpush1.bf16.msra.mxu0 0
          %1799 = vmatprep.subr.bf16.mxu0 0
          %1800 = vmatpush1.bf16.msra.mxu0 0
          %1801 = vmatprep.subr.bf16.mxu0 0
          %1802 = vmatpush1.bf16.msra.mxu0 0
          %1803 = vmatprep.subr.bf16.mxu0 0
          %1804 = vmatpush1.bf16.msra.mxu0 0
          %1805 = vmatprep.subr.bf16.mxu0 0
          %1806 = vmatpush1.bf16.msra.mxu0 0
          %1807 = vmatprep.subr.bf16.mxu0 0
          %1808 = vmatpush1.bf16.msra.mxu0 0
          %1809 = vmatprep.subr.bf16.mxu0 0
          %1810 = vmatpush1.bf16.msra.mxu0 0
          %1811 = vmatprep.mubr.bf16.mxu0 0
          %1812 = vmatmul.mubr.bf16.gmra.mrb[0].mxu0 %v1650
          %v1813 = vpop.f32.mrb[0].mxu0
          %v1814 = vadd.f32 %v1383, %v1813
          %v1815 = vpop.f32.mrb[0].mxu0
          %v1816 = vadd.f32 %v1387, %v1815
          %v1817 = vpop.f32.mrb[0].mxu0
          %v1818 = vpop.f32.mrb[0].mxu0
          %1819 = vdwg.mxu0
          %1820 = vmatprep.subr.bf16.mxu0 0
          %1821 = vmatpush1.bf16.msra.mxu0 %v1733
          %1822 = vmatprep.subr.bf16.mxu0 0
          %1823 = vmatpush1.bf16.msra.mxu0 %v1736
          %1824 = vmatprep.subr.bf16.mxu0 0
          %1825 = vmatpush1.bf16.msra.mxu0 %v1739
          %1826 = vmatprep.subr.bf16.mxu0 0
          %1827 = vmatpush1.bf16.msra.mxu0 %v1742
          %1828 = vmatprep.subr.bf16.mxu0 0
          %1829 = vmatpush1.bf16.msra.mxu0 %v1745
          %1830 = vmatprep.subr.bf16.mxu0 0
          %1831 = vmatpush1.bf16.msra.mxu0 %v1748
          %1832 = vmatprep.subr.bf16.mxu0 0
          %1833 = vmatpush1.bf16.msra.mxu0 %v1751
          %1834 = vmatprep.subr.bf16.mxu0 0
          %1835 = vmatpush1.bf16.msra.mxu0 %v1754
          %1836 = vmatprep.subr.bf16.mxu0 0
          %1837 = vmatpush1.bf16.msra.mxu0 0
          %1838 = vmatprep.subr.bf16.mxu0 0
          %1839 = vmatpush1.bf16.msra.mxu0 0
          %1840 = vmatprep.subr.bf16.mxu0 0
          %1841 = vmatpush1.bf16.msra.mxu0 0
          %1842 = vmatprep.subr.bf16.mxu0 0
          %1843 = vmatpush1.bf16.msra.mxu0 0
          %1844 = vmatprep.subr.bf16.mxu0 0
          %1845 = vmatpush1.bf16.msra.mxu0 0
          %1846 = vmatprep.subr.bf16.mxu0 0
          %1847 = vmatpush1.bf16.msra.mxu0 0
          %1848 = vmatprep.subr.bf16.mxu0 0
          %1849 = vmatpush1.bf16.msra.mxu0 0
          %1850 = vmatprep.subr.bf16.mxu0 0
          %1851 = vmatpush1.bf16.msra.mxu0 0
          %1852 = vmatprep.mubr.bf16.mxu0 0
          %1853 = vmatmul.mubr.bf16.gmra.mrb[0].mxu0 %v1650
          %v1854 = vpop.f32.mrb[0].mxu0
          %v1855 = vadd.f32 %v1391, %v1854
          %v1856 = vpop.f32.mrb[0].mxu0
          %v1857 = vpop.f32.mrb[0].mxu0
          %v1858 = vpop.f32.mrb[0].mxu0
          %1859 = vdwg.mxu0
          %v1860 = vpack.c.bf16 %v1649, %v1649
          %v1893 = vunpack.c.l.b16 %v1346
          %v1894 = vunpack.c.h.b16 %v1346
          %v1895 = vunpack.c.l.b16 %v1347
          %v1896 = vunpack.c.l.b16 %v1348
          %v1897 = vunpack.c.h.b16 %v1348
          %v1898 = vunpack.c.l.b16 %v1349
          %v1899 = vunpack.c.l.b16 %v1350
          %v1900 = vunpack.c.h.b16 %v1350
          %v1901 = vunpack.c.l.b16 %v1351
          %v1902 = vunpack.c.l.b16 %v1352
          %v1903 = vunpack.c.h.b16 %v1352
          %v1904 = vunpack.c.l.b16 %v1353
          %v1905 = vunpack.c.l.b16 %v1354
          %v1906 = vunpack.c.h.b16 %v1354
          %v1907 = vunpack.c.l.b16 %v1355
          %v1908 = vunpack.c.l.b16 %v1356
          %v1909 = vunpack.c.h.b16 %v1356
          %v1910 = vunpack.c.l.b16 %v1357
          %v1911 = vunpack.c.l.b16 %v1358
          %v1912 = vunpack.c.h.b16 %v1358
          %v1913 = vunpack.c.l.b16 %v1359
          %v1914 = vunpack.c.l.b16 %v1360
          %v1915 = vunpack.c.h.b16 %v1360
          %v1916 = vunpack.c.l.b16 %v1361
          %v1917 = vunpack.c.l.b16 %v1362
          %v1918 = vunpack.c.h.b16 %v1362
          %v1919 = vunpack.c.l.b16 %v1363
          %v1920 = vunpack.c.l.b16 %v1364
          %v1921 = vunpack.c.h.b16 %v1364
          %v1922 = vunpack.c.l.b16 %v1365
          %v1923 = vunpack.c.l.b16 %v1366
          %v1924 = vunpack.c.h.b16 %v1366
          %v1925 = vunpack.c.l.b16 %v1367
          %v1926 = vunpack.c.l.b16 %v1368
          %v1927 = vunpack.c.h.b16 %v1368
          %v1928 = vunpack.c.l.b16 %v1369
          %v1929 = vunpack.c.l.b16 %v1370
          %v1930 = vunpack.c.h.b16 %v1370
          %v1931 = vunpack.c.l.b16 %v1371
          %v1932 = vunpack.c.l.b16 %v1372
          %v1933 = vunpack.c.h.b16 %v1372
          %v1934 = vunpack.c.l.b16 %v1373
          %v1935 = vunpack.c.l.b16 %v1374
          %v1936 = vunpack.c.h.b16 %v1374
          %v1937 = vunpack.c.l.b16 %v1375
          %v1938 = vunpack.c.l.b16 %v1376
          %v1939 = vunpack.c.h.b16 %v1376
          %v1940 = vunpack.c.l.b16 %v1377
          %v1941 = vpack.c.b16 %v1896, %v1893
          %v1942 = vpack.c.b16 %v1897, %v1894
          %v1943 = vpack.c.b16 %v1898, %v1895
          %v1944 = vpack.c.b16 %v1902, %v1899
          %v1945 = vpack.c.b16 %v1903, %v1900
          %v1946 = vpack.c.b16 %v1904, %v1901
          %v1947 = vpack.c.b16 %v1908, %v1905
          %v1948 = vpack.c.b16 %v1909, %v1906
          %v1949 = vpack.c.b16 %v1910, %v1907
          %v1950 = vpack.c.b16 %v1914, %v1911
          %v1951 = vpack.c.b16 %v1915, %v1912
          %v1952 = vpack.c.b16 %v1916, %v1913
          %v1953 = vpack.c.b16 %v1920, %v1917
          %v1954 = vpack.c.b16 %v1921, %v1918
          %v1955 = vpack.c.b16 %v1922, %v1919
          %v1956 = vpack.c.b16 %v1926, %v1923
          %v1957 = vpack.c.b16 %v1927, %v1924
          %v1958 = vpack.c.b16 %v1928, %v1925
          %v1959 = vpack.c.b16 %v1932, %v1929
          %v1960 = vpack.c.b16 %v1933, %v1930
          %v1961 = vpack.c.b16 %v1934, %v1931
          %v1962 = vpack.c.b16 %v1938, %v1935
          %v1963 = vpack.c.b16 %v1939, %v1936
          %v1964 = vpack.c.b16 %v1940, %v1937
          %1989 = vmatprep.subr.bf16.mxu0 %v1942
          %1990 = vmatpush1.bf16.msra.mxu0 %v1941
          %1991 = vmatprep.subr.bf16.mxu0 %v1945
          %1992 = vmatpush1.bf16.msra.mxu0 %v1944
          %1993 = vmatprep.subr.bf16.mxu0 %v1948
          %1994 = vmatpush1.bf16.msra.mxu0 %v1947
          %1995 = vmatprep.subr.bf16.mxu0 %v1951
          %1996 = vmatpush1.bf16.msra.mxu0 %v1950
          %1997 = vmatprep.subr.bf16.mxu0 %v1954
          %1998 = vmatpush1.bf16.msra.mxu0 %v1953
          %1999 = vmatprep.subr.bf16.mxu0 %v1957
          %2000 = vmatpush1.bf16.msra.mxu0 %v1956
          %2001 = vmatprep.subr.bf16.mxu0 %v1960
          %2002 = vmatpush1.bf16.msra.mxu0 %v1959
          %2003 = vmatprep.subr.bf16.mxu0 %v1963
          %2004 = vmatpush1.bf16.msra.mxu0 %v1962
          %2005 = vmatprep.subr.bf16.mxu0 0
          %2006 = vmatpush1.bf16.msra.mxu0 0
          %2007 = vmatprep.subr.bf16.mxu0 0
          %2008 = vmatpush1.bf16.msra.mxu0 0
          %2009 = vmatprep.subr.bf16.mxu0 0
          %2010 = vmatpush1.bf16.msra.mxu0 0
          %2011 = vmatprep.subr.bf16.mxu0 0
          %2012 = vmatpush1.bf16.msra.mxu0 0
          %2013 = vmatprep.subr.bf16.mxu0 0
          %2014 = vmatpush1.bf16.msra.mxu0 0
          %2015 = vmatprep.subr.bf16.mxu0 0
          %2016 = vmatpush1.bf16.msra.mxu0 0
          %2017 = vmatprep.subr.bf16.mxu0 0
          %2018 = vmatpush1.bf16.msra.mxu0 0
          %2019 = vmatprep.subr.bf16.mxu0 0
          %2020 = vmatpush1.bf16.msra.mxu0 0
          %2021 = vmatprep.mubr.bf16.mxu0 0
          %2022 = vmatmul.mubr.bf16.gmra.mrb[0].mxu0 %v1860
          %v2023 = vpop.f32.mrb[0].mxu0
          %v2024 = vadd.f32 %v1400, %v2023
          %v2025 = vpop.f32.mrb[0].mxu0
          %v2026 = vadd.f32 %v1404, %v2025
          %v2027 = vpop.f32.mrb[0].mxu0
          %v2028 = vpop.f32.mrb[0].mxu0
          %2029 = vdwg.mxu0
          %2030 = vmatprep.subr.bf16.mxu0 0
          %2031 = vmatpush1.bf16.msra.mxu0 %v1943
          %2032 = vmatprep.subr.bf16.mxu0 0
          %2033 = vmatpush1.bf16.msra.mxu0 %v1946
          %2034 = vmatprep.subr.bf16.mxu0 0
          %2035 = vmatpush1.bf16.msra.mxu0 %v1949
          %2036 = vmatprep.subr.bf16.mxu0 0
          %2037 = vmatpush1.bf16.msra.mxu0 %v1952
          %2038 = vmatprep.subr.bf16.mxu0 0
          %2039 = vmatpush1.bf16.msra.mxu0 %v1955
          %2040 = vmatprep.subr.bf16.mxu0 0
          %2041 = vmatpush1.bf16.msra.mxu0 %v1958
          %2042 = vmatprep.subr.bf16.mxu0 0
          %2043 = vmatpush1.bf16.msra.mxu0 %v1961
          %2044 = vmatprep.subr.bf16.mxu0 0
          %2045 = vmatpush1.bf16.msra.mxu0 %v1964
          %2046 = vmatprep.subr.bf16.mxu0 0
          %2047 = vmatpush1.bf16.msra.mxu0 0
          %2048 = vmatprep.subr.bf16.mxu0 0
          %2049 = vmatpush1.bf16.msra.mxu0 0
          %2050 = vmatprep.subr.bf16.mxu0 0
          %2051 = vmatpush1.bf16.msra.mxu0 0
          %2052 = vmatprep.subr.bf16.mxu0 0
          %2053 = vmatpush1.bf16.msra.mxu0 0
          %2054 = vmatprep.subr.bf16.mxu0 0
          %2055 = vmatpush1.bf16.msra.mxu0 0
          %2056 = vmatprep.subr.bf16.mxu0 0
          %2057 = vmatpush1.bf16.msra.mxu0 0
          %2058 = vmatprep.subr.bf16.mxu0 0
          %2059 = vmatpush1.bf16.msra.mxu0 0
          %2060 = vmatprep.subr.bf16.mxu0 0
          %2061 = vmatpush1.bf16.msra.mxu0 0
          %2062 = vmatprep.mubr.bf16.mxu0 0
          %2063 = vmatmul.mubr.bf16.gmra.mrb[0].mxu0 %v1860
          %v2064 = vpop.f32.mrb[0].mxu0
          %v2065 = vadd.f32 %v1408, %v2064
          %v2066 = vpop.f32.mrb[0].mxu0
          %v2067 = vpop.f32.mrb[0].mxu0
          %v2068 = vpop.f32.mrb[0].mxu0
          %2069 = vdwg.mxu0
          %v2070 = vadd.f32 %v1814, %v2024
          %v2071 = vxor.u32 %v2070, 2147483648
          %v2072 = vmul.f32 %v2071, 1.442695
          %v2073 = vpow.pop %v2072
          %v2074 = vadd.f32 %v2073, 1.0
          %v2075 = vrcp.pop %v2074
          %v2076 = vmul.f32 1.0, %v2075
          %v2077 = vadd.f32 %v1816, %v2026
          %v2078 = vxor.u32 %v2077, 2147483648
          %v2079 = vmul.f32 %v2078, 1.442695
          %v2080 = vpow.pop %v2079
          %v2081 = vadd.f32 %v2080, 1.0
          %v2082 = vrcp.pop %v2081
          %v2083 = vmul.f32 1.0, %v2082
          %v2084 = vmul.f32 %v2076, %v2065
          %v2085 = vadd.f32 %v1855, %v2084
          %v2086 = vtanh.pop %v2085
          %v2087 = vsub.f32 1.0, %v2083
          %v2088 = vmul.f32 %v2087, %v2086
          %v2089 = vmul.f32 %v2083, %v1649
          %v2090 = vadd.f32 %v2088, %v2089
          %2091 = vst [vmem:[%s1648] sm:$0xff] %v2090
          %2092 = vst [vmem:[#allocation3] sm:$0xff] %v2090
          %v2093 = vld [vmem:[#allocation2] sm:$0xff]
          %s2094 = scalar_lea.vmem [#allocation4], 24
          %v2095 = vld [vmem:[%s2094] sm:$0xff]
          %v2096 = vld [vmem:[%s2094 + $0x8] sm:$0xff]
          %v2097 = vld [vmem:[%s2094 + $0x10] sm:$0xff]
          %v2098 = vpack.c.bf16 %v2093, %v2093
          %2099 = vmatprep.subr.bf16.mxu0 %v1498
          %2100 = vmatpush1.bf16.msra.mxu0 %v1497
          %2101 = vmatprep.subr.bf16.mxu0 %v1501
          %2102 = vmatpush1.bf16.msra.mxu0 %v1500
          %2103 = vmatprep.subr.bf16.mxu0 %v1504
          %2104 = vmatpush1.bf16.msra.mxu0 %v1503
          %2105 = vmatprep.subr.bf16.mxu0 %v1507
          %2106 = vmatpush1.bf16.msra.mxu0 %v1506
          %2107 = vmatprep.subr.bf16.mxu0 %v1510
          %2108 = vmatpush1.bf16.msra.mxu0 %v1509
          %2109 = vmatprep.subr.bf16.mxu0 %v1513
          %2110 = vmatpush1.bf16.msra.mxu0 %v1512
          %2111 = vmatprep.subr.bf16.mxu0 %v1516
          %2112 = vmatpush1.bf16.msra.mxu0 %v1515
          %2113 = vmatprep.subr.bf16.mxu0 %v1519
          %2114 = vmatpush1.bf16.msra.mxu0 %v1518
          %2115 = vmatprep.subr.bf16.mxu0 0
          %2116 = vmatpush1.bf16.msra.mxu0 0
          %2117 = vmatprep.subr.bf16.mxu0 0
          %2118 = vmatpush1.bf16.msra.mxu0 0
          %2119 = vmatprep.subr.bf16.mxu0 0
          %2120 = vmatpush1.bf16.msra.mxu0 0
          %2121 = vmatprep.subr.bf16.mxu0 0
          %2122 = vmatpush1.bf16.msra.mxu0 0
          %2123 = vmatprep.subr.bf16.mxu0 0
          %2124 = vmatpush1.bf16.msra.mxu0 0
          %2125 = vmatprep.subr.bf16.mxu0 0
          %2126 = vmatpush1.bf16.msra.mxu0 0
          %2127 = vmatprep.subr.bf16.mxu0 0
          %2128 = vmatpush1.bf16.msra.mxu0 0
          %2129 = vmatprep.subr.bf16.mxu0 0
          %2130 = vmatpush1.bf16.msra.mxu0 0
          %2131 = vmatprep.mubr.bf16.mxu0 0
          %2132 = vmatmul.mubr.bf16.gmra.mrb[0].mxu0 %v2098
          %v2133 = vpop.f32.mrb[0].mxu0
          %v2134 = vadd.f32 %v1302, %v2133
          %v2135 = vpop.f32.mrb[0].mxu0
          %v2136 = vadd.f32 %v1306, %v2135
          %v2137 = vpop.f32.mrb[0].mxu0
          %v2138 = vpop.f32.mrb[0].mxu0
          %2139 = vdwg.mxu0
          %2140 = vmatprep.subr.bf16.mxu0 0
          %2141 = vmatpush1.bf16.msra.mxu0 %v1499
          %2142 = vmatprep.subr.bf16.mxu0 0
          %2143 = vmatpush1.bf16.msra.mxu0 %v1502
          %2144 = vmatprep.subr.bf16.mxu0 0
          %2145 = vmatpush1.bf16.msra.mxu0 %v1505
          %2146 = vmatprep.subr.bf16.mxu0 0
          %2147 = vmatpush1.bf16.msra.mxu0 %v1508
          %2148 = vmatprep.subr.bf16.mxu0 0
          %2149 = vmatpush1.bf16.msra.mxu0 %v1511
          %2150 = vmatprep.subr.bf16.mxu0 0
          %2151 = vmatpush1.bf16.msra.mxu0 %v1514
          %2152 = vmatprep.subr.bf16.mxu0 0
          %2153 = vmatpush1.bf16.msra.mxu0 %v1517
          %2154 = vmatprep.subr.bf16.mxu0 0
          %2155 = vmatpush1.bf16.msra.mxu0 %v1520
          %2156 = vmatprep.subr.bf16.mxu0 0
          %2157 = vmatpush1.bf16.msra.mxu0 0
          %2158 = vmatprep.subr.bf16.mxu0 0
          %2159 = vmatpush1.bf16.msra.mxu0 0
          %2160 = vmatprep.subr.bf16.mxu0 0
          %2161 = vmatpush1.bf16.msra.mxu0 0
          %2162 = vmatprep.subr.bf16.mxu0 0
          %2163 = vmatpush1.bf16.msra.mxu0 0
          %2164 = vmatprep.subr.bf16.mxu0 0
          %2165 = vmatpush1.bf16.msra.mxu0 0
          %2166 = vmatprep.subr.bf16.mxu0 0
          %2167 = vmatpush1.bf16.msra.mxu0 0
          %2168 = vmatprep.subr.bf16.mxu0 0
          %2169 = vmatpush1.bf16.msra.mxu0 0
          %2170 = vmatprep.subr.bf16.mxu0 0
          %2171 = vmatpush1.bf16.msra.mxu0 0
          %2172 = vmatprep.mubr.bf16.mxu0 0
          %2173 = vmatmul.mubr.bf16.gmra.mrb[0].mxu0 %v2098
          %v2174 = vpop.f32.mrb[0].mxu0
          %v2175 = vadd.f32 %v1310, %v2174
          %v2176 = vpop.f32.mrb[0].mxu0
          %v2177 = vpop.f32.mrb[0].mxu0
          %v2178 = vpop.f32.mrb[0].mxu0
          %2179 = vdwg.mxu0
          %v2180 = vadd.f32 %v2095, %v2134
          %v2181 = vxor.u32 %v2180, 2147483648
          %v2182 = vmul.f32 %v2181, 1.442695
          %v2183 = vpow.pop %v2182
          %v2184 = vadd.f32 %v2183, 1.0
          %v2185 = vrcp.pop %v2184
          %v2186 = vmul.f32 1.0, %v2185
          %v2187 = vadd.f32 %v2096, %v2136
          %v2188 = vxor.u32 %v2187, 2147483648
          %v2189 = vmul.f32 %v2188, 1.442695
          %v2190 = vpow.pop %v2189
          %v2191 = vadd.f32 %v2190, 1.0
          %v2192 = vrcp.pop %v2191
          %v2193 = vmul.f32 1.0, %v2192
          %v2194 = vmul.f32 %v2186, %v2175
          %v2195 = vadd.f32 %v2097, %v2194
          %v2196 = vtanh.pop %v2195
          %v2197 = vsub.f32 1.0, %v2193
          %v2198 = vmul.f32 %v2197, %v2196
          %v2199 = vmul.f32 %v2193, %v2093
          %v2200 = vadd.f32 %v2198, %v2199
          %2201 = vst [vmem:[#allocation2] sm:$0xff] %v2200
          %v2202 = vld [vmem:[%s1648] sm:$0xff]
          %v2203 = vpack.c.bf16 %v2200, %v2200
          %2204 = vmatprep.subr.bf16.mxu0 %v1732
          %2205 = vmatpush1.bf16.msra.mxu0 %v1731
          %2206 = vmatprep.subr.bf16.mxu0 %v1735
          %2207 = vmatpush1.bf16.msra.mxu0 %v1734
          %2208 = vmatprep.subr.bf16.mxu0 %v1738
          %2209 = vmatpush1.bf16.msra.mxu0 %v1737
          %2210 = vmatprep.subr.bf16.mxu0 %v1741
          %2211 = vmatpush1.bf16.msra.mxu0 %v1740
          %2212 = vmatprep.subr.bf16.mxu0 %v1744
          %2213 = vmatpush1.bf16.msra.mxu0 %v1743
          %2214 = vmatprep.subr.bf16.mxu0 %v1747
          %2215 = vmatpush1.bf16.msra.mxu0 %v1746
          %2216 = vmatprep.subr.bf16.mxu0 %v1750
          %2217 = vmatpush1.bf16.msra.mxu0 %v1749
          %2218 = vmatprep.subr.bf16.mxu0 %v1753
          %2219 = vmatpush1.bf16.msra.mxu0 %v1752
          %2220 = vmatprep.subr.bf16.mxu0 0
          %2221 = vmatpush1.bf16.msra.mxu0 0
          %2222 = vmatprep.subr.bf16.mxu0 0
          %2223 = vmatpush1.bf16.msra.mxu0 0
          %2224 = vmatprep.subr.bf16.mxu0 0
          %2225 = vmatpush1.bf16.msra.mxu0 0
          %2226 = vmatprep.subr.bf16.mxu0 0
          %2227 = vmatpush1.bf16.msra.mxu0 0
          %2228 = vmatprep.subr.bf16.mxu0 0
          %2229 = vmatpush1.bf16.msra.mxu0 0
          %2230 = vmatprep.subr.bf16.mxu0 0
          %2231 = vmatpush1.bf16.msra.mxu0 0
          %2232 = vmatprep.subr.bf16.mxu0 0
          %2233 = vmatpush1.bf16.msra.mxu0 0
          %2234 = vmatprep.subr.bf16.mxu0 0
          %2235 = vmatpush1.bf16.msra.mxu0 0
          %2236 = vmatprep.mubr.bf16.mxu0 0
          %2237 = vmatmul.mubr.bf16.gmra.mrb[0].mxu0 %v2203
          %v2238 = vpop.f32.mrb[0].mxu0
          %v2239 = vadd.f32 %v1383, %v2238
          %v2240 = vpop.f32.mrb[0].mxu0
          %v2241 = vadd.f32 %v1387, %v2240
          %v2242 = vpop.f32.mrb[0].mxu0
          %v2243 = vpop.f32.mrb[0].mxu0
          %2244 = vdwg.mxu0
          %2245 = vmatprep.subr.bf16.mxu0 0
          %2246 = vmatpush1.bf16.msra.mxu0 %v1733
          %2247 = vmatprep.subr.bf16.mxu0 0
          %2248 = vmatpush1.bf16.msra.mxu0 %v1736
          %2249 = vmatprep.subr.bf16.mxu0 0
          %2250 = vmatpush1.bf16.msra.mxu0 %v1739
          %2251 = vmatprep.subr.bf16.mxu0 0
          %2252 = vmatpush1.bf16.msra.mxu0 %v1742
          %2253 = vmatprep.subr.bf16.mxu0 0
          %2254 = vmatpush1.bf16.msra.mxu0 %v1745
          %2255 = vmatprep.subr.bf16.mxu0 0
          %2256 = vmatpush1.bf16.msra.mxu0 %v1748
          %2257 = vmatprep.subr.bf16.mxu0 0
          %2258 = vmatpush1.bf16.msra.mxu0 %v1751
          %2259 = vmatprep.subr.bf16.mxu0 0
          %2260 = vmatpush1.bf16.msra.mxu0 %v1754
          %2261 = vmatprep.subr.bf16.mxu0 0
          %2262 = vmatpush1.bf16.msra.mxu0 0
          %2263 = vmatprep.subr.bf16.mxu0 0
          %2264 = vmatpush1.bf16.msra.mxu0 0
          %2265 = vmatprep.subr.bf16.mxu0 0
          %2266 = vmatpush1.bf16.msra.mxu0 0
          %2267 = vmatprep.subr.bf16.mxu0 0
          %2268 = vmatpush1.bf16.msra.mxu0 0
          %2269 = vmatprep.subr.bf16.mxu0 0
          %2270 = vmatpush1.bf16.msra.mxu0 0
          %2271 = vmatprep.subr.bf16.mxu0 0
          %2272 = vmatpush1.bf16.msra.mxu0 0
          %2273 = vmatprep.subr.bf16.mxu0 0
          %2274 = vmatpush1.bf16.msra.mxu0 0
          %2275 = vmatprep.subr.bf16.mxu0 0
          %2276 = vmatpush1.bf16.msra.mxu0 0
          %2277 = vmatprep.mubr.bf16.mxu0 0
          %2278 = vmatmul.mubr.bf16.gmra.mrb[0].mxu0 %v2203
          %v2279 = vpop.f32.mrb[0].mxu0
          %v2280 = vadd.f32 %v1391, %v2279
          %v2281 = vpop.f32.mrb[0].mxu0
          %v2282 = vpop.f32.mrb[0].mxu0
          %v2283 = vpop.f32.mrb[0].mxu0
          %2284 = vdwg.mxu0
          %v2285 = vpack.c.bf16 %v2202, %v2202
          %2286 = vmatprep.subr.bf16.mxu0 %v1942
          %2287 = vmatpush1.bf16.msra.mxu0 %v1941
          %2288 = vmatprep.subr.bf16.mxu0 %v1945
          %2289 = vmatpush1.bf16.msra.mxu0 %v1944
          %2290 = vmatprep.subr.bf16.mxu0 %v1948
          %2291 = vmatpush1.bf16.msra.mxu0 %v1947
          %2292 = vmatprep.subr.bf16.mxu0 %v1951
          %2293 = vmatpush1.bf16.msra.mxu0 %v1950
          %2294 = vmatprep.subr.bf16.mxu0 %v1954
          %2295 = vmatpush1.bf16.msra.mxu0 %v1953
          %2296 = vmatprep.subr.bf16.mxu0 %v1957
          %2297 = vmatpush1.bf16.msra.mxu0 %v1956
          %2298 = vmatprep.subr.bf16.mxu0 %v1960
          %2299 = vmatpush1.bf16.msra.mxu0 %v1959
          %2300 = vmatprep.subr.bf16.mxu0 %v1963
          %2301 = vmatpush1.bf16.msra.mxu0 %v1962
          %2302 = vmatprep.subr.bf16.mxu0 0
          %2303 = vmatpush1.bf16.msra.mxu0 0
          %2304 = vmatprep.subr.bf16.mxu0 0
          %2305 = vmatpush1.bf16.msra.mxu0 0
          %2306 = vmatprep.subr.bf16.mxu0 0
          %2307 = vmatpush1.bf16.msra.mxu0 0
          %2308 = vmatprep.subr.bf16.mxu0 0
          %2309 = vmatpush1.bf16.msra.mxu0 0
          %2310 = vmatprep.subr.bf16.mxu0 0
          %2311 = vmatpush1.bf16.msra.mxu0 0
          %2312 = vmatprep.subr.bf16.mxu0 0
          %2313 = vmatpush1.bf16.msra.mxu0 0
          %2314 = vmatprep.subr.bf16.mxu0 0
          %2315 = vmatpush1.bf16.msra.mxu0 0
          %2316 = vmatprep.subr.bf16.mxu0 0
          %2317 = vmatpush1.bf16.msra.mxu0 0
          %2318 = vmatprep.mubr.bf16.mxu0 0
          %2319 = vmatmul.mubr.bf16.gmra.mrb[0].mxu0 %v2285
          %v2320 = vpop.f32.mrb[0].mxu0
          %v2321 = vadd.f32 %v1400, %v2320
          %v2322 = vpop.f32.mrb[0].mxu0
          %v2323 = vadd.f32 %v1404, %v2322
          %v2324 = vpop.f32.mrb[0].mxu0
          %v2325 = vpop.f32.mrb[0].mxu0
          %2326 = vdwg.mxu0
          %2327 = vmatprep.subr.bf16.mxu0 0
          %2328 = vmatpush1.bf16.msra.mxu0 %v1943
          %2329 = vmatprep.subr.bf16.mxu0 0
          %2330 = vmatpush1.bf16.msra.mxu0 %v1946
          %2331 = vmatprep.subr.bf16.mxu0 0
          %2332 = vmatpush1.bf16.msra.mxu0 %v1949
          %2333 = vmatprep.subr.bf16.mxu0 0
          %2334 = vmatpush1.bf16.msra.mxu0 %v1952
          %2335 = vmatprep.subr.bf16.mxu0 0
          %2336 = vmatpush1.bf16.msra.mxu0 %v1955
          %2337 = vmatprep.subr.bf16.mxu0 0
          %2338 = vmatpush1.bf16.msra.mxu0 %v1958
          %2339 = vmatprep.subr.bf16.mxu0 0
          %2340 = vmatpush1.bf16.msra.mxu0 %v1961
          %2341 = vmatprep.subr.bf16.mxu0 0
          %2342 = vmatpush1.bf16.msra.mxu0 %v1964
          %2343 = vmatprep.subr.bf16.mxu0 0
          %2344 = vmatpush1.bf16.msra.mxu0 0
          %2345 = vmatprep.subr.bf16.mxu0 0
          %2346 = vmatpush1.bf16.msra.mxu0 0
          %2347 = vmatprep.subr.bf16.mxu0 0
          %2348 = vmatpush1.bf16.msra.mxu0 0
          %2349 = vmatprep.subr.bf16.mxu0 0
          %2350 = vmatpush1.bf16.msra.mxu0 0
          %2351 = vmatprep.subr.bf16.mxu0 0
          %2352 = vmatpush1.bf16.msra.mxu0 0
          %2353 = vmatprep.subr.bf16.mxu0 0
          %2354 = vmatpush1.bf16.msra.mxu0 0
          %2355 = vmatprep.subr.bf16.mxu0 0
          %2356 = vmatpush1.bf16.msra.mxu0 0
          %2357 = vmatprep.subr.bf16.mxu0 0
          %2358 = vmatpush1.bf16.msra.mxu0 0
          %2359 = vmatprep.mubr.bf16.mxu0 0
          %2360 = vmatmul.mubr.bf16.gmra.mrb[0].mxu0 %v2285
          %v2361 = vpop.f32.mrb[0].mxu0
          %v2362 = vadd.f32 %v1408, %v2361
          %v2363 = vpop.f32.mrb[0].mxu0
          %v2364 = vpop.f32.mrb[0].mxu0
          %v2365 = vpop.f32.mrb[0].mxu0
          %2366 = vdwg.mxu0
          %v2367 = vadd.f32 %v2239, %v2321
          %v2368 = vxor.u32 %v2367, 2147483648
          %v2369 = vmul.f32 %v2368, 1.442695
          %v2370 = vpow.pop %v2369
          %v2371 = vadd.f32 %v2370, 1.0
          %v2372 = vrcp.pop %v2371
          %v2373 = vmul.f32 1.0, %v2372
          %v2374 = vadd.f32 %v2241, %v2323
          %v2375 = vxor.u32 %v2374, 2147483648
          %v2376 = vmul.f32 %v2375, 1.442695
          %v2377 = vpow.pop %v2376
          %v2378 = vadd.f32 %v2377, 1.0
          %v2379 = vrcp.pop %v2378
          %v2380 = vmul.f32 1.0, %v2379
          %v2381 = vmul.f32 %v2373, %v2362
          %v2382 = vadd.f32 %v2280, %v2381
          %v2383 = vtanh.pop %v2382
          %v2384 = vsub.f32 1.0, %v2380
          %v2385 = vmul.f32 %v2384, %v2383
          %v2386 = vmul.f32 %v2380, %v2202
          %v2387 = vadd.f32 %v2385, %v2386
          %2388 = vst [vmem:[%s1648] sm:$0xff] %v2387
          %s2389 = scalar_lea.vmem [#allocation3], 8
          %2390 = vst [vmem:[%s2389] sm:$0xff] %v2387
          %v2391 = vld [vmem:[#allocation2] sm:$0xff]
          %s2392 = scalar_lea.vmem [#allocation4], 48
          %v2393 = vld [vmem:[%s2392] sm:$0xff]
          %v2394 = vld [vmem:[%s2392 + $0x8] sm:$0xff]
          %v2395 = vld [vmem:[%s2392 + $0x10] sm:$0xff]
          %v2396 = vpack.c.bf16 %v2391, %v2391
          %2397 = vmatprep.subr.bf16.mxu0 %v1498
          %2398 = vmatpush1.bf16.msra.mxu0 %v1497
          %2399 = vmatprep.subr.bf16.mxu0 %v1501
          %2400 = vmatpush1.bf16.msra.mxu0 %v1500
          %2401 = vmatprep.subr.bf16.mxu0 %v1504
          %2402 = vmatpush1.bf16.msra.mxu0 %v1503
          %2403 = vmatprep.subr.bf16.mxu0 %v1507
          %2404 = vmatpush1.bf16.msra.mxu0 %v1506
          %2405 = vmatprep.subr.bf16.mxu0 %v1510
          %2406 = vmatpush1.bf16.msra.mxu0 %v1509
          %2407 = vmatprep.subr.bf16.mxu0 %v1513
          %2408 = vmatpush1.bf16.msra.mxu0 %v1512
          %2409 = vmatprep.subr.bf16.mxu0 %v1516
          %2410 = vmatpush1.bf16.msra.mxu0 %v1515
          %2411 = vmatprep.subr.bf16.mxu0 %v1519
          %2412 = vmatpush1.bf16.msra.mxu0 %v1518
          %2413 = vmatprep.subr.bf16.mxu0 0
          %2414 = vmatpush1.bf16.msra.mxu0 0
          %2415 = vmatprep.subr.bf16.mxu0 0
          %2416 = vmatpush1.bf16.msra.mxu0 0
          %2417 = vmatprep.subr.bf16.mxu0 0
          %2418 = vmatpush1.bf16.msra.mxu0 0
          %2419 = vmatprep.subr.bf16.mxu0 0
          %2420 = vmatpush1.bf16.msra.mxu0 0
          %2421 = vmatprep.subr.bf16.mxu0 0
          %2422 = vmatpush1.bf16.msra.mxu0 0
          %2423 = vmatprep.subr.bf16.mxu0 0
          %2424 = vmatpush1.bf16.msra.mxu0 0
          %2425 = vmatprep.subr.bf16.mxu0 0
          %2426 = vmatpush1.bf16.msra.mxu0 0
          %2427 = vmatprep.subr.bf16.mxu0 0
          %2428 = vmatpush1.bf16.msra.mxu0 0
          %2429 = vmatprep.mubr.bf16.mxu0 0
          %2430 = vmatmul.mubr.bf16.gmra.mrb[0].mxu0 %v2396
          %v2431 = vpop.f32.mrb[0].mxu0
          %v2432 = vadd.f32 %v1302, %v2431
          %v2433 = vpop.f32.mrb[0].mxu0
          %v2434 = vadd.f32 %v1306, %v2433
          %v2435 = vpop.f32.mrb[0].mxu0
          %v2436 = vpop.f32.mrb[0].mxu0
          %2437 = vdwg.mxu0
          %2438 = vmatprep.subr.bf16.mxu0 0
          %2439 = vmatpush1.bf16.msra.mxu0 %v1499
          %2440 = vmatprep.subr.bf16.mxu0 0
          %2441 = vmatpush1.bf16.msra.mxu0 %v1502
          %2442 = vmatprep.subr.bf16.mxu0 0
          %2443 = vmatpush1.bf16.msra.mxu0 %v1505
          %2444 = vmatprep.subr.bf16.mxu0 0
          %2445 = vmatpush1.bf16.msra.mxu0 %v1508
          %2446 = vmatprep.subr.bf16.mxu0 0
          %2447 = vmatpush1.bf16.msra.mxu0 %v1511
          %2448 = vmatprep.subr.bf16.mxu0 0
          %2449 = vmatpush1.bf16.msra.mxu0 %v1514
          %2450 = vmatprep.subr.bf16.mxu0 0
          %2451 = vmatpush1.bf16.msra.mxu0 %v1517
          %2452 = vmatprep.subr.bf16.mxu0 0
          %2453 = vmatpush1.bf16.msra.mxu0 %v1520
          %2454 = vmatprep.subr.bf16.mxu0 0
          %2455 = vmatpush1.bf16.msra.mxu0 0
          %2456 = vmatprep.subr.bf16.mxu0 0
          %2457 = vmatpush1.bf16.msra.mxu0 0
          %2458 = vmatprep.subr.bf16.mxu0 0
          %2459 = vmatpush1.bf16.msra.mxu0 0
          %2460 = vmatprep.subr.bf16.mxu0 0
          %2461 = vmatpush1.bf16.msra.mxu0 0
          %2462 = vmatprep.subr.bf16.mxu0 0
          %2463 = vmatpush1.bf16.msra.mxu0 0
          %2464 = vmatprep.subr.bf16.mxu0 0
          %2465 = vmatpush1.bf16.msra.mxu0 0
          %2466 = vmatprep.subr.bf16.mxu0 0
          %2467 = vmatpush1.bf16.msra.mxu0 0
          %2468 = vmatprep.subr.bf16.mxu0 0
          %2469 = vmatpush1.bf16.msra.mxu0 0
          %2470 = vmatprep.mubr.bf16.mxu0 0
          %2471 = vmatmul.mubr.bf16.gmra.mrb[0].mxu0 %v2396
          %v2472 = vpop.f32.mrb[0].mxu0
          %v2473 = vadd.f32 %v1310, %v2472
          %v2474 = vpop.f32.mrb[0].mxu0
          %v2475 = vpop.f32.mrb[0].mxu0
          %v2476 = vpop.f32.mrb[0].mxu0
          %2477 = vdwg.mxu0
          %v2478 = vadd.f32 %v2393, %v2432
          %v2479 = vxor.u32 %v2478, 2147483648
          %v2480 = vmul.f32 %v2479, 1.442695
          %v2481 = vpow.pop %v2480
          %v2482 = vadd.f32 %v2481, 1.0
          %v2483 = vrcp.pop %v2482
          %v2484 = vmul.f32 1.0, %v2483
          %v2485 = vadd.f32 %v2394, %v2434
          %v2486 = vxor.u32 %v2485, 2147483648
          %v2487 = vmul.f32 %v2486, 1.442695
          %v2488 = vpow.pop %v2487
          %v2489 = vadd.f32 %v2488, 1.0
          %v2490 = vrcp.pop %v2489
          %v2491 = vmul.f32 1.0, %v2490
          %v2492 = vmul.f32 %v2484, %v2473
          %v2493 = vadd.f32 %v2395, %v2492
          %v2494 = vtanh.pop %v2493
          %v2495 = vsub.f32 1.0, %v2491
          %v2496 = vmul.f32 %v2495, %v2494
          %v2497 = vmul.f32 %v2491, %v2391
          %v2498 = vadd.f32 %v2496, %v2497
          %2499 = vst [vmem:[#allocation2] sm:$0xff] %v2498
          %v2500 = vld [vmem:[%s1648] sm:$0xff]
          %v2501 = vpack.c.bf16 %v2498, %v2498
          %2502 = vmatprep.subr.bf16.mxu0 %v1732
          %2503 = vmatpush1.bf16.msra.mxu0 %v1731
          %2504 = vmatprep.subr.bf16.mxu0 %v1735
          %2505 = vmatpush1.bf16.msra.mxu0 %v1734
          %2506 = vmatprep.subr.bf16.mxu0 %v1738
          %2507 = vmatpush1.bf16.msra.mxu0 %v1737
          %2508 = vmatprep.subr.bf16.mxu0 %v1741
          %2509 = vmatpush1.bf16.msra.mxu0 %v1740
          %2510 = vmatprep.subr.bf16.mxu0 %v1744
          %2511 = vmatpush1.bf16.msra.mxu0 %v1743
          %2512 = vmatprep.subr.bf16.mxu0 %v1747
          %2513 = vmatpush1.bf16.msra.mxu0 %v1746
          %2514 = vmatprep.subr.bf16.mxu0 %v1750
          %2515 = vmatpush1.bf16.msra.mxu0 %v1749
          %2516 = vmatprep.subr.bf16.mxu0 %v1753
          %2517 = vmatpush1.bf16.msra.mxu0 %v1752
          %2518 = vmatprep.subr.bf16.mxu0 0
          %2519 = vmatpush1.bf16.msra.mxu0 0
          %2520 = vmatprep.subr.bf16.mxu0 0
          %2521 = vmatpush1.bf16.msra.mxu0 0
          %2522 = vmatprep.subr.bf16.mxu0 0
          %2523 = vmatpush1.bf16.msra.mxu0 0
          %2524 = vmatprep.subr.bf16.mxu0 0
          %2525 = vmatpush1.bf16.msra.mxu0 0
          %2526 = vmatprep.subr.bf16.mxu0 0
          %2527 = vmatpush1.bf16.msra.mxu0 0
          %2528 = vmatprep.subr.bf16.mxu0 0
          %2529 = vmatpush1.bf16.msra.mxu0 0
          %2530 = vmatprep.subr.bf16.mxu0 0
          %2531 = vmatpush1.bf16.msra.mxu0 0
          %2532 = vmatprep.subr.bf16.mxu0 0
          %2533 = vmatpush1.bf16.msra.mxu0 0
          %2534 = vmatprep.mubr.bf16.mxu0 0
          %2535 = vmatmul.mubr.bf16.gmra.mrb[0].mxu0 %v2501
          %v2536 = vpop.f32.mrb[0].mxu0
          %v2537 = vadd.f32 %v1383, %v2536
          %v2538 = vpop.f32.mrb[0].mxu0
          %v2539 = vadd.f32 %v1387, %v2538
          %v2540 = vpop.f32.mrb[0].mxu0
          %v2541 = vpop.f32.mrb[0].mxu0
          %2542 = vdwg.mxu0
          %2543 = vmatprep.subr.bf16.mxu0 0
          %2544 = vmatpush1.bf16.msra.mxu0 %v1733
          %2545 = vmatprep.subr.bf16.mxu0 0
          %2546 = vmatpush1.bf16.msra.mxu0 %v1736
          %2547 = vmatprep.subr.bf16.mxu0 0
          %2548 = vmatpush1.bf16.msra.mxu0 %v1739
          %2549 = vmatprep.subr.bf16.mxu0 0
          %2550 = vmatpush1.bf16.msra.mxu0 %v1742
          %2551 = vmatprep.subr.bf16.mxu0 0
          %2552 = vmatpush1.bf16.msra.mxu0 %v1745
          %2553 = vmatprep.subr.bf16.mxu0 0
          %2554 = vmatpush1.bf16.msra.mxu0 %v1748
          %2555 = vmatprep.subr.bf16.mxu0 0
          %2556 = vmatpush1.bf16.msra.mxu0 %v1751
          %2557 = vmatprep.subr.bf16.mxu0 0
          %2558 = vmatpush1.bf16.msra.mxu0 %v1754
          %2559 = vmatprep.subr.bf16.mxu0 0
          %2560 = vmatpush1.bf16.msra.mxu0 0
          %2561 = vmatprep.subr.bf16.mxu0 0
          %2562 = vmatpush1.bf16.msra.mxu0 0
          %2563 = vmatprep.subr.bf16.mxu0 0
          %2564 = vmatpush1.bf16.msra.mxu0 0
          %2565 = vmatprep.subr.bf16.mxu0 0
          %2566 = vmatpush1.bf16.msra.mxu0 0
          %2567 = vmatprep.subr.bf16.mxu0 0
          %2568 = vmatpush1.bf16.msra.mxu0 0
          %2569 = vmatprep.subr.bf16.mxu0 0
          %2570 = vmatpush1.bf16.msra.mxu0 0
          %2571 = vmatprep.subr.bf16.mxu0 0
          %2572 = vmatpush1.bf16.msra.mxu0 0
          %2573 = vmatprep.subr.bf16.mxu0 0
          %2574 = vmatpush1.bf16.msra.mxu0 0
          %2575 = vmatprep.mubr.bf16.mxu0 0
          %2576 = vmatmul.mubr.bf16.gmra.mrb[0].mxu0 %v2501
          %v2577 = vpop.f32.mrb[0].mxu0
          %v2578 = vadd.f32 %v1391, %v2577
          %v2579 = vpop.f32.mrb[0].mxu0
          %v2580 = vpop.f32.mrb[0].mxu0
          %v2581 = vpop.f32.mrb[0].mxu0
          %2582 = vdwg.mxu0
          %v2583 = vpack.c.bf16 %v2500, %v2500
          %2584 = vmatprep.subr.bf16.mxu0 %v1942
          %2585 = vmatpush1.bf16.msra.mxu0 %v1941
          %2586 = vmatprep.subr.bf16.mxu0 %v1945
          %2587 = vmatpush1.bf16.msra.mxu0 %v1944
          %2588 = vmatprep.subr.bf16.mxu0 %v1948
          %2589 = vmatpush1.bf16.msra.mxu0 %v1947
          %2590 = vmatprep.subr.bf16.mxu0 %v1951
          %2591 = vmatpush1.bf16.msra.mxu0 %v1950
          %2592 = vmatprep.subr.bf16.mxu0 %v1954
          %2593 = vmatpush1.bf16.msra.mxu0 %v1953
          %2594 = vmatprep.subr.bf16.mxu0 %v1957
          %2595 = vmatpush1.bf16.msra.mxu0 %v1956
          %2596 = vmatprep.subr.bf16.mxu0 %v1960
          %2597 = vmatpush1.bf16.msra.mxu0 %v1959
          %2598 = vmatprep.subr.bf16.mxu0 %v1963
          %2599 = vmatpush1.bf16.msra.mxu0 %v1962
          %2600 = vmatprep.subr.bf16.mxu0 0
          %2601 = vmatpush1.bf16.msra.mxu0 0
          %2602 = vmatprep.subr.bf16.mxu0 0
          %2603 = vmatpush1.bf16.msra.mxu0 0
          %2604 = vmatprep.subr.bf16.mxu0 0
          %2605 = vmatpush1.bf16.msra.mxu0 0
          %2606 = vmatprep.subr.bf16.mxu0 0
          %2607 = vmatpush1.bf16.msra.mxu0 0
          %2608 = vmatprep.subr.bf16.mxu0 0
          %2609 = vmatpush1.bf16.msra.mxu0 0
          %2610 = vmatprep.subr.bf16.mxu0 0
          %2611 = vmatpush1.bf16.msra.mxu0 0
          %2612 = vmatprep.subr.bf16.mxu0 0
          %2613 = vmatpush1.bf16.msra.mxu0 0
          %2614 = vmatprep.subr.bf16.mxu0 0
          %2615 = vmatpush1.bf16.msra.mxu0 0
          %2616 = vmatprep.mubr.bf16.mxu0 0
          %2617 = vmatmul.mubr.bf16.gmra.mrb[0].mxu0 %v2583
          %v2618 = vpop.f32.mrb[0].mxu0
          %v2619 = vadd.f32 %v1400, %v2618
          %v2620 = vpop.f32.mrb[0].mxu0
          %v2621 = vadd.f32 %v1404, %v2620
          %v2622 = vpop.f32.mrb[0].mxu0
          %v2623 = vpop.f32.mrb[0].mxu0
          %2624 = vdwg.mxu0
          %2625 = vmatprep.subr.bf16.mxu0 0
          %2626 = vmatpush1.bf16.msra.mxu0 %v1943
          %2627 = vmatprep.subr.bf16.mxu0 0
          %2628 = vmatpush1.bf16.msra.mxu0 %v1946
          %2629 = vmatprep.subr.bf16.mxu0 0
          %2630 = vmatpush1.bf16.msra.mxu0 %v1949
          %2631 = vmatprep.subr.bf16.mxu0 0
          %2632 = vmatpush1.bf16.msra.mxu0 %v1952
          %2633 = vmatprep.subr.bf16.mxu0 0
          %2634 = vmatpush1.bf16.msra.mxu0 %v1955
          %2635 = vmatprep.subr.bf16.mxu0 0
          %2636 = vmatpush1.bf16.msra.mxu0 %v1958
          %2637 = vmatprep.subr.bf16.mxu0 0
          %2638 = vmatpush1.bf16.msra.mxu0 %v1961
          %2639 = vmatprep.subr.bf16.mxu0 0
          %2640 = vmatpush1.bf16.msra.mxu0 %v1964
          %2641 = vmatprep.subr.bf16.mxu0 0
          %2642 = vmatpush1.bf16.msra.mxu0 0
          %2643 = vmatprep.subr.bf16.mxu0 0
          %2644 = vmatpush1.bf16.msra.mxu0 0
          %2645 = vmatprep.subr.bf16.mxu0 0
          %2646 = vmatpush1.bf16.msra.mxu0 0
          %2647 = vmatprep.subr.bf16.mxu0 0
          %2648 = vmatpush1.bf16.msra.mxu0 0
          %2649 = vmatprep.subr.bf16.mxu0 0
          %2650 = vmatpush1.bf16.msra.mxu0 0
          %2651 = vmatprep.subr.bf16.mxu0 0
          %2652 = vmatpush1.bf16.msra.mxu0 0
          %2653 = vmatprep.subr.bf16.mxu0 0
          %2654 = vmatpush1.bf16.msra.mxu0 0
          %2655 = vmatprep.subr.bf16.mxu0 0
          %2656 = vmatpush1.bf16.msra.mxu0 0
          %2657 = vmatprep.mubr.bf16.mxu0 0
          %2658 = vmatmul.mubr.bf16.gmra.mrb[0].mxu0 %v2583
          %v2659 = vpop.f32.mrb[0].mxu0
          %v2660 = vadd.f32 %v1408, %v2659
          %v2661 = vpop.f32.mrb[0].mxu0
          %v2662 = vpop.f32.mrb[0].mxu0
          %v2663 = vpop.f32.mrb[0].mxu0
          %2664 = vdwg.mxu0
          %v2665 = vadd.f32 %v2537, %v2619
          %v2666 = vxor.u32 %v2665, 2147483648
          %v2667 = vmul.f32 %v2666, 1.442695
          %v2668 = vpow.pop %v2667
          %v2669 = vadd.f32 %v2668, 1.0
          %v2670 = vrcp.pop %v2669
          %v2671 = vmul.f32 1.0, %v2670
          %v2672 = vadd.f32 %v2539, %v2621
          %v2673 = vxor.u32 %v2672, 2147483648
          %v2674 = vmul.f32 %v2673, 1.442695
          %v2675 = vpow.pop %v2674
          %v2676 = vadd.f32 %v2675, 1.0
          %v2677 = vrcp.pop %v2676
          %v2678 = vmul.f32 1.0, %v2677
          %v2679 = vmul.f32 %v2671, %v2660
          %v2680 = vadd.f32 %v2578, %v2679
          %v2681 = vtanh.pop %v2680
          %v2682 = vsub.f32 1.0, %v2678
          %v2683 = vmul.f32 %v2682, %v2681
          %v2684 = vmul.f32 %v2678, %v2500
          %v2685 = vadd.f32 %v2683, %v2684
          %2686 = vst [vmem:[%s1648] sm:$0xff] %v2685
          %s2687 = scalar_lea.vmem [#allocation3], 16
          %2688 = vst [vmem:[%s2687] sm:$0xff] %v2685
          %v2689 = vld [vmem:[#allocation2] sm:$0xff]
          %s2690 = scalar_lea.vmem [#allocation4], 72
          %v2691 = vld [vmem:[%s2690] sm:$0xff]
          %v2692 = vld [vmem:[%s2690 + $0x8] sm:$0xff]
          %v2693 = vld [vmem:[%s2690 + $0x10] sm:$0xff]
          %v2694 = vpack.c.bf16 %v2689, %v2689
          %2695 = vmatprep.subr.bf16.mxu0 %v1498
          %2696 = vmatpush1.bf16.msra.mxu0 %v1497
          %2697 = vmatprep.subr.bf16.mxu0 %v1501
          %2698 = vmatpush1.bf16.msra.mxu0 %v1500
          %2699 = vmatprep.subr.bf16.mxu0 %v1504
          %2700 = vmatpush1.bf16.msra.mxu0 %v1503
          %2701 = vmatprep.subr.bf16.mxu0 %v1507
          %2702 = vmatpush1.bf16.msra.mxu0 %v1506
          %2703 = vmatprep.subr.bf16.mxu0 %v1510
          %2704 = vmatpush1.bf16.msra.mxu0 %v1509
          %2705 = vmatprep.subr.bf16.mxu0 %v1513
          %2706 = vmatpush1.bf16.msra.mxu0 %v1512
          %2707 = vmatprep.subr.bf16.mxu0 %v1516
          %2708 = vmatpush1.bf16.msra.mxu0 %v1515
          %2709 = vmatprep.subr.bf16.mxu0 %v1519
          %2710 = vmatpush1.bf16.msra.mxu0 %v1518
          %2711 = vmatprep.subr.bf16.mxu0 0
          %2712 = vmatpush1.bf16.msra.mxu0 0
          %2713 = vmatprep.subr.bf16.mxu0 0
          %2714 = vmatpush1.bf16.msra.mxu0 0
          %2715 = vmatprep.subr.bf16.mxu0 0
          %2716 = vmatpush1.bf16.msra.mxu0 0
          %2717 = vmatprep.subr.bf16.mxu0 0
          %2718 = vmatpush1.bf16.msra.mxu0 0
          %2719 = vmatprep.subr.bf16.mxu0 0
          %2720 = vmatpush1.bf16.msra.mxu0 0
          %2721 = vmatprep.subr.bf16.mxu0 0
          %2722 = vmatpush1.bf16.msra.mxu0 0
          %2723 = vmatprep.subr.bf16.mxu0 0
          %2724 = vmatpush1.bf16.msra.mxu0 0
          %2725 = vmatprep.subr.bf16.mxu0 0
          %2726 = vmatpush1.bf16.msra.mxu0 0
          %2727 = vmatprep.mubr.bf16.mxu0 0
          %2728 = vmatmul.mubr.bf16.gmra.mrb[0].mxu0 %v2694
          %v2729 = vpop.f32.mrb[0].mxu0
          %v2730 = vadd.f32 %v1302, %v2729
          %v2731 = vpop.f32.mrb[0].mxu0
          %v2732 = vadd.f32 %v1306, %v2731
          %v2733 = vpop.f32.mrb[0].mxu0
          %v2734 = vpop.f32.mrb[0].mxu0
          %2735 = vdwg.mxu0
          %2736 = vmatprep.subr.bf16.mxu0 0
          %2737 = vmatpush1.bf16.msra.mxu0 %v1499
          %2738 = vmatprep.subr.bf16.mxu0 0
          %2739 = vmatpush1.bf16.msra.mxu0 %v1502
          %2740 = vmatprep.subr.bf16.mxu0 0
          %2741 = vmatpush1.bf16.msra.mxu0 %v1505
          %2742 = vmatprep.subr.bf16.mxu0 0
          %2743 = vmatpush1.bf16.msra.mxu0 %v1508
          %2744 = vmatprep.subr.bf16.mxu0 0
          %2745 = vmatpush1.bf16.msra.mxu0 %v1511
          %2746 = vmatprep.subr.bf16.mxu0 0
          %2747 = vmatpush1.bf16.msra.mxu0 %v1514
          %2748 = vmatprep.subr.bf16.mxu0 0
          %2749 = vmatpush1.bf16.msra.mxu0 %v1517
          %2750 = vmatprep.subr.bf16.mxu0 0
          %2751 = vmatpush1.bf16.msra.mxu0 %v1520
          %2752 = vmatprep.subr.bf16.mxu0 0
          %2753 = vmatpush1.bf16.msra.mxu0 0
          %2754 = vmatprep.subr.bf16.mxu0 0
          %2755 = vmatpush1.bf16.msra.mxu0 0
          %2756 = vmatprep.subr.bf16.mxu0 0
          %2757 = vmatpush1.bf16.msra.mxu0 0
          %2758 = vmatprep.subr.bf16.mxu0 0
          %2759 = vmatpush1.bf16.msra.mxu0 0
          %2760 = vmatprep.subr.bf16.mxu0 0
          %2761 = vmatpush1.bf16.msra.mxu0 0
          %2762 = vmatprep.subr.bf16.mxu0 0
          %2763 = vmatpush1.bf16.msra.mxu0 0
          %2764 = vmatprep.subr.bf16.mxu0 0
          %2765 = vmatpush1.bf16.msra.mxu0 0
          %2766 = vmatprep.subr.bf16.mxu0 0
          %2767 = vmatpush1.bf16.msra.mxu0 0
          %2768 = vmatprep.mubr.bf16.mxu0 0
          %2769 = vmatmul.mubr.bf16.gmra.mrb[0].mxu0 %v2694
          %v2770 = vpop.f32.mrb[0].mxu0
          %v2771 = vadd.f32 %v1310, %v2770
          %v2772 = vpop.f32.mrb[0].mxu0
          %v2773 = vpop.f32.mrb[0].mxu0
          %v2774 = vpop.f32.mrb[0].mxu0
          %2775 = vdwg.mxu0
          %v2776 = vadd.f32 %v2691, %v2730
          %v2777 = vxor.u32 %v2776, 2147483648
          %v2778 = vmul.f32 %v2777, 1.442695
          %v2779 = vpow.pop %v2778
          %v2780 = vadd.f32 %v2779, 1.0
          %v2781 = vrcp.pop %v2780
          %v2782 = vmul.f32 1.0, %v2781
          %v2783 = vadd.f32 %v2692, %v2732
          %v2784 = vxor.u32 %v2783, 2147483648
          %v2785 = vmul.f32 %v2784, 1.442695
          %v2786 = vpow.pop %v2785
          %v2787 = vadd.f32 %v2786, 1.0
          %v2788 = vrcp.pop %v2787
          %v2789 = vmul.f32 1.0, %v2788
          %v2790 = vmul.f32 %v2782, %v2771
          %v2791 = vadd.f32 %v2693, %v2790
          %v2792 = vtanh.pop %v2791
          %v2793 = vsub.f32 1.0, %v2789
          %v2794 = vmul.f32 %v2793, %v2792
          %v2795 = vmul.f32 %v2789, %v2689
          %v2796 = vadd.f32 %v2794, %v2795
          %2797 = vst [vmem:[#allocation2] sm:$0xff] %v2796
          %v2798 = vld [vmem:[%s1648] sm:$0xff]
          %v2799 = vpack.c.bf16 %v2796, %v2796
          %2800 = vmatprep.subr.bf16.mxu0 %v1732
          %2801 = vmatpush1.bf16.msra.mxu0 %v1731
          %2802 = vmatprep.subr.bf16.mxu0 %v1735
          %2803 = vmatpush1.bf16.msra.mxu0 %v1734
          %2804 = vmatprep.subr.bf16.mxu0 %v1738
          %2805 = vmatpush1.bf16.msra.mxu0 %v1737
          %2806 = vmatprep.subr.bf16.mxu0 %v1741
          %2807 = vmatpush1.bf16.msra.mxu0 %v1740
          %2808 = vmatprep.subr.bf16.mxu0 %v1744
          %2809 = vmatpush1.bf16.msra.mxu0 %v1743
          %2810 = vmatprep.subr.bf16.mxu0 %v1747
          %2811 = vmatpush1.bf16.msra.mxu0 %v1746
          %2812 = vmatprep.subr.bf16.mxu0 %v1750
          %2813 = vmatpush1.bf16.msra.mxu0 %v1749
          %2814 = vmatprep.subr.bf16.mxu0 %v1753
          %2815 = vmatpush1.bf16.msra.mxu0 %v1752
          %2816 = vmatprep.subr.bf16.mxu0 0
          %2817 = vmatpush1.bf16.msra.mxu0 0
          %2818 = vmatprep.subr.bf16.mxu0 0
          %2819 = vmatpush1.bf16.msra.mxu0 0
          %2820 = vmatprep.subr.bf16.mxu0 0
          %2821 = vmatpush1.bf16.msra.mxu0 0
          %2822 = vmatprep.subr.bf16.mxu0 0
          %2823 = vmatpush1.bf16.msra.mxu0 0
          %2824 = vmatprep.subr.bf16.mxu0 0
          %2825 = vmatpush1.bf16.msra.mxu0 0
          %2826 = vmatprep.subr.bf16.mxu0 0
          %2827 = vmatpush1.bf16.msra.mxu0 0
          %2828 = vmatprep.subr.bf16.mxu0 0
          %2829 = vmatpush1.bf16.msra.mxu0 0
          %2830 = vmatprep.subr.bf16.mxu0 0
          %2831 = vmatpush1.bf16.msra.mxu0 0
          %2832 = vmatprep.mubr.bf16.mxu0 0
          %2833 = vmatmul.mubr.bf16.gmra.mrb[0].mxu0 %v2799
          %v2834 = vpop.f32.mrb[0].mxu0
          %v2835 = vadd.f32 %v1383, %v2834
          %v2836 = vpop.f32.mrb[0].mxu0
          %v2837 = vadd.f32 %v1387, %v2836
          %v2838 = vpop.f32.mrb[0].mxu0
          %v2839 = vpop.f32.mrb[0].mxu0
          %2840 = vdwg.mxu0
          %2841 = vmatprep.subr.bf16.mxu0 0
          %2842 = vmatpush1.bf16.msra.mxu0 %v1733
          %2843 = vmatprep.subr.bf16.mxu0 0
          %2844 = vmatpush1.bf16.msra.mxu0 %v1736
          %2845 = vmatprep.subr.bf16.mxu0 0
          %2846 = vmatpush1.bf16.msra.mxu0 %v1739
          %2847 = vmatprep.subr.bf16.mxu0 0
          %2848 = vmatpush1.bf16.msra.mxu0 %v1742
          %2849 = vmatprep.subr.bf16.mxu0 0
          %2850 = vmatpush1.bf16.msra.mxu0 %v1745
          %2851 = vmatprep.subr.bf16.mxu0 0
          %2852 = vmatpush1.bf16.msra.mxu0 %v1748
          %2853 = vmatprep.subr.bf16.mxu0 0
          %2854 = vmatpush1.bf16.msra.mxu0 %v1751
          %2855 = vmatprep.subr.bf16.mxu0 0
          %2856 = vmatpush1.bf16.msra.mxu0 %v1754
          %2857 = vmatprep.subr.bf16.mxu0 0
          %2858 = vmatpush1.bf16.msra.mxu0 0
          %2859 = vmatprep.subr.bf16.mxu0 0
          %2860 = vmatpush1.bf16.msra.mxu0 0
          %2861 = vmatprep.subr.bf16.mxu0 0
          %2862 = vmatpush1.bf16.msra.mxu0 0
          %2863 = vmatprep.subr.bf16.mxu0 0
          %2864 = vmatpush1.bf16.msra.mxu0 0
          %2865 = vmatprep.subr.bf16.mxu0 0
          %2866 = vmatpush1.bf16.msra.mxu0 0
          %2867 = vmatprep.subr.bf16.mxu0 0
          %2868 = vmatpush1.bf16.msra.mxu0 0
          %2869 = vmatprep.subr.bf16.mxu0 0
          %2870 = vmatpush1.bf16.msra.mxu0 0
          %2871 = vmatprep.subr.bf16.mxu0 0
          %2872 = vmatpush1.bf16.msra.mxu0 0
          %2873 = vmatprep.mubr.bf16.mxu0 0
          %2874 = vmatmul.mubr.bf16.gmra.mrb[0].mxu0 %v2799
          %v2875 = vpop.f32.mrb[0].mxu0
          %v2876 = vadd.f32 %v1391, %v2875
          %v2877 = vpop.f32.mrb[0].mxu0
          %v2878 = vpop.f32.mrb[0].mxu0
          %v2879 = vpop.f32.mrb[0].mxu0
          %2880 = vdwg.mxu0
          %v2881 = vpack.c.bf16 %v2798, %v2798
          %2882 = vmatprep.subr.bf16.mxu0 %v1942
          %2883 = vmatpush1.bf16.msra.mxu0 %v1941
          %2884 = vmatprep.subr.bf16.mxu0 %v1945
          %2885 = vmatpush1.bf16.msra.mxu0 %v1944
          %2886 = vmatprep.subr.bf16.mxu0 %v1948
          %2887 = vmatpush1.bf16.msra.mxu0 %v1947
          %2888 = vmatprep.subr.bf16.mxu0 %v1951
          %2889 = vmatpush1.bf16.msra.mxu0 %v1950
          %2890 = vmatprep.subr.bf16.mxu0 %v1954
          %2891 = vmatpush1.bf16.msra.mxu0 %v1953
          %2892 = vmatprep.subr.bf16.mxu0 %v1957
          %2893 = vmatpush1.bf16.msra.mxu0 %v1956
          %2894 = vmatprep.subr.bf16.mxu0 %v1960
          %2895 = vmatpush1.bf16.msra.mxu0 %v1959
          %2896 = vmatprep.subr.bf16.mxu0 %v1963
          %2897 = vmatpush1.bf16.msra.mxu0 %v1962
          %2898 = vmatprep.subr.bf16.mxu0 0
          %2899 = vmatpush1.bf16.msra.mxu0 0
          %2900 = vmatprep.subr.bf16.mxu0 0
          %2901 = vmatpush1.bf16.msra.mxu0 0
          %2902 = vmatprep.subr.bf16.mxu0 0
          %2903 = vmatpush1.bf16.msra.mxu0 0
          %2904 = vmatprep.subr.bf16.mxu0 0
          %2905 = vmatpush1.bf16.msra.mxu0 0
          %2906 = vmatprep.subr.bf16.mxu0 0
          %2907 = vmatpush1.bf16.msra.mxu0 0
          %2908 = vmatprep.subr.bf16.mxu0 0
          %2909 = vmatpush1.bf16.msra.mxu0 0
          %2910 = vmatprep.subr.bf16.mxu0 0
          %2911 = vmatpush1.bf16.msra.mxu0 0
          %2912 = vmatprep.subr.bf16.mxu0 0
          %2913 = vmatpush1.bf16.msra.mxu0 0
          %2914 = vmatprep.mubr.bf16.mxu0 0
          %2915 = vmatmul.mubr.bf16.gmra.mrb[0].mxu0 %v2881
          %v2916 = vpop.f32.mrb[0].mxu0
          %v2917 = vadd.f32 %v1400, %v2916
          %v2918 = vpop.f32.mrb[0].mxu0
          %v2919 = vadd.f32 %v1404, %v2918
          %v2920 = vpop.f32.mrb[0].mxu0
          %v2921 = vpop.f32.mrb[0].mxu0
          %2922 = vdwg.mxu0
          %2923 = vmatprep.subr.bf16.mxu0 0
          %2924 = vmatpush1.bf16.msra.mxu0 %v1943
          %2925 = vmatprep.subr.bf16.mxu0 0
          %2926 = vmatpush1.bf16.msra.mxu0 %v1946
          %2927 = vmatprep.subr.bf16.mxu0 0
          %2928 = vmatpush1.bf16.msra.mxu0 %v1949
          %2929 = vmatprep.subr.bf16.mxu0 0
          %2930 = vmatpush1.bf16.msra.mxu0 %v1952
          %2931 = vmatprep.subr.bf16.mxu0 0
          %2932 = vmatpush1.bf16.msra.mxu0 %v1955
          %2933 = vmatprep.subr.bf16.mxu0 0
          %2934 = vmatpush1.bf16.msra.mxu0 %v1958
          %2935 = vmatprep.subr.bf16.mxu0 0
          %2936 = vmatpush1.bf16.msra.mxu0 %v1961
          %2937 = vmatprep.subr.bf16.mxu0 0
          %2938 = vmatpush1.bf16.msra.mxu0 %v1964
          %2939 = vmatprep.subr.bf16.mxu0 0
          %2940 = vmatpush1.bf16.msra.mxu0 0
          %2941 = vmatprep.subr.bf16.mxu0 0
          %2942 = vmatpush1.bf16.msra.mxu0 0
          %2943 = vmatprep.subr.bf16.mxu0 0
          %2944 = vmatpush1.bf16.msra.mxu0 0
          %2945 = vmatprep.subr.bf16.mxu0 0
          %2946 = vmatpush1.bf16.msra.mxu0 0
          %2947 = vmatprep.subr.bf16.mxu0 0
          %2948 = vmatpush1.bf16.msra.mxu0 0
          %2949 = vmatprep.subr.bf16.mxu0 0
          %2950 = vmatpush1.bf16.msra.mxu0 0
          %2951 = vmatprep.subr.bf16.mxu0 0
          %2952 = vmatpush1.bf16.msra.mxu0 0
          %2953 = vmatprep.subr.bf16.mxu0 0
          %2954 = vmatpush1.bf16.msra.mxu0 0
          %2955 = vmatprep.mubr.bf16.mxu0 0
          %2956 = vmatmul.mubr.bf16.gmra.mrb[0].mxu0 %v2881
          %v2957 = vpop.f32.mrb[0].mxu0
          %v2958 = vadd.f32 %v1408, %v2957
          %v2959 = vpop.f32.mrb[0].mxu0
          %v2960 = vpop.f32.mrb[0].mxu0
          %v2961 = vpop.f32.mrb[0].mxu0
          %2962 = vdwg.mxu0
          %v2963 = vadd.f32 %v2835, %v2917
          %v2964 = vxor.u32 %v2963, 2147483648
          %v2965 = vmul.f32 %v2964, 1.442695
          %v2966 = vpow.pop %v2965
          %v2967 = vadd.f32 %v2966, 1.0
          %v2968 = vrcp.pop %v2967
          %v2969 = vmul.f32 1.0, %v2968
          %v2970 = vadd.f32 %v2837, %v2919
          %v2971 = vxor.u32 %v2970, 2147483648
          %v2972 = vmul.f32 %v2971, 1.442695
          %v2973 = vpow.pop %v2972
          %v2974 = vadd.f32 %v2973, 1.0
          %v2975 = vrcp.pop %v2974
          %v2976 = vmul.f32 1.0, %v2975
          %v2977 = vmul.f32 %v2969, %v2958
          %v2978 = vadd.f32 %v2876, %v2977
          %v2979 = vtanh.pop %v2978
          %v2980 = vsub.f32 1.0, %v2976
          %v2981 = vmul.f32 %v2980, %v2979
          %v2982 = vmul.f32 %v2976, %v2798
          %v2983 = vadd.f32 %v2981, %v2982
          %2984 = vst [vmem:[%s1648] sm:$0xff] %v2983
          %s2985 = scalar_lea.vmem [#allocation3], 24
          %2986 = vst [vmem:[%s2985] sm:$0xff] %v2983
          %v2987 = vld [vmem:[#allocation2] sm:$0xff]
          %s2988 = scalar_lea.vmem [#allocation4], 96
          %v2989 = vld [vmem:[%s2988] sm:$0xff]
          %v2990 = vld [vmem:[%s2988 + $0x8] sm:$0xff]
          %v2991 = vld [vmem:[%s2988 + $0x10] sm:$0xff]
          %v2992 = vpack.c.bf16 %v2987, %v2987
          %2993 = vmatprep.subr.bf16.mxu0 %v1498
          %2994 = vmatpush1.bf16.msra.mxu0 %v1497
          %2995 = vmatprep.subr.bf16.mxu0 %v1501
          %2996 = vmatpush1.bf16.msra.mxu0 %v1500
          %2997 = vmatprep.subr.bf16.mxu0 %v1504
          %2998 = vmatpush1.bf16.msra.mxu0 %v1503
          %2999 = vmatprep.subr.bf16.mxu0 %v1507
          %3000 = vmatpush1.bf16.msra.mxu0 %v1506
          %3001 = vmatprep.subr.bf16.mxu0 %v1510
          %3002 = vmatpush1.bf16.msra.mxu0 %v1509
          %3003 = vmatprep.subr.bf16.mxu0 %v1513
          %3004 = vmatpush1.bf16.msra.mxu0 %v1512
          %3005 = vmatprep.subr.bf16.mxu0 %v1516
          %3006 = vmatpush1.bf16.msra.mxu0 %v1515
          %3007 = vmatprep.subr.bf16.mxu0 %v1519
          %3008 = vmatpush1.bf16.msra.mxu0 %v1518
          %3009 = vmatprep.subr.bf16.mxu0 0
          %3010 = vmatpush1.bf16.msra.mxu0 0
          %3011 = vmatprep.subr.bf16.mxu0 0
          %3012 = vmatpush1.bf16.msra.mxu0 0
          %3013 = vmatprep.subr.bf16.mxu0 0
          %3014 = vmatpush1.bf16.msra.mxu0 0
          %3015 = vmatprep.subr.bf16.mxu0 0
          %3016 = vmatpush1.bf16.msra.mxu0 0
          %3017 = vmatprep.subr.bf16.mxu0 0
          %3018 = vmatpush1.bf16.msra.mxu0 0
          %3019 = vmatprep.subr.bf16.mxu0 0
          %3020 = vmatpush1.bf16.msra.mxu0 0
          %3021 = vmatprep.subr.bf16.mxu0 0
          %3022 = vmatpush1.bf16.msra.mxu0 0
          %3023 = vmatprep.subr.bf16.mxu0 0
          %3024 = vmatpush1.bf16.msra.mxu0 0
          %3025 = vmatprep.mubr.bf16.mxu0 0
          %3026 = vmatmul.mubr.bf16.gmra.mrb[0].mxu0 %v2992
          %v3027 = vpop.f32.mrb[0].mxu0
          %v3028 = vadd.f32 %v1302, %v3027
          %v3029 = vpop.f32.mrb[0].mxu0
          %v3030 = vadd.f32 %v1306, %v3029
          %v3031 = vpop.f32.mrb[0].mxu0
          %v3032 = vpop.f32.mrb[0].mxu0
          %3033 = vdwg.mxu0
          %3034 = vmatprep.subr.bf16.mxu0 0
          %3035 = vmatpush1.bf16.msra.mxu0 %v1499
          %3036 = vmatprep.subr.bf16.mxu0 0
          %3037 = vmatpush1.bf16.msra.mxu0 %v1502
          %3038 = vmatprep.subr.bf16.mxu0 0
          %3039 = vmatpush1.bf16.msra.mxu0 %v1505
          %3040 = vmatprep.subr.bf16.mxu0 0
          %3041 = vmatpush1.bf16.msra.mxu0 %v1508
          %3042 = vmatprep.subr.bf16.mxu0 0
          %3043 = vmatpush1.bf16.msra.mxu0 %v1511
          %3044 = vmatprep.subr.bf16.mxu0 0
          %3045 = vmatpush1.bf16.msra.mxu0 %v1514
          %3046 = vmatprep.subr.bf16.mxu0 0
          %3047 = vmatpush1.bf16.msra.mxu0 %v1517
          %3048 = vmatprep.subr.bf16.mxu0 0
          %3049 = vmatpush1.bf16.msra.mxu0 %v1520
          %3050 = vmatprep.subr.bf16.mxu0 0
          %3051 = vmatpush1.bf16.msra.mxu0 0
          %3052 = vmatprep.subr.bf16.mxu0 0
          %3053 = vmatpush1.bf16.msra.mxu0 0
          %3054 = vmatprep.subr.bf16.mxu0 0
          %3055 = vmatpush1.bf16.msra.mxu0 0
          %3056 = vmatprep.subr.bf16.mxu0 0
          %3057 = vmatpush1.bf16.msra.mxu0 0
          %3058 = vmatprep.subr.bf16.mxu0 0
          %3059 = vmatpush1.bf16.msra.mxu0 0
          %3060 = vmatprep.subr.bf16.mxu0 0
          %3061 = vmatpush1.bf16.msra.mxu0 0
          %3062 = vmatprep.subr.bf16.mxu0 0
          %3063 = vmatpush1.bf16.msra.mxu0 0
          %3064 = vmatprep.subr.bf16.mxu0 0
          %3065 = vmatpush1.bf16.msra.mxu0 0
          %3066 = vmatprep.mubr.bf16.mxu0 0
          %3067 = vmatmul.mubr.bf16.gmra.mrb[0].mxu0 %v2992
          %v3068 = vpop.f32.mrb[0].mxu0
          %v3069 = vadd.f32 %v1310, %v3068
          %v3070 = vpop.f32.mrb[0].mxu0
          %v3071 = vpop.f32.mrb[0].mxu0
          %v3072 = vpop.f32.mrb[0].mxu0
          %3073 = vdwg.mxu0
          %v3074 = vadd.f32 %v2989, %v3028
          %v3075 = vxor.u32 %v3074, 2147483648
          %v3076 = vmul.f32 %v3075, 1.442695
          %v3077 = vpow.pop %v3076
          %v3078 = vadd.f32 %v3077, 1.0
          %v3079 = vrcp.pop %v3078
          %v3080 = vmul.f32 1.0, %v3079
          %v3081 = vadd.f32 %v2990, %v3030
          %v3082 = vxor.u32 %v3081, 2147483648
          %v3083 = vmul.f32 %v3082, 1.442695
          %v3084 = vpow.pop %v3083
          %v3085 = vadd.f32 %v3084, 1.0
          %v3086 = vrcp.pop %v3085
          %v3087 = vmul.f32 1.0, %v3086
          %v3088 = vmul.f32 %v3080, %v3069
          %v3089 = vadd.f32 %v2991, %v3088
          %v3090 = vtanh.pop %v3089
          %v3091 = vsub.f32 1.0, %v3087
          %v3092 = vmul.f32 %v3091, %v3090
          %v3093 = vmul.f32 %v3087, %v2987
          %v3094 = vadd.f32 %v3092, %v3093
          %3095 = vst [vmem:[#allocation2] sm:$0xff] %v3094
          %v3096 = vld [vmem:[%s1648] sm:$0xff]
          %v3097 = vpack.c.bf16 %v3094, %v3094
          %3098 = vmatprep.subr.bf16.mxu0 %v1732
          %3099 = vmatpush1.bf16.msra.mxu0 %v1731
          %3100 = vmatprep.subr.bf16.mxu0 %v1735
          %3101 = vmatpush1.bf16.msra.mxu0 %v1734
          %3102 = vmatprep.subr.bf16.mxu0 %v1738
          %3103 = vmatpush1.bf16.msra.mxu0 %v1737
          %3104 = vmatprep.subr.bf16.mxu0 %v1741
          %3105 = vmatpush1.bf16.msra.mxu0 %v1740
          %3106 = vmatprep.subr.bf16.mxu0 %v1744
          %3107 = vmatpush1.bf16.msra.mxu0 %v1743
          %3108 = vmatprep.subr.bf16.mxu0 %v1747
          %3109 = vmatpush1.bf16.msra.mxu0 %v1746
          %3110 = vmatprep.subr.bf16.mxu0 %v1750
          %3111 = vmatpush1.bf16.msra.mxu0 %v1749
          %3112 = vmatprep.subr.bf16.mxu0 %v1753
          %3113 = vmatpush1.bf16.msra.mxu0 %v1752
          %3114 = vmatprep.subr.bf16.mxu0 0
          %3115 = vmatpush1.bf16.msra.mxu0 0
          %3116 = vmatprep.subr.bf16.mxu0 0
          %3117 = vmatpush1.bf16.msra.mxu0 0
          %3118 = vmatprep.subr.bf16.mxu0 0
          %3119 = vmatpush1.bf16.msra.mxu0 0
          %3120 = vmatprep.subr.bf16.mxu0 0
          %3121 = vmatpush1.bf16.msra.mxu0 0
          %3122 = vmatprep.subr.bf16.mxu0 0
          %3123 = vmatpush1.bf16.msra.mxu0 0
          %3124 = vmatprep.subr.bf16.mxu0 0
          %3125 = vmatpush1.bf16.msra.mxu0 0
          %3126 = vmatprep.subr.bf16.mxu0 0
          %3127 = vmatpush1.bf16.msra.mxu0 0
          %3128 = vmatprep.subr.bf16.mxu0 0
          %3129 = vmatpush1.bf16.msra.mxu0 0
          %3130 = vmatprep.mubr.bf16.mxu0 0
          %3131 = vmatmul.mubr.bf16.gmra.mrb[0].mxu0 %v3097
          %v3132 = vpop.f32.mrb[0].mxu0
          %v3133 = vadd.f32 %v1383, %v3132
          %v3134 = vpop.f32.mrb[0].mxu0
          %v3135 = vadd.f32 %v1387, %v3134
          %v3136 = vpop.f32.mrb[0].mxu0
          %v3137 = vpop.f32.mrb[0].mxu0
          %3138 = vdwg.mxu0
          %3139 = vmatprep.subr.bf16.mxu0 0
          %3140 = vmatpush1.bf16.msra.mxu0 %v1733
          %3141 = vmatprep.subr.bf16.mxu0 0
          %3142 = vmatpush1.bf16.msra.mxu0 %v1736
          %3143 = vmatprep.subr.bf16.mxu0 0
          %3144 = vmatpush1.bf16.msra.mxu0 %v1739
          %3145 = vmatprep.subr.bf16.mxu0 0
          %3146 = vmatpush1.bf16.msra.mxu0 %v1742
          %3147 = vmatprep.subr.bf16.mxu0 0
          %3148 = vmatpush1.bf16.msra.mxu0 %v1745
          %3149 = vmatprep.subr.bf16.mxu0 0
          %3150 = vmatpush1.bf16.msra.mxu0 %v1748
          %3151 = vmatprep.subr.bf16.mxu0 0
          %3152 = vmatpush1.bf16.msra.mxu0 %v1751
          %3153 = vmatprep.subr.bf16.mxu0 0
          %3154 = vmatpush1.bf16.msra.mxu0 %v1754
          %3155 = vmatprep.subr.bf16.mxu0 0
          %3156 = vmatpush1.bf16.msra.mxu0 0
          %3157 = vmatprep.subr.bf16.mxu0 0
          %3158 = vmatpush1.bf16.msra.mxu0 0
          %3159 = vmatprep.subr.bf16.mxu0 0
          %3160 = vmatpush1.bf16.msra.mxu0 0
          %3161 = vmatprep.subr.bf16.mxu0 0
          %3162 = vmatpush1.bf16.msra.mxu0 0
          %3163 = vmatprep.subr.bf16.mxu0 0
          %3164 = vmatpush1.bf16.msra.mxu0 0
          %3165 = vmatprep.subr.bf16.mxu0 0
          %3166 = vmatpush1.bf16.msra.mxu0 0
          %3167 = vmatprep.subr.bf16.mxu0 0
          %3168 = vmatpush1.bf16.msra.mxu0 0
          %3169 = vmatprep.subr.bf16.mxu0 0
          %3170 = vmatpush1.bf16.msra.mxu0 0
          %3171 = vmatprep.mubr.bf16.mxu0 0
          %3172 = vmatmul.mubr.bf16.gmra.mrb[0].mxu0 %v3097
          %v3173 = vpop.f32.mrb[0].mxu0
          %v3174 = vadd.f32 %v1391, %v3173
          %v3175 = vpop.f32.mrb[0].mxu0
          %v3176 = vpop.f32.mrb[0].mxu0
          %v3177 = vpop.f32.mrb[0].mxu0
          %3178 = vdwg.mxu0
          %v3179 = vpack.c.bf16 %v3096, %v3096
          %3180 = vmatprep.subr.bf16.mxu0 %v1942
          %3181 = vmatpush1.bf16.msra.mxu0 %v1941
          %3182 = vmatprep.subr.bf16.mxu0 %v1945
          %3183 = vmatpush1.bf16.msra.mxu0 %v1944
          %3184 = vmatprep.subr.bf16.mxu0 %v1948
          %3185 = vmatpush1.bf16.msra.mxu0 %v1947
          %3186 = vmatprep.subr.bf16.mxu0 %v1951
          %3187 = vmatpush1.bf16.msra.mxu0 %v1950
          %3188 = vmatprep.subr.bf16.mxu0 %v1954
          %3189 = vmatpush1.bf16.msra.mxu0 %v1953
          %3190 = vmatprep.subr.bf16.mxu0 %v1957
          %3191 = vmatpush1.bf16.msra.mxu0 %v1956
          %3192 = vmatprep.subr.bf16.mxu0 %v1960
          %3193 = vmatpush1.bf16.msra.mxu0 %v1959
          %3194 = vmatprep.subr.bf16.mxu0 %v1963
          %3195 = vmatpush1.bf16.msra.mxu0 %v1962
          %3196 = vmatprep.subr.bf16.mxu0 0
          %3197 = vmatpush1.bf16.msra.mxu0 0
          %3198 = vmatprep.subr.bf16.mxu0 0
          %3199 = vmatpush1.bf16.msra.mxu0 0
          %3200 = vmatprep.subr.bf16.mxu0 0
          %3201 = vmatpush1.bf16.msra.mxu0 0
          %3202 = vmatprep.subr.bf16.mxu0 0
          %3203 = vmatpush1.bf16.msra.mxu0 0
          %3204 = vmatprep.subr.bf16.mxu0 0
          %3205 = vmatpush1.bf16.msra.mxu0 0
          %3206 = vmatprep.subr.bf16.mxu0 0
          %3207 = vmatpush1.bf16.msra.mxu0 0
          %3208 = vmatprep.subr.bf16.mxu0 0
          %3209 = vmatpush1.bf16.msra.mxu0 0
          %3210 = vmatprep.subr.bf16.mxu0 0
          %3211 = vmatpush1.bf16.msra.mxu0 0
          %3212 = vmatprep.mubr.bf16.mxu0 0
          %3213 = vmatmul.mubr.bf16.gmra.mrb[0].mxu0 %v3179
          %v3214 = vpop.f32.mrb[0].mxu0
          %v3215 = vadd.f32 %v1400, %v3214
          %v3216 = vpop.f32.mrb[0].mxu0
          %v3217 = vadd.f32 %v1404, %v3216
          %v3218 = vpop.f32.mrb[0].mxu0
          %v3219 = vpop.f32.mrb[0].mxu0
          %3220 = vdwg.mxu0
          %3221 = vmatprep.subr.bf16.mxu0 0
          %3222 = vmatpush1.bf16.msra.mxu0 %v1943
          %3223 = vmatprep.subr.bf16.mxu0 0
          %3224 = vmatpush1.bf16.msra.mxu0 %v1946
          %3225 = vmatprep.subr.bf16.mxu0 0
          %3226 = vmatpush1.bf16.msra.mxu0 %v1949
          %3227 = vmatprep.subr.bf16.mxu0 0
          %3228 = vmatpush1.bf16.msra.mxu0 %v1952
          %3229 = vmatprep.subr.bf16.mxu0 0
          %3230 = vmatpush1.bf16.msra.mxu0 %v1955
          %3231 = vmatprep.subr.bf16.mxu0 0
          %3232 = vmatpush1.bf16.msra.mxu0 %v1958
          %3233 = vmatprep.subr.bf16.mxu0 0
          %3234 = vmatpush1.bf16.msra.mxu0 %v1961
          %3235 = vmatprep.subr.bf16.mxu0 0
          %3236 = vmatpush1.bf16.msra.mxu0 %v1964
          %3237 = vmatprep.subr.bf16.mxu0 0
          %3238 = vmatpush1.bf16.msra.mxu0 0
          %3239 = vmatprep.subr.bf16.mxu0 0
          %3240 = vmatpush1.bf16.msra.mxu0 0
          %3241 = vmatprep.subr.bf16.mxu0 0
          %3242 = vmatpush1.bf16.msra.mxu0 0
          %3243 = vmatprep.subr.bf16.mxu0 0
          %3244 = vmatpush1.bf16.msra.mxu0 0
          %3245 = vmatprep.subr.bf16.mxu0 0
          %3246 = vmatpush1.bf16.msra.mxu0 0
          %3247 = vmatprep.subr.bf16.mxu0 0
          %3248 = vmatpush1.bf16.msra.mxu0 0
          %3249 = vmatprep.subr.bf16.mxu0 0
          %3250 = vmatpush1.bf16.msra.mxu0 0
          %3251 = vmatprep.subr.bf16.mxu0 0
          %3252 = vmatpush1.bf16.msra.mxu0 0
          %3253 = vmatprep.mubr.bf16.mxu0 0
          %3254 = vmatmul.mubr.bf16.gmra.mrb[0].mxu0 %v3179
          %v3255 = vpop.f32.mrb[0].mxu0
          %v3256 = vadd.f32 %v1408, %v3255
          %v3257 = vpop.f32.mrb[0].mxu0
          %v3258 = vpop.f32.mrb[0].mxu0
          %v3259 = vpop.f32.mrb[0].mxu0
          %3260 = vdwg.mxu0
          %v3261 = vadd.f32 %v3133, %v3215
          %v3262 = vxor.u32 %v3261, 2147483648
          %v3263 = vmul.f32 %v3262, 1.442695
          %v3264 = vpow.pop %v3263
          %v3265 = vadd.f32 %v3264, 1.0
          %v3266 = vrcp.pop %v3265
          %v3267 = vmul.f32 1.0, %v3266
          %v3268 = vadd.f32 %v3135, %v3217
          %v3269 = vxor.u32 %v3268, 2147483648
          %v3270 = vmul.f32 %v3269, 1.442695
          %v3271 = vpow.pop %v3270
          %v3272 = vadd.f32 %v3271, 1.0
          %v3273 = vrcp.pop %v3272
          %v3274 = vmul.f32 1.0, %v3273
          %v3275 = vmul.f32 %v3267, %v3256
          %v3276 = vadd.f32 %v3174, %v3275
          %v3277 = vtanh.pop %v3276
          %v3278 = vsub.f32 1.0, %v3274
          %v3279 = vmul.f32 %v3278, %v3277
          %v3280 = vmul.f32 %v3274, %v3096
          %v3281 = vadd.f32 %v3279, %v3280
          %3282 = vst [vmem:[%s1648] sm:$0xff] %v3281
          %s3283 = scalar_lea.vmem [#allocation3], 32
          %3284 = vst [vmem:[%s3283] sm:$0xff] %v3281
          %v3285 = vld [vmem:[#allocation2] sm:$0xff]
          %s3286 = scalar_lea.vmem [#allocation4], 120
          %v3287 = vld [vmem:[%s3286] sm:$0xff]
          %v3288 = vld [vmem:[%s3286 + $0x8] sm:$0xff]
          %v3289 = vld [vmem:[%s3286 + $0x10] sm:$0xff]
          %v3290 = vpack.c.bf16 %v3285, %v3285
          %3291 = vmatprep.subr.bf16.mxu0 %v1498
          %3292 = vmatpush1.bf16.msra.mxu0 %v1497
          %3293 = vmatprep.subr.bf16.mxu0 %v1501
          %3294 = vmatpush1.bf16.msra.mxu0 %v1500
          %3295 = vmatprep.subr.bf16.mxu0 %v1504
          %3296 = vmatpush1.bf16.msra.mxu0 %v1503
          %3297 = vmatprep.subr.bf16.mxu0 %v1507
          %3298 = vmatpush1.bf16.msra.mxu0 %v1506
          %3299 = vmatprep.subr.bf16.mxu0 %v1510
          %3300 = vmatpush1.bf16.msra.mxu0 %v1509
          %3301 = vmatprep.subr.bf16.mxu0 %v1513
          %3302 = vmatpush1.bf16.msra.mxu0 %v1512
          %3303 = vmatprep.subr.bf16.mxu0 %v1516
          %3304 = vmatpush1.bf16.msra.mxu0 %v1515
          %3305 = vmatprep.subr.bf16.mxu0 %v1519
          %3306 = vmatpush1.bf16.msra.mxu0 %v1518
          %3307 = vmatprep.subr.bf16.mxu0 0
          %3308 = vmatpush1.bf16.msra.mxu0 0
          %3309 = vmatprep.subr.bf16.mxu0 0
          %3310 = vmatpush1.bf16.msra.mxu0 0
          %3311 = vmatprep.subr.bf16.mxu0 0
          %3312 = vmatpush1.bf16.msra.mxu0 0
          %3313 = vmatprep.subr.bf16.mxu0 0
          %3314 = vmatpush1.bf16.msra.mxu0 0
          %3315 = vmatprep.subr.bf16.mxu0 0
          %3316 = vmatpush1.bf16.msra.mxu0 0
          %3317 = vmatprep.subr.bf16.mxu0 0
          %3318 = vmatpush1.bf16.msra.mxu0 0
          %3319 = vmatprep.subr.bf16.mxu0 0
          %3320 = vmatpush1.bf16.msra.mxu0 0
          %3321 = vmatprep.subr.bf16.mxu0 0
          %3322 = vmatpush1.bf16.msra.mxu0 0
          %3323 = vmatprep.mubr.bf16.mxu0 0
          %3324 = vmatmul.mubr.bf16.gmra.mrb[0].mxu0 %v3290
          %v3325 = vpop.f32.mrb[0].mxu0
          %v3326 = vadd.f32 %v1302, %v3325
          %v3327 = vpop.f32.mrb[0].mxu0
          %v3328 = vadd.f32 %v1306, %v3327
          %v3329 = vpop.f32.mrb[0].mxu0
          %v3330 = vpop.f32.mrb[0].mxu0
          %3331 = vdwg.mxu0
          %3332 = vmatprep.subr.bf16.mxu0 0
          %3333 = vmatpush1.bf16.msra.mxu0 %v1499
          %3334 = vmatprep.subr.bf16.mxu0 0
          %3335 = vmatpush1.bf16.msra.mxu0 %v1502
          %3336 = vmatprep.subr.bf16.mxu0 0
          %3337 = vmatpush1.bf16.msra.mxu0 %v1505
          %3338 = vmatprep.subr.bf16.mxu0 0
          %3339 = vmatpush1.bf16.msra.mxu0 %v1508
          %3340 = vmatprep.subr.bf16.mxu0 0
          %3341 = vmatpush1.bf16.msra.mxu0 %v1511
          %3342 = vmatprep.subr.bf16.mxu0 0
          %3343 = vmatpush1.bf16.msra.mxu0 %v1514
          %3344 = vmatprep.subr.bf16.mxu0 0
          %3345 = vmatpush1.bf16.msra.mxu0 %v1517
          %3346 = vmatprep.subr.bf16.mxu0 0
          %3347 = vmatpush1.bf16.msra.mxu0 %v1520
          %3348 = vmatprep.subr.bf16.mxu0 0
          %3349 = vmatpush1.bf16.msra.mxu0 0
          %3350 = vmatprep.subr.bf16.mxu0 0
          %3351 = vmatpush1.bf16.msra.mxu0 0
          %3352 = vmatprep.subr.bf16.mxu0 0
          %3353 = vmatpush1.bf16.msra.mxu0 0
          %3354 = vmatprep.subr.bf16.mxu0 0
          %3355 = vmatpush1.bf16.msra.mxu0 0
          %3356 = vmatprep.subr.bf16.mxu0 0
          %3357 = vmatpush1.bf16.msra.mxu0 0
          %3358 = vmatprep.subr.bf16.mxu0 0
          %3359 = vmatpush1.bf16.msra.mxu0 0
          %3360 = vmatprep.subr.bf16.mxu0 0
          %3361 = vmatpush1.bf16.msra.mxu0 0
          %3362 = vmatprep.subr.bf16.mxu0 0
          %3363 = vmatpush1.bf16.msra.mxu0 0
          %3364 = vmatprep.mubr.bf16.mxu0 0
          %3365 = vmatmul.mubr.bf16.gmra.mrb[0].mxu0 %v3290
          %v3366 = vpop.f32.mrb[0].mxu0
          %v3367 = vadd.f32 %v1310, %v3366
          %v3368 = vpop.f32.mrb[0].mxu0
          %v3369 = vpop.f32.mrb[0].mxu0
          %v3370 = vpop.f32.mrb[0].mxu0
          %3371 = vdwg.mxu0
          %v3372 = vadd.f32 %v3287, %v3326
          %v3373 = vxor.u32 %v3372, 2147483648
          %v3374 = vmul.f32 %v3373, 1.442695
          %v3375 = vpow.pop %v3374
          %v3376 = vadd.f32 %v3375, 1.0
          %v3377 = vrcp.pop %v3376
          %v3378 = vmul.f32 1.0, %v3377
          %v3379 = vadd.f32 %v3288, %v3328
          %v3380 = vxor.u32 %v3379, 2147483648
          %v3381 = vmul.f32 %v3380, 1.442695
          %v3382 = vpow.pop %v3381
          %v3383 = vadd.f32 %v3382, 1.0
          %v3384 = vrcp.pop %v3383
          %v3385 = vmul.f32 1.0, %v3384
          %v3386 = vmul.f32 %v3378, %v3367
          %v3387 = vadd.f32 %v3289, %v3386
          %v3388 = vtanh.pop %v3387
          %v3389 = vsub.f32 1.0, %v3385
          %v3390 = vmul.f32 %v3389, %v3388
          %v3391 = vmul.f32 %v3385, %v3285
          %v3392 = vadd.f32 %v3390, %v3391
          %3393 = vst [vmem:[#allocation2] sm:$0xff] %v3392
          %v3394 = vld [vmem:[%s1648] sm:$0xff]
          %v3395 = vpack.c.bf16 %v3392, %v3392
          %3396 = vmatprep.subr.bf16.mxu0 %v1732
          %3397 = vmatpush1.bf16.msra.mxu0 %v1731
          %3398 = vmatprep.subr.bf16.mxu0 %v1735
          %3399 = vmatpush1.bf16.msra.mxu0 %v1734
          %3400 = vmatprep.subr.bf16.mxu0 %v1738
          %3401 = vmatpush1.bf16.msra.mxu0 %v1737
          %3402 = vmatprep.subr.bf16.mxu0 %v1741
          %3403 = vmatpush1.bf16.msra.mxu0 %v1740
          %3404 = vmatprep.subr.bf16.mxu0 %v1744
          %3405 = vmatpush1.bf16.msra.mxu0 %v1743
          %3406 = vmatprep.subr.bf16.mxu0 %v1747
          %3407 = vmatpush1.bf16.msra.mxu0 %v1746
          %3408 = vmatprep.subr.bf16.mxu0 %v1750
          %3409 = vmatpush1.bf16.msra.mxu0 %v1749
          %3410 = vmatprep.subr.bf16.mxu0 %v1753
          %3411 = vmatpush1.bf16.msra.mxu0 %v1752
          %3412 = vmatprep.subr.bf16.mxu0 0
          %3413 = vmatpush1.bf16.msra.mxu0 0
          %3414 = vmatprep.subr.bf16.mxu0 0
          %3415 = vmatpush1.bf16.msra.mxu0 0
          %3416 = vmatprep.subr.bf16.mxu0 0
          %3417 = vmatpush1.bf16.msra.mxu0 0
          %3418 = vmatprep.subr.bf16.mxu0 0
          %3419 = vmatpush1.bf16.msra.mxu0 0
          %3420 = vmatprep.subr.bf16.mxu0 0
          %3421 = vmatpush1.bf16.msra.mxu0 0
          %3422 = vmatprep.subr.bf16.mxu0 0
          %3423 = vmatpush1.bf16.msra.mxu0 0
          %3424 = vmatprep.subr.bf16.mxu0 0
          %3425 = vmatpush1.bf16.msra.mxu0 0
          %3426 = vmatprep.subr.bf16.mxu0 0
          %3427 = vmatpush1.bf16.msra.mxu0 0
          %3428 = vmatprep.mubr.bf16.mxu0 0
          %3429 = vmatmul.mubr.bf16.gmra.mrb[0].mxu0 %v3395
          %v3430 = vpop.f32.mrb[0].mxu0
          %v3431 = vadd.f32 %v1383, %v3430
          %v3432 = vpop.f32.mrb[0].mxu0
          %v3433 = vadd.f32 %v1387, %v3432
          %v3434 = vpop.f32.mrb[0].mxu0
          %v3435 = vpop.f32.mrb[0].mxu0
          %3436 = vdwg.mxu0
          %3437 = vmatprep.subr.bf16.mxu0 0
          %3438 = vmatpush1.bf16.msra.mxu0 %v1733
          %3439 = vmatprep.subr.bf16.mxu0 0
          %3440 = vmatpush1.bf16.msra.mxu0 %v1736
          %3441 = vmatprep.subr.bf16.mxu0 0
          %3442 = vmatpush1.bf16.msra.mxu0 %v1739
          %3443 = vmatprep.subr.bf16.mxu0 0
          %3444 = vmatpush1.bf16.msra.mxu0 %v1742
          %3445 = vmatprep.subr.bf16.mxu0 0
          %3446 = vmatpush1.bf16.msra.mxu0 %v1745
          %3447 = vmatprep.subr.bf16.mxu0 0
          %3448 = vmatpush1.bf16.msra.mxu0 %v1748
          %3449 = vmatprep.subr.bf16.mxu0 0
          %3450 = vmatpush1.bf16.msra.mxu0 %v1751
          %3451 = vmatprep.subr.bf16.mxu0 0
          %3452 = vmatpush1.bf16.msra.mxu0 %v1754
          %3453 = vmatprep.subr.bf16.mxu0 0
          %3454 = vmatpush1.bf16.msra.mxu0 0
          %3455 = vmatprep.subr.bf16.mxu0 0
          %3456 = vmatpush1.bf16.msra.mxu0 0
          %3457 = vmatprep.subr.bf16.mxu0 0
          %3458 = vmatpush1.bf16.msra.mxu0 0
          %3459 = vmatprep.subr.bf16.mxu0 0
          %3460 = vmatpush1.bf16.msra.mxu0 0
          %3461 = vmatprep.subr.bf16.mxu0 0
          %3462 = vmatpush1.bf16.msra.mxu0 0
          %3463 = vmatprep.subr.bf16.mxu0 0
          %3464 = vmatpush1.bf16.msra.mxu0 0
          %3465 = vmatprep.subr.bf16.mxu0 0
          %3466 = vmatpush1.bf16.msra.mxu0 0
          %3467 = vmatprep.subr.bf16.mxu0 0
          %3468 = vmatpush1.bf16.msra.mxu0 0
          %3469 = vmatprep.mubr.bf16.mxu0 0
          %3470 = vmatmul.mubr.bf16.gmra.mrb[0].mxu0 %v3395
          %v3471 = vpop.f32.mrb[0].mxu0
          %v3472 = vadd.f32 %v1391, %v3471
          %v3473 = vpop.f32.mrb[0].mxu0
          %v3474 = vpop.f32.mrb[0].mxu0
          %v3475 = vpop.f32.mrb[0].mxu0
          %3476 = vdwg.mxu0
          %v3477 = vpack.c.bf16 %v3394, %v3394
          %3478 = vmatprep.subr.bf16.mxu0 %v1942
          %3479 = vmatpush1.bf16.msra.mxu0 %v1941
          %3480 = vmatprep.subr.bf16.mxu0 %v1945
          %3481 = vmatpush1.bf16.msra.mxu0 %v1944
          %3482 = vmatprep.subr.bf16.mxu0 %v1948
          %3483 = vmatpush1.bf16.msra.mxu0 %v1947
          %3484 = vmatprep.subr.bf16.mxu0 %v1951
          %3485 = vmatpush1.bf16.msra.mxu0 %v1950
          %3486 = vmatprep.subr.bf16.mxu0 %v1954
          %3487 = vmatpush1.bf16.msra.mxu0 %v1953
          %3488 = vmatprep.subr.bf16.mxu0 %v1957
          %3489 = vmatpush1.bf16.msra.mxu0 %v1956
          %3490 = vmatprep.subr.bf16.mxu0 %v1960
          %3491 = vmatpush1.bf16.msra.mxu0 %v1959
          %3492 = vmatprep.subr.bf16.mxu0 %v1963
          %3493 = vmatpush1.bf16.msra.mxu0 %v1962
          %3494 = vmatprep.subr.bf16.mxu0 0
          %3495 = vmatpush1.bf16.msra.mxu0 0
          %3496 = vmatprep.subr.bf16.mxu0 0
          %3497 = vmatpush1.bf16.msra.mxu0 0
          %3498 = vmatprep.subr.bf16.mxu0 0
          %3499 = vmatpush1.bf16.msra.mxu0 0
          %3500 = vmatprep.subr.bf16.mxu0 0
          %3501 = vmatpush1.bf16.msra.mxu0 0
          %3502 = vmatprep.subr.bf16.mxu0 0
          %3503 = vmatpush1.bf16.msra.mxu0 0
          %3504 = vmatprep.subr.bf16.mxu0 0
          %3505 = vmatpush1.bf16.msra.mxu0 0
          %3506 = vmatprep.subr.bf16.mxu0 0
          %3507 = vmatpush1.bf16.msra.mxu0 0
          %3508 = vmatprep.subr.bf16.mxu0 0
          %3509 = vmatpush1.bf16.msra.mxu0 0
          %3510 = vmatprep.mubr.bf16.mxu0 0
          %3511 = vmatmul.mubr.bf16.gmra.mrb[0].mxu0 %v3477
          %v3512 = vpop.f32.mrb[0].mxu0
          %v3513 = vadd.f32 %v1400, %v3512
          %v3514 = vpop.f32.mrb[0].mxu0
          %v3515 = vadd.f32 %v1404, %v3514
          %v3516 = vpop.f32.mrb[0].mxu0
          %v3517 = vpop.f32.mrb[0].mxu0
          %3518 = vdwg.mxu0
          %3519 = vmatprep.subr.bf16.mxu0 0
          %3520 = vmatpush1.bf16.msra.mxu0 %v1943
          %3521 = vmatprep.subr.bf16.mxu0 0
          %3522 = vmatpush1.bf16.msra.mxu0 %v1946
          %3523 = vmatprep.subr.bf16.mxu0 0
          %3524 = vmatpush1.bf16.msra.mxu0 %v1949
          %3525 = vmatprep.subr.bf16.mxu0 0
          %3526 = vmatpush1.bf16.msra.mxu0 %v1952
          %3527 = vmatprep.subr.bf16.mxu0 0
          %3528 = vmatpush1.bf16.msra.mxu0 %v1955
          %3529 = vmatprep.subr.bf16.mxu0 0
          %3530 = vmatpush1.bf16.msra.mxu0 %v1958
          %3531 = vmatprep.subr.bf16.mxu0 0
          %3532 = vmatpush1.bf16.msra.mxu0 %v1961
          %3533 = vmatprep.subr.bf16.mxu0 0
          %3534 = vmatpush1.bf16.msra.mxu0 %v1964
          %3535 = vmatprep.subr.bf16.mxu0 0
          %3536 = vmatpush1.bf16.msra.mxu0 0
          %3537 = vmatprep.subr.bf16.mxu0 0
          %3538 = vmatpush1.bf16.msra.mxu0 0
          %3539 = vmatprep.subr.bf16.mxu0 0
          %3540 = vmatpush1.bf16.msra.mxu0 0
          %3541 = vmatprep.subr.bf16.mxu0 0
          %3542 = vmatpush1.bf16.msra.mxu0 0
          %3543 = vmatprep.subr.bf16.mxu0 0
          %3544 = vmatpush1.bf16.msra.mxu0 0
          %3545 = vmatprep.subr.bf16.mxu0 0
          %3546 = vmatpush1.bf16.msra.mxu0 0
          %3547 = vmatprep.subr.bf16.mxu0 0
          %3548 = vmatpush1.bf16.msra.mxu0 0
          %3549 = vmatprep.subr.bf16.mxu0 0
          %3550 = vmatpush1.bf16.msra.mxu0 0
          %3551 = vmatprep.mubr.bf16.mxu0 0
          %3552 = vmatmul.mubr.bf16.gmra.mrb[0].mxu0 %v3477
          %v3553 = vpop.f32.mrb[0].mxu0
          %v3554 = vadd.f32 %v1408, %v3553
          %v3555 = vpop.f32.mrb[0].mxu0
          %v3556 = vpop.f32.mrb[0].mxu0
          %v3557 = vpop.f32.mrb[0].mxu0
          %3558 = vdwg.mxu0
          %v3559 = vadd.f32 %v3431, %v3513
          %v3560 = vxor.u32 %v3559, 2147483648
          %v3561 = vmul.f32 %v3560, 1.442695
          %v3562 = vpow.pop %v3561
          %v3563 = vadd.f32 %v3562, 1.0
          %v3564 = vrcp.pop %v3563
          %v3565 = vmul.f32 1.0, %v3564
          %v3566 = vadd.f32 %v3433, %v3515
          %v3567 = vxor.u32 %v3566, 2147483648
          %v3568 = vmul.f32 %v3567, 1.442695
          %v3569 = vpow.pop %v3568
          %v3570 = vadd.f32 %v3569, 1.0
          %v3571 = vrcp.pop %v3570
          %v3572 = vmul.f32 1.0, %v3571
          %v3573 = vmul.f32 %v3565, %v3554
          %v3574 = vadd.f32 %v3472, %v3573
          %v3575 = vtanh.pop %v3574
          %v3576 = vsub.f32 1.0, %v3572
          %v3577 = vmul.f32 %v3576, %v3575
          %v3578 = vmul.f32 %v3572, %v3394
          %v3579 = vadd.f32 %v3577, %v3578
          %3580 = vst [vmem:[%s1648] sm:$0xff] %v3579
          %s3581 = scalar_lea.vmem [#allocation3], 40
          %3582 = vst [vmem:[%s3581] sm:$0xff] %v3579
          %v3583 = vld [vmem:[#allocation2] sm:$0xff]
          %s3584 = scalar_lea.vmem [#allocation4], 144
          %v3585 = vld [vmem:[%s3584] sm:$0xff]
          %v3586 = vld [vmem:[%s3584 + $0x8] sm:$0xff]
          %v3587 = vld [vmem:[%s3584 + $0x10] sm:$0xff]
          %v3588 = vpack.c.bf16 %v3583, %v3583
          %3589 = vmatprep.subr.bf16.mxu0 %v1498
          %3590 = vmatpush1.bf16.msra.mxu0 %v1497
          %3591 = vmatprep.subr.bf16.mxu0 %v1501
          %3592 = vmatpush1.bf16.msra.mxu0 %v1500
          %3593 = vmatprep.subr.bf16.mxu0 %v1504
          %3594 = vmatpush1.bf16.msra.mxu0 %v1503
          %3595 = vmatprep.subr.bf16.mxu0 %v1507
          %3596 = vmatpush1.bf16.msra.mxu0 %v1506
          %3597 = vmatprep.subr.bf16.mxu0 %v1510
          %3598 = vmatpush1.bf16.msra.mxu0 %v1509
          %3599 = vmatprep.subr.bf16.mxu0 %v1513
          %3600 = vmatpush1.bf16.msra.mxu0 %v1512
          %3601 = vmatprep.subr.bf16.mxu0 %v1516
          %3602 = vmatpush1.bf16.msra.mxu0 %v1515
          %3603 = vmatprep.subr.bf16.mxu0 %v1519
          %3604 = vmatpush1.bf16.msra.mxu0 %v1518
          %3605 = vmatprep.subr.bf16.mxu0 0
          %3606 = vmatpush1.bf16.msra.mxu0 0
          %3607 = vmatprep.subr.bf16.mxu0 0
          %3608 = vmatpush1.bf16.msra.mxu0 0
          %3609 = vmatprep.subr.bf16.mxu0 0
          %3610 = vmatpush1.bf16.msra.mxu0 0
          %3611 = vmatprep.subr.bf16.mxu0 0
          %3612 = vmatpush1.bf16.msra.mxu0 0
          %3613 = vmatprep.subr.bf16.mxu0 0
          %3614 = vmatpush1.bf16.msra.mxu0 0
          %3615 = vmatprep.subr.bf16.mxu0 0
          %3616 = vmatpush1.bf16.msra.mxu0 0
          %3617 = vmatprep.subr.bf16.mxu0 0
          %3618 = vmatpush1.bf16.msra.mxu0 0
          %3619 = vmatprep.subr.bf16.mxu0 0
          %3620 = vmatpush1.bf16.msra.mxu0 0
          %3621 = vmatprep.mubr.bf16.mxu0 0
          %3622 = vmatmul.mubr.bf16.gmra.mrb[0].mxu0 %v3588
          %v3623 = vpop.f32.mrb[0].mxu0
          %v3624 = vadd.f32 %v1302, %v3623
          %v3625 = vpop.f32.mrb[0].mxu0
          %v3626 = vadd.f32 %v1306, %v3625
          %v3627 = vpop.f32.mrb[0].mxu0
          %v3628 = vpop.f32.mrb[0].mxu0
          %3629 = vdwg.mxu0
          %3630 = vmatprep.subr.bf16.mxu0 0
          %3631 = vmatpush1.bf16.msra.mxu0 %v1499
          %3632 = vmatprep.subr.bf16.mxu0 0
          %3633 = vmatpush1.bf16.msra.mxu0 %v1502
          %3634 = vmatprep.subr.bf16.mxu0 0
          %3635 = vmatpush1.bf16.msra.mxu0 %v1505
          %3636 = vmatprep.subr.bf16.mxu0 0
          %3637 = vmatpush1.bf16.msra.mxu0 %v1508
          %3638 = vmatprep.subr.bf16.mxu0 0
          %3639 = vmatpush1.bf16.msra.mxu0 %v1511
          %3640 = vmatprep.subr.bf16.mxu0 0
          %3641 = vmatpush1.bf16.msra.mxu0 %v1514
          %3642 = vmatprep.subr.bf16.mxu0 0
          %3643 = vmatpush1.bf16.msra.mxu0 %v1517
          %3644 = vmatprep.subr.bf16.mxu0 0
          %3645 = vmatpush1.bf16.msra.mxu0 %v1520
          %3646 = vmatprep.subr.bf16.mxu0 0
          %3647 = vmatpush1.bf16.msra.mxu0 0
          %3648 = vmatprep.subr.bf16.mxu0 0
          %3649 = vmatpush1.bf16.msra.mxu0 0
          %3650 = vmatprep.subr.bf16.mxu0 0
          %3651 = vmatpush1.bf16.msra.mxu0 0
          %3652 = vmatprep.subr.bf16.mxu0 0
          %3653 = vmatpush1.bf16.msra.mxu0 0
          %3654 = vmatprep.subr.bf16.mxu0 0
          %3655 = vmatpush1.bf16.msra.mxu0 0
          %3656 = vmatprep.subr.bf16.mxu0 0
          %3657 = vmatpush1.bf16.msra.mxu0 0
          %3658 = vmatprep.subr.bf16.mxu0 0
          %3659 = vmatpush1.bf16.msra.mxu0 0
          %3660 = vmatprep.subr.bf16.mxu0 0
          %3661 = vmatpush1.bf16.msra.mxu0 0
          %3662 = vmatprep.mubr.bf16.mxu0 0
          %3663 = vmatmul.mubr.bf16.gmra.mrb[0].mxu0 %v3588
          %v3664 = vpop.f32.mrb[0].mxu0
          %v3665 = vadd.f32 %v1310, %v3664
          %v3666 = vpop.f32.mrb[0].mxu0
          %v3667 = vpop.f32.mrb[0].mxu0
          %v3668 = vpop.f32.mrb[0].mxu0
          %3669 = vdwg.mxu0
          %v3670 = vadd.f32 %v3585, %v3624
          %v3671 = vxor.u32 %v3670, 2147483648
          %v3672 = vmul.f32 %v3671, 1.442695
          %v3673 = vpow.pop %v3672
          %v3674 = vadd.f32 %v3673, 1.0
          %v3675 = vrcp.pop %v3674
          %v3676 = vmul.f32 1.0, %v3675
          %v3677 = vadd.f32 %v3586, %v3626
          %v3678 = vxor.u32 %v3677, 2147483648
          %v3679 = vmul.f32 %v3678, 1.442695
          %v3680 = vpow.pop %v3679
          %v3681 = vadd.f32 %v3680, 1.0
          %v3682 = vrcp.pop %v3681
          %v3683 = vmul.f32 1.0, %v3682
          %v3684 = vmul.f32 %v3676, %v3665
          %v3685 = vadd.f32 %v3587, %v3684
          %v3686 = vtanh.pop %v3685
          %v3687 = vsub.f32 1.0, %v3683
          %v3688 = vmul.f32 %v3687, %v3686
          %v3689 = vmul.f32 %v3683, %v3583
          %v3690 = vadd.f32 %v3688, %v3689
          %3691 = vst [vmem:[#allocation2] sm:$0xff] %v3690
          %v3692 = vld [vmem:[%s1648] sm:$0xff]
          %v3693 = vpack.c.bf16 %v3690, %v3690
          %3694 = vmatprep.subr.bf16.mxu0 %v1732
          %3695 = vmatpush1.bf16.msra.mxu0 %v1731
          %3696 = vmatprep.subr.bf16.mxu0 %v1735
          %3697 = vmatpush1.bf16.msra.mxu0 %v1734
          %3698 = vmatprep.subr.bf16.mxu0 %v1738
          %3699 = vmatpush1.bf16.msra.mxu0 %v1737
          %3700 = vmatprep.subr.bf16.mxu0 %v1741
          %3701 = vmatpush1.bf16.msra.mxu0 %v1740
          %3702 = vmatprep.subr.bf16.mxu0 %v1744
          %3703 = vmatpush1.bf16.msra.mxu0 %v1743
          %3704 = vmatprep.subr.bf16.mxu0 %v1747
          %3705 = vmatpush1.bf16.msra.mxu0 %v1746
          %3706 = vmatprep.subr.bf16.mxu0 %v1750
          %3707 = vmatpush1.bf16.msra.mxu0 %v1749
          %3708 = vmatprep.subr.bf16.mxu0 %v1753
          %3709 = vmatpush1.bf16.msra.mxu0 %v1752
          %3710 = vmatprep.subr.bf16.mxu0 0
          %3711 = vmatpush1.bf16.msra.mxu0 0
          %3712 = vmatprep.subr.bf16.mxu0 0
          %3713 = vmatpush1.bf16.msra.mxu0 0
          %3714 = vmatprep.subr.bf16.mxu0 0
          %3715 = vmatpush1.bf16.msra.mxu0 0
          %3716 = vmatprep.subr.bf16.mxu0 0
          %3717 = vmatpush1.bf16.msra.mxu0 0
          %3718 = vmatprep.subr.bf16.mxu0 0
          %3719 = vmatpush1.bf16.msra.mxu0 0
          %3720 = vmatprep.subr.bf16.mxu0 0
          %3721 = vmatpush1.bf16.msra.mxu0 0
          %3722 = vmatprep.subr.bf16.mxu0 0
          %3723 = vmatpush1.bf16.msra.mxu0 0
          %3724 = vmatprep.subr.bf16.mxu0 0
          %3725 = vmatpush1.bf16.msra.mxu0 0
          %3726 = vmatprep.mubr.bf16.mxu0 0
          %3727 = vmatmul.mubr.bf16.gmra.mrb[0].mxu0 %v3693
          %v3728 = vpop.f32.mrb[0].mxu0
          %v3729 = vadd.f32 %v1383, %v3728
          %v3730 = vpop.f32.mrb[0].mxu0
          %v3731 = vadd.f32 %v1387, %v3730
          %v3732 = vpop.f32.mrb[0].mxu0
          %v3733 = vpop.f32.mrb[0].mxu0
          %3734 = vdwg.mxu0
          %3735 = vmatprep.subr.bf16.mxu0 0
          %3736 = vmatpush1.bf16.msra.mxu0 %v1733
          %3737 = vmatprep.subr.bf16.mxu0 0
          %3738 = vmatpush1.bf16.msra.mxu0 %v1736
          %3739 = vmatprep.subr.bf16.mxu0 0
          %3740 = vmatpush1.bf16.msra.mxu0 %v1739
          %3741 = vmatprep.subr.bf16.mxu0 0
          %3742 = vmatpush1.bf16.msra.mxu0 %v1742
          %3743 = vmatprep.subr.bf16.mxu0 0
          %3744 = vmatpush1.bf16.msra.mxu0 %v1745
          %3745 = vmatprep.subr.bf16.mxu0 0
          %3746 = vmatpush1.bf16.msra.mxu0 %v1748
          %3747 = vmatprep.subr.bf16.mxu0 0
          %3748 = vmatpush1.bf16.msra.mxu0 %v1751
          %3749 = vmatprep.subr.bf16.mxu0 0
          %3750 = vmatpush1.bf16.msra.mxu0 %v1754
          %3751 = vmatprep.subr.bf16.mxu0 0
          %3752 = vmatpush1.bf16.msra.mxu0 0
          %3753 = vmatprep.subr.bf16.mxu0 0
          %3754 = vmatpush1.bf16.msra.mxu0 0
          %3755 = vmatprep.subr.bf16.mxu0 0
          %3756 = vmatpush1.bf16.msra.mxu0 0
          %3757 = vmatprep.subr.bf16.mxu0 0
          %3758 = vmatpush1.bf16.msra.mxu0 0
          %3759 = vmatprep.subr.bf16.mxu0 0
          %3760 = vmatpush1.bf16.msra.mxu0 0
          %3761 = vmatprep.subr.bf16.mxu0 0
          %3762 = vmatpush1.bf16.msra.mxu0 0
          %3763 = vmatprep.subr.bf16.mxu0 0
          %3764 = vmatpush1.bf16.msra.mxu0 0
          %3765 = vmatprep.subr.bf16.mxu0 0
          %3766 = vmatpush1.bf16.msra.mxu0 0
          %3767 = vmatprep.mubr.bf16.mxu0 0
          %3768 = vmatmul.mubr.bf16.gmra.mrb[0].mxu0 %v3693
          %v3769 = vpop.f32.mrb[0].mxu0
          %v3770 = vadd.f32 %v1391, %v3769
          %v3771 = vpop.f32.mrb[0].mxu0
          %v3772 = vpop.f32.mrb[0].mxu0
          %v3773 = vpop.f32.mrb[0].mxu0
          %3774 = vdwg.mxu0
          %v3775 = vpack.c.bf16 %v3692, %v3692
          %3776 = vmatprep.subr.bf16.mxu0 %v1942
          %3777 = vmatpush1.bf16.msra.mxu0 %v1941
          %3778 = vmatprep.subr.bf16.mxu0 %v1945
          %3779 = vmatpush1.bf16.msra.mxu0 %v1944
          %3780 = vmatprep.subr.bf16.mxu0 %v1948
          %3781 = vmatpush1.bf16.msra.mxu0 %v1947
          %3782 = vmatprep.subr.bf16.mxu0 %v1951
          %3783 = vmatpush1.bf16.msra.mxu0 %v1950
          %3784 = vmatprep.subr.bf16.mxu0 %v1954
          %3785 = vmatpush1.bf16.msra.mxu0 %v1953
          %3786 = vmatprep.subr.bf16.mxu0 %v1957
          %3787 = vmatpush1.bf16.msra.mxu0 %v1956
          %3788 = vmatprep.subr.bf16.mxu0 %v1960
          %3789 = vmatpush1.bf16.msra.mxu0 %v1959
          %3790 = vmatprep.subr.bf16.mxu0 %v1963
          %3791 = vmatpush1.bf16.msra.mxu0 %v1962
          %3792 = vmatprep.subr.bf16.mxu0 0
          %3793 = vmatpush1.bf16.msra.mxu0 0
          %3794 = vmatprep.subr.bf16.mxu0 0
          %3795 = vmatpush1.bf16.msra.mxu0 0
          %3796 = vmatprep.subr.bf16.mxu0 0
          %3797 = vmatpush1.bf16.msra.mxu0 0
          %3798 = vmatprep.subr.bf16.mxu0 0
          %3799 = vmatpush1.bf16.msra.mxu0 0
          %3800 = vmatprep.subr.bf16.mxu0 0
          %3801 = vmatpush1.bf16.msra.mxu0 0
          %3802 = vmatprep.subr.bf16.mxu0 0
          %3803 = vmatpush1.bf16.msra.mxu0 0
          %3804 = vmatprep.subr.bf16.mxu0 0
          %3805 = vmatpush1.bf16.msra.mxu0 0
          %3806 = vmatprep.subr.bf16.mxu0 0
          %3807 = vmatpush1.bf16.msra.mxu0 0
          %3808 = vmatprep.mubr.bf16.mxu0 0
          %3809 = vmatmul.mubr.bf16.gmra.mrb[0].mxu0 %v3775
          %v3810 = vpop.f32.mrb[0].mxu0
          %v3811 = vadd.f32 %v1400, %v3810
          %v3812 = vpop.f32.mrb[0].mxu0
          %v3813 = vadd.f32 %v1404, %v3812
          %v3814 = vpop.f32.mrb[0].mxu0
          %v3815 = vpop.f32.mrb[0].mxu0
          %3816 = vdwg.mxu0
          %3817 = vmatprep.subr.bf16.mxu0 0
          %3818 = vmatpush1.bf16.msra.mxu0 %v1943
          %3819 = vmatprep.subr.bf16.mxu0 0
          %3820 = vmatpush1.bf16.msra.mxu0 %v1946
          %3821 = vmatprep.subr.bf16.mxu0 0
          %3822 = vmatpush1.bf16.msra.mxu0 %v1949
          %3823 = vmatprep.subr.bf16.mxu0 0
          %3824 = vmatpush1.bf16.msra.mxu0 %v1952
          %3825 = vmatprep.subr.bf16.mxu0 0
          %3826 = vmatpush1.bf16.msra.mxu0 %v1955
          %3827 = vmatprep.subr.bf16.mxu0 0
          %3828 = vmatpush1.bf16.msra.mxu0 %v1958
          %3829 = vmatprep.subr.bf16.mxu0 0
          %3830 = vmatpush1.bf16.msra.mxu0 %v1961
          %3831 = vmatprep.subr.bf16.mxu0 0
          %3832 = vmatpush1.bf16.msra.mxu0 %v1964
          %3833 = vmatprep.subr.bf16.mxu0 0
          %3834 = vmatpush1.bf16.msra.mxu0 0
          %3835 = vmatprep.subr.bf16.mxu0 0
          %3836 = vmatpush1.bf16.msra.mxu0 0
          %3837 = vmatprep.subr.bf16.mxu0 0
          %3838 = vmatpush1.bf16.msra.mxu0 0
          %3839 = vmatprep.subr.bf16.mxu0 0
          %3840 = vmatpush1.bf16.msra.mxu0 0
          %3841 = vmatprep.subr.bf16.mxu0 0
          %3842 = vmatpush1.bf16.msra.mxu0 0
          %3843 = vmatprep.subr.bf16.mxu0 0
          %3844 = vmatpush1.bf16.msra.mxu0 0
          %3845 = vmatprep.subr.bf16.mxu0 0
          %3846 = vmatpush1.bf16.msra.mxu0 0
          %3847 = vmatprep.subr.bf16.mxu0 0
          %3848 = vmatpush1.bf16.msra.mxu0 0
          %3849 = vmatprep.mubr.bf16.mxu0 0
          %3850 = vmatmul.mubr.bf16.gmra.mrb[0].mxu0 %v3775
          %v3851 = vpop.f32.mrb[0].mxu0
          %v3852 = vadd.f32 %v1408, %v3851
          %v3853 = vpop.f32.mrb[0].mxu0
          %v3854 = vpop.f32.mrb[0].mxu0
          %v3855 = vpop.f32.mrb[0].mxu0
          %3856 = vdwg.mxu0
          %v3857 = vadd.f32 %v3729, %v3811
          %v3858 = vxor.u32 %v3857, 2147483648
          %v3859 = vmul.f32 %v3858, 1.442695
          %v3860 = vpow.pop %v3859
          %v3861 = vadd.f32 %v3860, 1.0
          %v3862 = vrcp.pop %v3861
          %v3863 = vmul.f32 1.0, %v3862
          %v3864 = vadd.f32 %v3731, %v3813
          %v3865 = vxor.u32 %v3864, 2147483648
          %v3866 = vmul.f32 %v3865, 1.442695
          %v3867 = vpow.pop %v3866
          %v3868 = vadd.f32 %v3867, 1.0
          %v3869 = vrcp.pop %v3868
          %v3870 = vmul.f32 1.0, %v3869
          %v3871 = vmul.f32 %v3863, %v3852
          %v3872 = vadd.f32 %v3770, %v3871
          %v3873 = vtanh.pop %v3872
          %v3874 = vsub.f32 1.0, %v3870
          %v3875 = vmul.f32 %v3874, %v3873
          %v3876 = vmul.f32 %v3870, %v3692
          %v3877 = vadd.f32 %v3875, %v3876
          %3878 = vst [vmem:[%s1648] sm:$0xff] %v3877
          %s3879 = scalar_lea.vmem [#allocation3], 48
          %3880 = vst [vmem:[%s3879] sm:$0xff] %v3877
          %v3881 = vld [vmem:[#allocation2] sm:$0xff]
          %s3882 = scalar_lea.vmem [#allocation4], 168
          %v3883 = vld [vmem:[%s3882] sm:$0xff]
          %v3884 = vld [vmem:[%s3882 + $0x8] sm:$0xff]
          %v3885 = vld [vmem:[%s3882 + $0x10] sm:$0xff]
          %v3886 = vpack.c.bf16 %v3881, %v3881
          %3887 = vmatprep.subr.bf16.mxu0 %v1498
          %3888 = vmatpush1.bf16.msra.mxu0 %v1497
          %3889 = vmatprep.subr.bf16.mxu0 %v1501
          %3890 = vmatpush1.bf16.msra.mxu0 %v1500
          %3891 = vmatprep.subr.bf16.mxu0 %v1504
          %3892 = vmatpush1.bf16.msra.mxu0 %v1503
          %3893 = vmatprep.subr.bf16.mxu0 %v1507
          %3894 = vmatpush1.bf16.msra.mxu0 %v1506
          %3895 = vmatprep.subr.bf16.mxu0 %v1510
          %3896 = vmatpush1.bf16.msra.mxu0 %v1509
          %3897 = vmatprep.subr.bf16.mxu0 %v1513
          %3898 = vmatpush1.bf16.msra.mxu0 %v1512
          %3899 = vmatprep.subr.bf16.mxu0 %v1516
          %3900 = vmatpush1.bf16.msra.mxu0 %v1515
          %3901 = vmatprep.subr.bf16.mxu0 %v1519
          %3902 = vmatpush1.bf16.msra.mxu0 %v1518
          %3903 = vmatprep.subr.bf16.mxu0 0
          %3904 = vmatpush1.bf16.msra.mxu0 0
          %3905 = vmatprep.subr.bf16.mxu0 0
          %3906 = vmatpush1.bf16.msra.mxu0 0
          %3907 = vmatprep.subr.bf16.mxu0 0
          %3908 = vmatpush1.bf16.msra.mxu0 0
          %3909 = vmatprep.subr.bf16.mxu0 0
          %3910 = vmatpush1.bf16.msra.mxu0 0
          %3911 = vmatprep.subr.bf16.mxu0 0
          %3912 = vmatpush1.bf16.msra.mxu0 0
          %3913 = vmatprep.subr.bf16.mxu0 0
          %3914 = vmatpush1.bf16.msra.mxu0 0
          %3915 = vmatprep.subr.bf16.mxu0 0
          %3916 = vmatpush1.bf16.msra.mxu0 0
          %3917 = vmatprep.subr.bf16.mxu0 0
          %3918 = vmatpush1.bf16.msra.mxu0 0
          %3919 = vmatprep.mubr.bf16.mxu0 0
          %3920 = vmatmul.mubr.bf16.gmra.mrb[0].mxu0 %v3886
          %v3921 = vpop.f32.mrb[0].mxu0
          %v3922 = vadd.f32 %v1302, %v3921
          %v3923 = vpop.f32.mrb[0].mxu0
          %v3924 = vadd.f32 %v1306, %v3923
          %v3925 = vpop.f32.mrb[0].mxu0
          %v3926 = vpop.f32.mrb[0].mxu0
          %3927 = vdwg.mxu0
          %3928 = vmatprep.subr.bf16.mxu0 0
          %3929 = vmatpush1.bf16.msra.mxu0 %v1499
          %3930 = vmatprep.subr.bf16.mxu0 0
          %3931 = vmatpush1.bf16.msra.mxu0 %v1502
          %3932 = vmatprep.subr.bf16.mxu0 0
          %3933 = vmatpush1.bf16.msra.mxu0 %v1505
          %3934 = vmatprep.subr.bf16.mxu0 0
          %3935 = vmatpush1.bf16.msra.mxu0 %v1508
          %3936 = vmatprep.subr.bf16.mxu0 0
          %3937 = vmatpush1.bf16.msra.mxu0 %v1511
          %3938 = vmatprep.subr.bf16.mxu0 0
          %3939 = vmatpush1.bf16.msra.mxu0 %v1514
          %3940 = vmatprep.subr.bf16.mxu0 0
          %3941 = vmatpush1.bf16.msra.mxu0 %v1517
          %3942 = vmatprep.subr.bf16.mxu0 0
          %3943 = vmatpush1.bf16.msra.mxu0 %v1520
          %3944 = vmatprep.subr.bf16.mxu0 0
          %3945 = vmatpush1.bf16.msra.mxu0 0
          %3946 = vmatprep.subr.bf16.mxu0 0
          %3947 = vmatpush1.bf16.msra.mxu0 0
          %3948 = vmatprep.subr.bf16.mxu0 0
          %3949 = vmatpush1.bf16.msra.mxu0 0
          %3950 = vmatprep.subr.bf16.mxu0 0
          %3951 = vmatpush1.bf16.msra.mxu0 0
          %3952 = vmatprep.subr.bf16.mxu0 0
          %3953 = vmatpush1.bf16.msra.mxu0 0
          %3954 = vmatprep.subr.bf16.mxu0 0
          %3955 = vmatpush1.bf16.msra.mxu0 0
          %3956 = vmatprep.subr.bf16.mxu0 0
          %3957 = vmatpush1.bf16.msra.mxu0 0
          %3958 = vmatprep.subr.bf16.mxu0 0
          %3959 = vmatpush1.bf16.msra.mxu0 0
          %3960 = vmatprep.mubr.bf16.mxu0 0
          %3961 = vmatmul.mubr.bf16.gmra.mrb[0].mxu0 %v3886
          %v3962 = vpop.f32.mrb[0].mxu0
          %v3963 = vadd.f32 %v1310, %v3962
          %v3964 = vpop.f32.mrb[0].mxu0
          %v3965 = vpop.f32.mrb[0].mxu0
          %v3966 = vpop.f32.mrb[0].mxu0
          %3967 = vdwg.mxu0
          %v3968 = vadd.f32 %v3883, %v3922
          %v3969 = vxor.u32 %v3968, 2147483648
          %v3970 = vmul.f32 %v3969, 1.442695
          %v3971 = vpow.pop %v3970
          %v3972 = vadd.f32 %v3971, 1.0
          %v3973 = vrcp.pop %v3972
          %v3974 = vmul.f32 1.0, %v3973
          %v3975 = vadd.f32 %v3884, %v3924
          %v3976 = vxor.u32 %v3975, 2147483648
          %v3977 = vmul.f32 %v3976, 1.442695
          %v3978 = vpow.pop %v3977
          %v3979 = vadd.f32 %v3978, 1.0
          %v3980 = vrcp.pop %v3979
          %v3981 = vmul.f32 1.0, %v3980
          %v3982 = vmul.f32 %v3974, %v3963
          %v3983 = vadd.f32 %v3885, %v3982
          %v3984 = vtanh.pop %v3983
          %v3985 = vsub.f32 1.0, %v3981
          %v3986 = vmul.f32 %v3985, %v3984
          %v3987 = vmul.f32 %v3981, %v3881
          %v3988 = vadd.f32 %v3986, %v3987
          %3989 = vst [vmem:[#allocation2] sm:$0xff] %v3988
          %v3990 = vld [vmem:[%s1648] sm:$0xff]
          %v3991 = vpack.c.bf16 %v3988, %v3988
          %3992 = vmatprep.subr.bf16.mxu0 %v1732
          %3993 = vmatpush1.bf16.msra.mxu0 %v1731
          %3994 = vmatprep.subr.bf16.mxu0 %v1735
          %3995 = vmatpush1.bf16.msra.mxu0 %v1734
          %3996 = vmatprep.subr.bf16.mxu0 %v1738
          %3997 = vmatpush1.bf16.msra.mxu0 %v1737
          %3998 = vmatprep.subr.bf16.mxu0 %v1741
          %3999 = vmatpush1.bf16.msra.mxu0 %v1740
          %4000 = vmatprep.subr.bf16.mxu0 %v1744
          %4001 = vmatpush1.bf16.msra.mxu0 %v1743
          %4002 = vmatprep.subr.bf16.mxu0 %v1747
          %4003 = vmatpush1.bf16.msra.mxu0 %v1746
          %4004 = vmatprep.subr.bf16.mxu0 %v1750
          %4005 = vmatpush1.bf16.msra.mxu0 %v1749
          %4006 = vmatprep.subr.bf16.mxu0 %v1753
          %4007 = vmatpush1.bf16.msra.mxu0 %v1752
          %4008 = vmatprep.subr.bf16.mxu0 0
          %4009 = vmatpush1.bf16.msra.mxu0 0
          %4010 = vmatprep.subr.bf16.mxu0 0
          %4011 = vmatpush1.bf16.msra.mxu0 0
          %4012 = vmatprep.subr.bf16.mxu0 0
          %4013 = vmatpush1.bf16.msra.mxu0 0
          %4014 = vmatprep.subr.bf16.mxu0 0
          %4015 = vmatpush1.bf16.msra.mxu0 0
          %4016 = vmatprep.subr.bf16.mxu0 0
          %4017 = vmatpush1.bf16.msra.mxu0 0
          %4018 = vmatprep.subr.bf16.mxu0 0
          %4019 = vmatpush1.bf16.msra.mxu0 0
          %4020 = vmatprep.subr.bf16.mxu0 0
          %4021 = vmatpush1.bf16.msra.mxu0 0
          %4022 = vmatprep.subr.bf16.mxu0 0
          %4023 = vmatpush1.bf16.msra.mxu0 0
          %4024 = vmatprep.mubr.bf16.mxu0 0
          %4025 = vmatmul.mubr.bf16.gmra.mrb[0].mxu0 %v3991
          %v4026 = vpop.f32.mrb[0].mxu0
          %v4027 = vadd.f32 %v1383, %v4026
          %v4028 = vpop.f32.mrb[0].mxu0
          %v4029 = vadd.f32 %v1387, %v4028
          %v4030 = vpop.f32.mrb[0].mxu0
          %v4031 = vpop.f32.mrb[0].mxu0
          %4032 = vdwg.mxu0
          %4033 = vmatprep.subr.bf16.mxu0 0
          %4034 = vmatpush1.bf16.msra.mxu0 %v1733
          %4035 = vmatprep.subr.bf16.mxu0 0
          %4036 = vmatpush1.bf16.msra.mxu0 %v1736
          %4037 = vmatprep.subr.bf16.mxu0 0
          %4038 = vmatpush1.bf16.msra.mxu0 %v1739
          %4039 = vmatprep.subr.bf16.mxu0 0
          %4040 = vmatpush1.bf16.msra.mxu0 %v1742
          %4041 = vmatprep.subr.bf16.mxu0 0
          %4042 = vmatpush1.bf16.msra.mxu0 %v1745
          %4043 = vmatprep.subr.bf16.mxu0 0
          %4044 = vmatpush1.bf16.msra.mxu0 %v1748
          %4045 = vmatprep.subr.bf16.mxu0 0
          %4046 = vmatpush1.bf16.msra.mxu0 %v1751
          %4047 = vmatprep.subr.bf16.mxu0 0
          %4048 = vmatpush1.bf16.msra.mxu0 %v1754
          %4049 = vmatprep.subr.bf16.mxu0 0
          %4050 = vmatpush1.bf16.msra.mxu0 0
          %4051 = vmatprep.subr.bf16.mxu0 0
          %4052 = vmatpush1.bf16.msra.mxu0 0
          %4053 = vmatprep.subr.bf16.mxu0 0
          %4054 = vmatpush1.bf16.msra.mxu0 0
          %4055 = vmatprep.subr.bf16.mxu0 0
          %4056 = vmatpush1.bf16.msra.mxu0 0
          %4057 = vmatprep.subr.bf16.mxu0 0
          %4058 = vmatpush1.bf16.msra.mxu0 0
          %4059 = vmatprep.subr.bf16.mxu0 0
          %4060 = vmatpush1.bf16.msra.mxu0 0
          %4061 = vmatprep.subr.bf16.mxu0 0
          %4062 = vmatpush1.bf16.msra.mxu0 0
          %4063 = vmatprep.subr.bf16.mxu0 0
          %4064 = vmatpush1.bf16.msra.mxu0 0
          %4065 = vmatprep.mubr.bf16.mxu0 0
          %4066 = vmatmul.mubr.bf16.gmra.mrb[0].mxu0 %v3991
          %v4067 = vpop.f32.mrb[0].mxu0
          %v4068 = vadd.f32 %v1391, %v4067
          %v4069 = vpop.f32.mrb[0].mxu0
          %v4070 = vpop.f32.mrb[0].mxu0
          %v4071 = vpop.f32.mrb[0].mxu0
          %4072 = vdwg.mxu0
          %v4073 = vpack.c.bf16 %v3990, %v3990
          %4074 = vmatprep.subr.bf16.mxu0 %v1942
          %4075 = vmatpush1.bf16.msra.mxu0 %v1941
          %4076 = vmatprep.subr.bf16.mxu0 %v1945
          %4077 = vmatpush1.bf16.msra.mxu0 %v1944
          %4078 = vmatprep.subr.bf16.mxu0 %v1948
          %4079 = vmatpush1.bf16.msra.mxu0 %v1947
          %4080 = vmatprep.subr.bf16.mxu0 %v1951
          %4081 = vmatpush1.bf16.msra.mxu0 %v1950
          %4082 = vmatprep.subr.bf16.mxu0 %v1954
          %4083 = vmatpush1.bf16.msra.mxu0 %v1953
          %4084 = vmatprep.subr.bf16.mxu0 %v1957
          %4085 = vmatpush1.bf16.msra.mxu0 %v1956
          %4086 = vmatprep.subr.bf16.mxu0 %v1960
          %4087 = vmatpush1.bf16.msra.mxu0 %v1959
          %4088 = vmatprep.subr.bf16.mxu0 %v1963
          %4089 = vmatpush1.bf16.msra.mxu0 %v1962
          %4090 = vmatprep.subr.bf16.mxu0 0
          %4091 = vmatpush1.bf16.msra.mxu0 0
          %4092 = vmatprep.subr.bf16.mxu0 0
          %4093 = vmatpush1.bf16.msra.mxu0 0
          %4094 = vmatprep.subr.bf16.mxu0 0
          %4095 = vmatpush1.bf16.msra.mxu0 0
          %4096 = vmatprep.subr.bf16.mxu0 0
          %4097 = vmatpush1.bf16.msra.mxu0 0
          %4098 = vmatprep.subr.bf16.mxu0 0
          %4099 = vmatpush1.bf16.msra.mxu0 0
          %4100 = vmatprep.subr.bf16.mxu0 0
          %4101 = vmatpush1.bf16.msra.mxu0 0
          %4102 = vmatprep.subr.bf16.mxu0 0
          %4103 = vmatpush1.bf16.msra.mxu0 0
          %4104 = vmatprep.subr.bf16.mxu0 0
          %4105 = vmatpush1.bf16.msra.mxu0 0
          %4106 = vmatprep.mubr.bf16.mxu0 0
          %4107 = vmatmul.mubr.bf16.gmra.mrb[0].mxu0 %v4073
          %v4108 = vpop.f32.mrb[0].mxu0
          %v4109 = vadd.f32 %v1400, %v4108
          %v4110 = vpop.f32.mrb[0].mxu0
          %v4111 = vadd.f32 %v1404, %v4110
          %v4112 = vpop.f32.mrb[0].mxu0
          %v4113 = vpop.f32.mrb[0].mxu0
          %4114 = vdwg.mxu0
          %4115 = vmatprep.subr.bf16.mxu0 0
          %4116 = vmatpush1.bf16.msra.mxu0 %v1943
          %4117 = vmatprep.subr.bf16.mxu0 0
          %4118 = vmatpush1.bf16.msra.mxu0 %v1946
          %4119 = vmatprep.subr.bf16.mxu0 0
          %4120 = vmatpush1.bf16.msra.mxu0 %v1949
          %4121 = vmatprep.subr.bf16.mxu0 0
          %4122 = vmatpush1.bf16.msra.mxu0 %v1952
          %4123 = vmatprep.subr.bf16.mxu0 0
          %4124 = vmatpush1.bf16.msra.mxu0 %v1955
          %4125 = vmatprep.subr.bf16.mxu0 0
          %4126 = vmatpush1.bf16.msra.mxu0 %v1958
          %4127 = vmatprep.subr.bf16.mxu0 0
          %4128 = vmatpush1.bf16.msra.mxu0 %v1961
          %4129 = vmatprep.subr.bf16.mxu0 0
          %4130 = vmatpush1.bf16.msra.mxu0 %v1964
          %4131 = vmatprep.subr.bf16.mxu0 0
          %4132 = vmatpush1.bf16.msra.mxu0 0
          %4133 = vmatprep.subr.bf16.mxu0 0
          %4134 = vmatpush1.bf16.msra.mxu0 0
          %4135 = vmatprep.subr.bf16.mxu0 0
          %4136 = vmatpush1.bf16.msra.mxu0 0
          %4137 = vmatprep.subr.bf16.mxu0 0
          %4138 = vmatpush1.bf16.msra.mxu0 0
          %4139 = vmatprep.subr.bf16.mxu0 0
          %4140 = vmatpush1.bf16.msra.mxu0 0
          %4141 = vmatprep.subr.bf16.mxu0 0
          %4142 = vmatpush1.bf16.msra.mxu0 0
          %4143 = vmatprep.subr.bf16.mxu0 0
          %4144 = vmatpush1.bf16.msra.mxu0 0
          %4145 = vmatprep.subr.bf16.mxu0 0
          %4146 = vmatpush1.bf16.msra.mxu0 0
          %4147 = vmatprep.mubr.bf16.mxu0 0
          %4148 = vmatmul.mubr.bf16.gmra.mrb[0].mxu0 %v4073
          %v4149 = vpop.f32.mrb[0].mxu0
          %v4150 = vadd.f32 %v1408, %v4149
          %v4151 = vpop.f32.mrb[0].mxu0
          %v4152 = vpop.f32.mrb[0].mxu0
          %v4153 = vpop.f32.mrb[0].mxu0
          %4154 = vdwg.mxu0
          %v4155 = vadd.f32 %v4027, %v4109
          %v4156 = vxor.u32 %v4155, 2147483648
          %v4157 = vmul.f32 %v4156, 1.442695
          %v4158 = vpow.pop %v4157
          %v4159 = vadd.f32 %v4158, 1.0
          %v4160 = vrcp.pop %v4159
          %v4161 = vmul.f32 1.0, %v4160
          %v4162 = vadd.f32 %v4029, %v4111
          %v4163 = vxor.u32 %v4162, 2147483648
          %v4164 = vmul.f32 %v4163, 1.442695
          %v4165 = vpow.pop %v4164
          %v4166 = vadd.f32 %v4165, 1.0
          %v4167 = vrcp.pop %v4166
          %v4168 = vmul.f32 1.0, %v4167
          %v4169 = vmul.f32 %v4161, %v4150
          %v4170 = vadd.f32 %v4068, %v4169
          %v4171 = vtanh.pop %v4170
          %v4172 = vsub.f32 1.0, %v4168
          %v4173 = vmul.f32 %v4172, %v4171
          %v4174 = vmul.f32 %v4168, %v3990
          %v4175 = vadd.f32 %v4173, %v4174
          %4176 = vst [vmem:[%s1648] sm:$0xff] %v4175
          %s4177 = scalar_lea.vmem [#allocation3], 56
          %4178 = vst [vmem:[%s4177] sm:$0xff] %v4175
        $region121: #{seq2seq_decoder_forward.1} parent=108 // pred_fallthru
          _
        %v4179 = vld [vmem:[#allocation3] sm:$0xff]
        %v4180 = vld [vmem:[#allocation3 + $0x8] sm:$0xff]
        %v4181 = vld [vmem:[#allocation3 + $0x10] sm:$0xff]
        %v4182 = vld [vmem:[#allocation3 + $0x18] sm:$0xff]
        %v4183 = vld [vmem:[#allocation3 + $0x20] sm:$0xff]
        %v4184 = vld [vmem:[#allocation3 + $0x28] sm:$0xff]
        %v4185 = vld [vmem:[#allocation3 + $0x30] sm:$0xff]
        %v4186 = vld [vmem:[#allocation3 + $0x38] sm:$0xff]
        %v4187 = vpack.c.bf16 %v4179, %v4179
        %v4188 = vpack.c.bf16 %v4180, %v4180
        %v4189 = vpack.c.bf16 %v4181, %v4181
        %v4190 = vpack.c.bf16 %v4182, %v4182
        %v4191 = vpack.c.bf16 %v4183, %v4183
        %v4192 = vpack.c.bf16 %v4184, %v4184
        %v4193 = vpack.c.bf16 %v4185, %v4185
        %v4194 = vpack.c.bf16 %v4186, %v4186
        %v4195 = vld [vmem:[%s552] sm:$0xf]
        %v4196 = vld [vmem:[%s552 + $0x4] sm:$0xf]
        %v4197 = vld [vmem:[%s552 + $0x8] sm:$0xf]
        %v4198 = vld [vmem:[%s552 + $0xc] sm:$0xf]
        %v4199 = vld [vmem:[%s552 + $0x10] sm:$0xf]
        %v4200 = vld [vmem:[%s552 + $0x14] sm:$0xf]
        %v4201 = vld [vmem:[%s552 + $0x18] sm:$0xf]
        %v4202 = vld [vmem:[%s552 + $0x1c] sm:$0xf]
        %v4203 = vld [vmem:[%s552 + $0x20] sm:$0xf]
        %v4204 = vld [vmem:[%s552 + $0x24] sm:$0xf]
        %v4205 = vld [vmem:[%s552 + $0x28] sm:$0xf]
        %v4206 = vld [vmem:[%s552 + $0x2c] sm:$0xf]
        %v4207 = vld [vmem:[%s552 + $0x30] sm:$0xf]
        %v4208 = vld [vmem:[%s552 + $0x34] sm:$0xf]
        %v4209 = vld [vmem:[%s552 + $0x38] sm:$0xf]
        %v4210 = vld [vmem:[%s552 + $0x3c] sm:$0xf]
        %v4219 = vunpack.c.l.b16 %v4187
        %v4220 = vunpack.c.l.b16 %v4188
        %v4221 = vunpack.c.l.b16 %v4189
        %v4222 = vunpack.c.l.b16 %v4190
        %v4223 = vunpack.c.l.b16 %v4191
        %v4224 = vunpack.c.l.b16 %v4192
        %v4225 = vunpack.c.l.b16 %v4193
        %v4226 = vunpack.c.l.b16 %v4194
        %v4227 = vpack.c.b16 %v4220, %v4219
        %v4228 = vpack.c.b16 %v4222, %v4221
        %v4229 = vpack.c.b16 %v4224, %v4223
        %v4230 = vpack.c.b16 %v4226, %v4225
        %v4251 = vunpack.c.l.b16 %v4195
        %v4252 = vunpack.c.l.b16 %v4196
        %v4253 = vunpack.c.l.b16 %v4197
        %v4254 = vunpack.c.l.b16 %v4198
        %v4255 = vunpack.c.l.b16 %v4199
        %v4256 = vunpack.c.l.b16 %v4200
        %v4257 = vunpack.c.l.b16 %v4201
        %v4258 = vunpack.c.l.b16 %v4202
        %v4259 = vunpack.c.l.b16 %v4203
        %v4260 = vunpack.c.l.b16 %v4204
        %v4261 = vunpack.c.l.b16 %v4205
        %v4262 = vunpack.c.l.b16 %v4206
        %v4263 = vunpack.c.l.b16 %v4207
        %v4264 = vunpack.c.l.b16 %v4208
        %v4265 = vunpack.c.l.b16 %v4209
        %v4266 = vunpack.c.l.b16 %v4210
        %v4267 = vpack.c.b16 %v4252, %v4251
        %v4268 = vpack.c.b16 %v4254, %v4253
        %v4269 = vpack.c.b16 %v4256, %v4255
        %v4270 = vpack.c.b16 %v4258, %v4257
        %v4271 = vpack.c.b16 %v4260, %v4259
        %v4272 = vpack.c.b16 %v4262, %v4261
        %v4273 = vpack.c.b16 %v4264, %v4263
        %v4274 = vpack.c.b16 %v4266, %v4265
        %4283 = vmatprep.subr.bf16.mxu0 0
        %4284 = vmatpush1.bf16.msra.mxu0 %v4267
        %4285 = vmatprep.subr.bf16.mxu0 0
        %4286 = vmatpush1.bf16.msra.mxu0 %v4268
        %4287 = vmatprep.subr.bf16.mxu0 0
        %4288 = vmatpush1.bf16.msra.mxu0 %v4269
        %4289 = vmatprep.subr.bf16.mxu0 0
        %4290 = vmatpush1.bf16.msra.mxu0 %v4270
        %4291 = vmatprep.subr.bf16.mxu0 0
        %4292 = vmatpush1.bf16.msra.mxu0 %v4271
        %4293 = vmatprep.subr.bf16.mxu0 0
        %4294 = vmatpush1.bf16.msra.mxu0 %v4272
        %4295 = vmatprep.subr.bf16.mxu0 0
        %4296 = vmatpush1.bf16.msra.mxu0 %v4273
        %4297 = vmatprep.subr.bf16.mxu0 0
        %4298 = vmatpush1.bf16.msra.mxu0 %v4274
        %4299 = vmatprep.subr.bf16.mxu0 0
        %4300 = vmatpush1.bf16.msra.mxu0 0
        %4301 = vmatprep.subr.bf16.mxu0 0
        %4302 = vmatpush1.bf16.msra.mxu0 0
        %4303 = vmatprep.subr.bf16.mxu0 0
        %4304 = vmatpush1.bf16.msra.mxu0 0
        %4305 = vmatprep.subr.bf16.mxu0 0
        %4306 = vmatpush1.bf16.msra.mxu0 0
        %4307 = vmatprep.subr.bf16.mxu0 0
        %4308 = vmatpush1.bf16.msra.mxu0 0
        %4309 = vmatprep.subr.bf16.mxu0 0
        %4310 = vmatpush1.bf16.msra.mxu0 0
        %4311 = vmatprep.subr.bf16.mxu0 0
        %4312 = vmatpush1.bf16.msra.mxu0 0
        %4313 = vmatprep.subr.bf16.mxu0 0
        %4314 = vmatpush1.bf16.msra.mxu0 0
        %4315 = vmatprep.mubr.bf16.mxu0 0
        %4316 = vmatmul.mubr.bf16.gmra.mrb[0].mxu0 %v4227
        %v4317 = vpop.f32.mrb[0].mxu0
        %v4318 = vadd.f32 0.0, %v4317
        %v4319 = vpop.f32.mrb[0].mxu0
        %v4320 = vpop.f32.mrb[0].mxu0
        %v4321 = vadd.f32 0.0, %v4320
        %v4322 = vpop.f32.mrb[0].mxu0
        %4323 = vmatprep.mubr.bf16.mxu0 0
        %4324 = vmatmul.mubr.bf16.gmra.mrb[0].mxu0 %v4228
        %v4325 = vpop.f32.mrb[0].mxu0
        %v4326 = vadd.f32 0.0, %v4325
        %v4327 = vpop.f32.mrb[0].mxu0
        %v4328 = vpop.f32.mrb[0].mxu0
        %v4329 = vadd.f32 0.0, %v4328
        %v4330 = vpop.f32.mrb[0].mxu0
        %4331 = vmatprep.mubr.bf16.mxu0 0
        %4332 = vmatmul.mubr.bf16.gmra.mrb[0].mxu0 %v4229
        %v4333 = vpop.f32.mrb[0].mxu0
        %v4334 = vadd.f32 0.0, %v4333
        %v4335 = vpop.f32.mrb[0].mxu0
        %v4336 = vpop.f32.mrb[0].mxu0
        %v4337 = vadd.f32 0.0, %v4336
        %v4338 = vpop.f32.mrb[0].mxu0
        %4339 = vmatprep.mubr.bf16.mxu0 0
        %4340 = vmatmul.mubr.bf16.gmra.mrb[0].mxu0 %v4230
        %v4341 = vpop.f32.mrb[0].mxu0
        %v4342 = vadd.f32 0.0, %v4341
        %v4343 = vpop.f32.mrb[0].mxu0
        %v4344 = vpop.f32.mrb[0].mxu0
        %v4345 = vadd.f32 0.0, %v4344
        %v4346 = vpop.f32.mrb[0].mxu0
        %4347 = vdwg.mxu0
        %v4348 = vld [vmem:[%s610] sm:$0x1]
        %v4350 = vlaneseq
        %v4351 = vshrl.u32 %v4350, 7
        %v4352 = vsub.s32 0, %v4351
        %v4353 = vrot.slane %v4348, %v4352
        %v4355 = vadd.f32 %v4318, %v4353
        %v4356 = vadd.f32 %v4321, %v4353
        %v4357 = vadd.f32 %v4326, %v4353
        %v4358 = vadd.f32 %v4329, %v4353
        %v4359 = vadd.f32 %v4334, %v4353
        %v4360 = vadd.f32 %v4337, %v4353
        %v4361 = vadd.f32 %v4342, %v4353
        %v4362 = vadd.f32 %v4345, %v4353
        %4363 = vst [vmem:[%s599] sm:$0xff] %v4355
        %4364 = vst [vmem:[%s599 + $0x8] sm:$0xff] %v4356
        %4365 = vst [vmem:[%s599 + $0x10] sm:$0xff] %v4357
        %4366 = vst [vmem:[%s599 + $0x18] sm:$0xff] %v4358
        %4367 = vst [vmem:[%s599 + $0x20] sm:$0xff] %v4359
        %4368 = vst [vmem:[%s599 + $0x28] sm:$0xff] %v4360
        %4369 = vst [vmem:[%s599 + $0x30] sm:$0xff] %v4361
        %4370 = vst [vmem:[%s599 + $0x38] sm:$0xff] %v4362
        %v4371 = vld [vmem:[#allocation2] sm:$0xff]
        %v4372 = vld [vmem:[#allocation2 + $0x8] sm:$0xff]
        %4373 = vst [vmem:[%s14] sm:$0xff] %v4371
        %4374 = vst [vmem:[%s14 + $0x8] sm:$0xff] %v4372
        %s4375 = sand.u32 %s336, 1
        %s4376 = sand.u32 %s336, 1
        %s4377 = smul.addr %s4376, 64
        %s4378 = scalar_lea.vmem [#allocation6], %s4377
        // Predicated region
        $region122: #{seq2seq_decoder_forward.1} parent=108 // pred_check
          %p4379 = pneg %p346
        $region123: #{seq2seq_decoder_forward.1} parent=108 // pred_check_branch
          %4381 = sbr.rel (%p4379) target = $region125
        $region124: #{seq2seq_decoder_forward.1} parent=108 // pred_region
          %s4382 = smul.u32 8, %s30
          %s4383 = smul.addr %s4382, 2
          %s4384 = sadd.s32 %s31, %s4383
          %s4385 = smul.addr %s4384, 8
          %s4386 = scalar_lea.vmem %s13, %s4385
          // Predicated region
          $region126: #{seq2seq_decoder_forward.1} parent=124 // pred_check
            _
          $region127: #{seq2seq_decoder_forward.1} parent=124 // pred_check_branch
            %4388 = sbr.rel (0) target = $region129
          $region128: #{seq2seq_decoder_forward.1} parent=124 // pred_region
            // Predicated region
            $region130: #{seq2seq_decoder_forward.1} parent=128 // pred_check
              _
            $region131: #{seq2seq_decoder_forward.1} parent=128 // pred_check_branch
              %4390 = sbr.rel (0) target = $region133
            $region132: #{seq2seq_decoder_forward.1} parent=128 // pred_region
              // Predicated region
              $region145: #{seq2seq_decoder_forward.1} parent=132 // pred_check
                _
              $region146: #{seq2seq_decoder_forward.1} parent=132 // pred_check_branch
                %4419 = sbr.rel (0) target = $region148
              $region147: #{seq2seq_decoder_forward.1} parent=132 // pred_region
                loop: start=0, step=1, limit=1
                $region149: #{seq2seq_decoder_forward.1} parent=147 // loop_pre_header
                  _
                $region150: #{seq2seq_decoder_forward.1} parent=147 // loop_header
                  %s4421 = sphi 0, %s4425
                  %p4422 = scmp.ge.s32.totalorder %s4421, 1
                  %s4426 = sphi %s4378, %s4378
                  %s4427 = sphi %s4386, %s4386
                $region151: #{seq2seq_decoder_forward.1} parent=147 // loop_header_branch
                  %4424 = sbr.rel (%p4422) target = $region155
                $region152: #{seq2seq_decoder_forward.1} parent=147 // loop_body
                  %v4428 = vld [vmem:[%s4426] sm:$0xff]
                  %4429 = vst [vmem:[%s4427] sm:$0xff] %v4428
                  %v4430 = vld [vmem:[%s4426 + $0x8] sm:$0xff]
                  %4431 = vst [vmem:[%s4427 + $0x10] sm:$0xff] %v4430
                  %v4432 = vld [vmem:[%s4426 + $0x10] sm:$0xff]
                  %4433 = vst [vmem:[%s4427 + $0x20] sm:$0xff] %v4432
                  %v4434 = vld [vmem:[%s4426 + $0x18] sm:$0xff]
                  %4435 = vst [vmem:[%s4427 + $0x30] sm:$0xff] %v4434
                  %v4436 = vld [vmem:[%s4426 + $0x20] sm:$0xff]
                  %4437 = vst [vmem:[%s4427 + $0x40] sm:$0xff] %v4436
                  %v4438 = vld [vmem:[%s4426 + $0x28] sm:$0xff]
                  %4439 = vst [vmem:[%s4427 + $0x50] sm:$0xff] %v4438
                  %v4440 = vld [vmem:[%s4426 + $0x30] sm:$0xff]
                  %4441 = vst [vmem:[%s4427 + $0x60] sm:$0xff] %v4440
                  %v4442 = vld [vmem:[%s4426 + $0x38] sm:$0xff]
                  %4443 = vst [vmem:[%s4427 + $0x70] sm:$0xff] %v4442
                $region153: #{seq2seq_decoder_forward.1} parent=147 // loop_footer
                  %s4425 = sadd.s32 1, %s4421
                $region154: #{seq2seq_decoder_forward.1} parent=147 // loop_footer_branch
                  %4420 = sbr.rel target = $region150
                $region155: #{seq2seq_decoder_forward.1} parent=147 // loop_exit
                  _
              $region148: #{seq2seq_decoder_forward.1} parent=132 // pred_fallthru
                _
              // Predicated region
              $region156: #{seq2seq_decoder_forward.1} parent=132 // pred_check
                _
              $region157: #{seq2seq_decoder_forward.1} parent=132 // pred_check_branch
                %4445 = sbr.rel target = $region159
              $region158: #{seq2seq_decoder_forward.1} parent=132 // pred_region
                _
              $region159: #{seq2seq_decoder_forward.1} parent=132 // pred_fallthru
                _
            $region133: #{seq2seq_decoder_forward.1} parent=128 // pred_fallthru
              _
            // Predicated region
            $region134: #{seq2seq_decoder_forward.1} parent=128 // pred_check
              _
            $region135: #{seq2seq_decoder_forward.1} parent=128 // pred_check_branch
              %4392 = sbr.rel target = $region137
            $region136: #{seq2seq_decoder_forward.1} parent=128 // pred_region
              loop: start=0, step=1, limit=1
              $region138: #{seq2seq_decoder_forward.1} parent=136 // loop_pre_header
                _
              $region139: #{seq2seq_decoder_forward.1} parent=136 // loop_header
                %s4395 = sphi 0, %s4399
                %p4396 = scmp.ge.s32.totalorder %s4395, 1
                %s4400 = sphi %s4378, %s4378
                %s4401 = sphi %s4386, %s4386
              $region140: #{seq2seq_decoder_forward.1} parent=136 // loop_header_branch
                %4398 = sbr.rel (%p4396) target = $region144
              $region141: #{seq2seq_decoder_forward.1} parent=136 // loop_body
                %v4402 = vld [vmem:[%s4400] sm:$0xff]
                %4403 = vst [vmem:[%s4401] sm:$0xff] %v4402
                %v4404 = vld [vmem:[%s4400 + $0x8] sm:$0xff]
                %4405 = vst [vmem:[%s4401 + $0x10] sm:$0xff] %v4404
                %v4406 = vld [vmem:[%s4400 + $0x10] sm:$0xff]
                %4407 = vst [vmem:[%s4401 + $0x20] sm:$0xff] %v4406
                %v4408 = vld [vmem:[%s4400 + $0x18] sm:$0xff]
                %4409 = vst [vmem:[%s4401 + $0x30] sm:$0xff] %v4408
                %v4410 = vld [vmem:[%s4400 + $0x20] sm:$0xff]
                %4411 = vst [vmem:[%s4401 + $0x40] sm:$0xff] %v4410
                %v4412 = vld [vmem:[%s4400 + $0x28] sm:$0xff]
                %4413 = vst [vmem:[%s4401 + $0x50] sm:$0xff] %v4412
                %v4414 = vld [vmem:[%s4400 + $0x30] sm:$0xff]
                %4415 = vst [vmem:[%s4401 + $0x60] sm:$0xff] %v4414
                %v4416 = vld [vmem:[%s4400 + $0x38] sm:$0xff]
                %4417 = vst [vmem:[%s4401 + $0x70] sm:$0xff] %v4416
              $region142: #{seq2seq_decoder_forward.1} parent=136 // loop_footer
                %s4399 = sadd.s32 1, %s4395
              $region143: #{seq2seq_decoder_forward.1} parent=136 // loop_footer_branch
                %4394 = sbr.rel target = $region139
              $region144: #{seq2seq_decoder_forward.1} parent=136 // loop_exit
                _
            $region137: #{seq2seq_decoder_forward.1} parent=128 // pred_fallthru
              _
          $region129: #{seq2seq_decoder_forward.1} parent=124 // pred_fallthru
            _
          %4446 = vnop
        $region125: #{seq2seq_decoder_forward.1} parent=108 // pred_fallthru
          _
        // Predicated region
        $region160: #{seq2seq_decoder_forward.1} parent=108 // pred_check
          %p4447 = pneg %p367
        $region161: #{seq2seq_decoder_forward.1} parent=108 // pred_check_branch
          %4449 = sbr.rel (%p4447) target = $region163
        $region162: #{seq2seq_decoder_forward.1} parent=108 // pred_region
          _
        $region163: #{seq2seq_decoder_forward.1} parent=108 // pred_fallthru
          _
        // Predicated region
        $region164: #{seq2seq_decoder_forward.1} parent=108 // pred_check
          %p4450 = pneg %p367
        $region165: #{seq2seq_decoder_forward.1} parent=108 // pred_check_branch
          %4452 = sbr.rel (%p4450) target = $region167
        $region166: #{seq2seq_decoder_forward.1} parent=108 // pred_region
          _
        $region167: #{seq2seq_decoder_forward.1} parent=108 // pred_fallthru
          _
      $region109: #{seq2seq_decoder_forward.1} parent=5 // pred_fallthru
        _
      %p4453 = scmp.le.s32.totalorder 2, %s21
      // Predicated region
      $region168: #{seq2seq_decoder_forward.1} parent=5 // pred_check
        %p4454 = pneg %p4453
      $region169: #{seq2seq_decoder_forward.1} parent=5 // pred_check_branch
        %4456 = sbr.rel (%p4454) target = $region171
      $region170: #{seq2seq_decoder_forward.1} parent=5 // pred_region
        %s4457 = ssub.s32 %s21, 2
        // Predicated region
        $region172: #{seq2seq_decoder_forward.1} parent=170 // pred_check
          %p4458 = pneg %p352
        $region173: #{seq2seq_decoder_forward.1} parent=170 // pred_check_branch
          %4460 = sbr.rel (%p4458) target = $region175
        $region174: #{seq2seq_decoder_forward.1} parent=170 // pred_region
          %s4461 = sand.u32 %s337, 1
          %s4462 = sand.u32 %s337, 1
          %s4463 = smul.addr %s4462, 64
          %s4464 = scalar_lea.vmem [#allocation6], %s4463
        $region175: #{seq2seq_decoder_forward.1} parent=170 // pred_fallthru
          _
      $region171: #{seq2seq_decoder_forward.1} parent=5 // pred_fallthru
        _
    $region6: #{seq2seq_decoder_forward.1} parent=1 // loop_footer
      %s25 = sadd.s32 1, %s21
    $region7: #{seq2seq_decoder_forward.1} parent=1 // loop_footer_branch
      %20 = sbr.rel target = $region3
    $region8: #{seq2seq_decoder_forward.1} parent=1 // loop_exit
      _

</llo_original>
